<compile_context>
chip_gen: v6e
topology: v6e:2x2x1
jax: 0.10.0
libtpu: 0.0.40
codegen_flags: <defaults>
</compile_context>

<pallas_src>
import functools

import jax
import jax.numpy as jnp
from jax.experimental import pallas as pl
from jax.experimental.pallas import tpu as pltpu

LATENT = 100
N_CLASSES = 10
EMB = 10
K1_PAD = 128           # padded layer-1 contraction dim: 100 (z) + 10 (one-hot) + 18 (zeros)
H1, H2, H3 = 256, 512, 1024
OUT = 28 * 28          # 784
OUT_PAD = 896          # 7 * 128 — lane-dense padded output width
NEG_SLOPE = 0.01       # PyTorch nn.LeakyReLU default


def _leaky_relu(x):
    # mul + max (2 VALU ops) instead of cmp + mul + select.
    return jnp.maximum(x, NEG_SLOPE * x)


def _round_up(x, m):
    return (x + m - 1) // m * m


def generator_kernel(x_ref, w1_ref, b1_ref, w2_ref, b2_ref, w3_ref, b3_ref,
                     w4_ref, b4_ref, out_ref):
    # Layer 1: (tb,128)bf16 @ (128,256)bf16 -> f32 acc.  The one-hot label and
    # the embedding @ W1[100:110] contribution are folded into x / w1.
    h = jnp.dot(x_ref[...], w1_ref[...], preferred_element_type=jnp.float32)
    h = _leaky_relu(h.astype(jnp.bfloat16) + b1_ref[...])
    # Layer 2: (tb,256) @ (256,512)
    h = jnp.dot(h, w2_ref[...], preferred_element_type=jnp.float32)
    h = _leaky_relu(h.astype(jnp.bfloat16) + b2_ref[...])
    # Layer 3: (tb,512) @ (512,1024)
    h = jnp.dot(h, w3_ref[...], preferred_element_type=jnp.float32)
    h = _leaky_relu(h.astype(jnp.bfloat16) + b3_ref[...])
    # Output: (tb,1024) @ (1024,896) -> +bias, tanh in f32, store bf16.
    h = jnp.dot(h, w4_ref[...], preferred_element_type=jnp.float32)
    out_ref[...] = jnp.tanh(h + b4_ref[...]).astype(jnp.bfloat16)


def _resident(shape):
    # Weight / bias: same block every grid step -> DMA'd once, stays in VMEM.
    return pl.BlockSpec(shape, lambda i: (0, 0))


def _batched(tile_b, feat):
    # Streams one batch tile per grid step.
    return pl.BlockSpec((tile_b, feat), lambda i: (i, 0))


@functools.partial(jax.jit, static_argnames=("tile_b",))
def generator_forward(z, y, params, tile_b=512):
    """z: (B, 100) f32, y: (B,) int32 in [0, 10). Returns (B, 784) f32."""
    B = z.shape[0]

    # ---- batch-tile selection -------------------------------------------
    # Minimize padding waste (tb sized to ceil(B / n_tiles)) and, when the
    # batch is big enough, guarantee >= 2 tiles so v7x can shard the grid
    # across both TensorCores.
    n_tiles = max(1, -(-B // tile_b))
    if B > tile_b // 2:
        n_tiles = max(n_tiles, 2)
    tb = _round_up(-(-B // n_tiles), 16)      # 16-row bf16 sublane pack
    pb = tb * n_tiles
    grid = (n_tiles,)

    # ---- parameter prep (tiny one-time glue, folded under the same jit) ---
    w1 = params["w1"]                                           # (110, 256) f32
    # Fold the embedding: one_hot(y) @ (emb @ W1[100:]) == emb[y] @ W1[100:].
    w1_aug = jnp.concatenate(
        [w1[:LATENT],
         params["emb"] @ w1[LATENT:],                           # (10, 256)
         jnp.zeros((K1_PAD - LATENT - N_CLASSES, H1), jnp.float32)],
        axis=0).astype(jnp.bfloat16)                            # (128, 256)
    b1 = params["b1"].astype(jnp.bfloat16)                      # (1, 256)
    w2 = params["w2"].astype(jnp.bfloat16)                      # (256, 512)
    b2 = params["b2"].astype(jnp.bfloat16)                      # (1, 512)
    w3 = params["w3"].astype(jnp.bfloat16)                      # (512, 1024)
    b3 = params["b3"].astype(jnp.bfloat16)                      # (1, 1024)
    w4 = jnp.pad(params["w4"],
                 ((0, 0), (0, OUT_PAD - OUT))).astype(jnp.bfloat16)  # (1024, 896)
    b4 = jnp.pad(params["b4"], ((0, 0), (0, OUT_PAD - OUT)))    # (1, 896) f32

    # ---- batch-dependent glue: x = [z | one_hot(y) | 0] -> (pb, 128) bf16 --
    one_hot = jax.nn.one_hot(y, N_CLASSES, dtype=z.dtype)       # (B, 10)
    x = jnp.concatenate([z, one_hot], axis=-1)                  # (B, 110)
    x = jnp.pad(x, ((0, pb - B), (0, K1_PAD - LATENT - N_CLASSES)))
    x = x.astype(jnp.bfloat16)                                  # (pb, 128)

    flops = 2 * pb * (K1_PAD * H1 + H1 * H2 + H2 * H3 + H3 * OUT_PAD)
    bytes_accessed = (
        2 * (K1_PAD * H1 + H1 * H2 + H2 * H3 + H3 * OUT_PAD      # bf16 weights
             + H1 + H2 + H3)                                     # bf16 biases
        + 4 * OUT_PAD                                            # f32 b4
        + 2 * pb * K1_PAD                                        # bf16 x
        + 2 * pb * OUT_PAD)                                      # bf16 out

    out = pl.pallas_call(
        generator_kernel,
        out_shape=jax.ShapeDtypeStruct((pb, OUT_PAD), jnp.bfloat16),
        grid=grid,
        in_specs=[
            _batched(tb, K1_PAD),          # x tile: [z | one_hot | 0]
            _resident((K1_PAD, H1)),       # w1 (augmented)
            _resident((1, H1)),            # b1
            _resident((H1, H2)),           # w2
            _resident((1, H2)),            # b2
            _resident((H2, H3)),           # w3
            _resident((1, H3)),            # b3
            _resident((H3, OUT_PAD)),      # w4 (lane padded)
            _resident((1, OUT_PAD)),       # b4 (lane padded, f32)
        ],
        out_specs=_batched(tb, OUT_PAD),
        compiler_params=pltpu.CompilerParams(
            dimension_semantics=("parallel",),
            vmem_limit_bytes=32 << 20,
        ),
        cost_estimate=pl.CostEstimate(
            flops=flops,
            transcendentals=pb * OUT_PAD,
            bytes_accessed=bytes_accessed,
        ),
    )(x, w1_aug, b1, w2, b2, w3, b3, w4, b4)

    return out[:B, :OUT].astype(jnp.float32)


def init_params(key):
    """Deterministic init mimicking PyTorch defaults:
       Embedding ~ N(0, 1); Linear W, b ~ U(-1/sqrt(fan_in), 1/sqrt(fan_in))."""
    ks = jax.random.split(key, 9)

    def linear(kw, kb, fan_in, fan_out):
        bound = 1.0 / jnp.sqrt(fan_in)
        w = jax.random.uniform(kw, (fan_in, fan_out), jnp.float32, -bound, bound)
        b = jax.random.uniform(kb, (1, fan_out), jnp.float32, -bound, bound)
        return w, b

    emb = jax.random.normal(ks[0], (N_CLASSES, EMB), jnp.float32)
    w1, b1 = linear(ks[1], ks[2], LATENT + EMB, H1)
    w2, b2 = linear(ks[3], ks[4], H1, H2)
    w3, b3 = linear(ks[5], ks[6], H2, H3)
    w4, b4 = linear(ks[7], ks[8], H3, OUT)
    return {"emb": emb, "w1": w1, "b1": b1, "w2": w2, "b2": b2,
            "w3": w3, "b3": b3, "w4": w4, "b4": b4}


def reference_forward(z, y, params):
    """Pure-JAX f32 reference matching the PyTorch module."""
    x = jnp.concatenate([z, jnp.take(params["emb"], y, axis=0)], axis=-1)
    h = jax.nn.leaky_relu(x @ params["w1"] + params["b1"], NEG_SLOPE)
    h = jax.nn.leaky_relu(h @ params["w2"] + params["b2"], NEG_SLOPE)
    h = jax.nn.leaky_relu(h @ params["w3"] + params["b3"], NEG_SLOPE)
    return jnp.tanh(h @ params["w4"] + params["b4"])


if __name__ == "__main__":
    key = jax.random.PRNGKey(0)
    k_param, k_z, k_y = jax.random.split(key, 3)

    B = 4
    params = init_params(k_param)
    z = jax.random.normal(k_z, (B, LATENT), jnp.float32)
    y = jax.random.randint(k_y, (B,), 0, N_CLASSES, jnp.int32)

    out = generator_forward(z, y, params)
    out = jax.block_until_ready(out)

    ref = reference_forward(z, y, params)
    assert out.shape == (B, OUT), out.shape
    # bf16 weights/activations/output with f32 accumulation -> relaxed
    # tolerance vs the f32 reference.
    max_err = float(jnp.max(jnp.abs(out - ref)))
    assert jnp.allclose(out, ref, atol=3e-2, rtol=3e-2), max_err

    print("KERNEL_OK")
</pallas_src>

<mosaic_0001>
module attributes {stable_mosaic.version = 11 : i64} {
  func.func @generator_kernel(%arg0: i32, %arg1: memref<16x128xbf16, #tpu.memory_space<vmem>>, %arg2: memref<128x256xbf16, #tpu.memory_space<vmem>>, %arg3: memref<1x256xbf16, #tpu.memory_space<vmem>>, %arg4: memref<256x512xbf16, #tpu.memory_space<vmem>>, %arg5: memref<1x512xbf16, #tpu.memory_space<vmem>>, %arg6: memref<512x1024xbf16, #tpu.memory_space<vmem>>, %arg7: memref<1x1024xbf16, #tpu.memory_space<vmem>>, %arg8: memref<1024x896xbf16, #tpu.memory_space<vmem>>, %arg9: memref<1x896xf32, #tpu.memory_space<vmem>>, %arg10: memref<16x896xbf16, #tpu.memory_space<vmem>>) attributes {dimension_semantics = [#tpu.dimension_semantics<parallel>], iteration_bounds = array<i64: 1>, scalar_prefetch = 0 : i64, scratch_operands = 0 : i64, tpu.core_type = #tpu.core_type<tc>, window_params = [{transform_indices = @transform_0, window_bounds = array<i64: 16, 128>}, {pipeline_mode = #tpu.pipeline_mode<synchronous>, transform_indices = @transform_1, window_bounds = array<i64: 128, 256>}, {pipeline_mode = #tpu.pipeline_mode<synchronous>, transform_indices = @transform_2, window_bounds = array<i64: 1, 256>}, {pipeline_mode = #tpu.pipeline_mode<synchronous>, transform_indices = @transform_3, window_bounds = array<i64: 256, 512>}, {pipeline_mode = #tpu.pipeline_mode<synchronous>, transform_indices = @transform_4, window_bounds = array<i64: 1, 512>}, {pipeline_mode = #tpu.pipeline_mode<synchronous>, transform_indices = @transform_5, window_bounds = array<i64: 512, 1024>}, {pipeline_mode = #tpu.pipeline_mode<synchronous>, transform_indices = @transform_6, window_bounds = array<i64: 1, 1024>}, {pipeline_mode = #tpu.pipeline_mode<synchronous>, transform_indices = @transform_7, window_bounds = array<i64: 1024, 896>}, {pipeline_mode = #tpu.pipeline_mode<synchronous>, transform_indices = @transform_8, window_bounds = array<i64: 1, 896>}, {transform_indices = @transform_9, window_bounds = array<i64: 16, 896>}]} {
    %c0 = arith.constant 0 : index
    %c0_0 = arith.constant 0 : index
    %0 = vector.load %arg1[%c0, %c0_0] : memref<16x128xbf16, #tpu.memory_space<vmem>>, vector<16x128xbf16>
    %c0_1 = arith.constant 0 : index
    %c0_2 = arith.constant 0 : index
    %1 = vector.load %arg2[%c0_1, %c0_2] : memref<128x256xbf16, #tpu.memory_space<vmem>>, vector<128x256xbf16>
    %cst = arith.constant dense<0.000000e+00> : vector<16x256xf32>
    %2 = tpu.matmul %0, %1, %cst {dimension_numbers = #tpu.dot_dimension_numbers<[1], [0], [0], [1], [0, 0, 1, 1], [], []>} : vector<16x128xbf16>, vector<128x256xbf16>, vector<16x256xf32> -> vector<16x256xf32>
    %3 = arith.truncf %2 : vector<16x256xf32> to vector<16x256xbf16>
    %c0_3 = arith.constant 0 : index
    %c0_4 = arith.constant 0 : index
    %4 = vector.load %arg3[%c0_3, %c0_4] : memref<1x256xbf16, #tpu.memory_space<vmem>>, vector<1x256xbf16>
    %5 = vector.broadcast %4 : vector<1x256xbf16> to vector<16x256xbf16>
    %6 = arith.addf %3, %5 : vector<16x256xbf16>
    %cst_5 = arith.constant 1.000980e-02 : bf16
    %7 = vector.broadcast %cst_5 : bf16 to vector<16x256xbf16>
    %8 = arith.mulf %7, %6 : vector<16x256xbf16>
    %9 = arith.maximumf %6, %8 : vector<16x256xbf16>
    %c0_6 = arith.constant 0 : index
    %c0_7 = arith.constant 0 : index
    %10 = vector.load %arg4[%c0_6, %c0_7] : memref<256x512xbf16, #tpu.memory_space<vmem>>, vector<256x512xbf16>
    %cst_8 = arith.constant dense<0.000000e+00> : vector<16x512xf32>
    %11 = tpu.matmul %9, %10, %cst_8 {dimension_numbers = #tpu.dot_dimension_numbers<[1], [0], [0], [1], [0, 0, 1, 1], [], []>} : vector<16x256xbf16>, vector<256x512xbf16>, vector<16x512xf32> -> vector<16x512xf32>
    %12 = arith.truncf %11 : vector<16x512xf32> to vector<16x512xbf16>
    %c0_9 = arith.constant 0 : index
    %c0_10 = arith.constant 0 : index
    %13 = vector.load %arg5[%c0_9, %c0_10] : memref<1x512xbf16, #tpu.memory_space<vmem>>, vector<1x512xbf16>
    %14 = vector.broadcast %13 : vector<1x512xbf16> to vector<16x512xbf16>
    %15 = arith.addf %12, %14 : vector<16x512xbf16>
    %cst_11 = arith.constant 1.000980e-02 : bf16
    %16 = vector.broadcast %cst_11 : bf16 to vector<16x512xbf16>
    %17 = arith.mulf %16, %15 : vector<16x512xbf16>
    %18 = arith.maximumf %15, %17 : vector<16x512xbf16>
    %c0_12 = arith.constant 0 : index
    %c0_13 = arith.constant 0 : index
    %19 = vector.load %arg6[%c0_12, %c0_13] : memref<512x1024xbf16, #tpu.memory_space<vmem>>, vector<512x1024xbf16>
    %cst_14 = arith.constant dense<0.000000e+00> : vector<16x1024xf32>
    %20 = tpu.matmul %18, %19, %cst_14 {dimension_numbers = #tpu.dot_dimension_numbers<[1], [0], [0], [1], [0, 0, 1, 1], [], []>} : vector<16x512xbf16>, vector<512x1024xbf16>, vector<16x1024xf32> -> vector<16x1024xf32>
    %21 = arith.truncf %20 : vector<16x1024xf32> to vector<16x1024xbf16>
    %c0_15 = arith.constant 0 : index
    %c0_16 = arith.constant 0 : index
    %22 = vector.load %arg7[%c0_15, %c0_16] : memref<1x1024xbf16, #tpu.memory_space<vmem>>, vector<1x1024xbf16>
    %23 = vector.broadcast %22 : vector<1x1024xbf16> to vector<16x1024xbf16>
    %24 = arith.addf %21, %23 : vector<16x1024xbf16>
    %cst_17 = arith.constant 1.000980e-02 : bf16
    %25 = vector.broadcast %cst_17 : bf16 to vector<16x1024xbf16>
    %26 = arith.mulf %25, %24 : vector<16x1024xbf16>
    %27 = arith.maximumf %24, %26 : vector<16x1024xbf16>
    %c0_18 = arith.constant 0 : index
    %c0_19 = arith.constant 0 : index
    %28 = vector.load %arg8[%c0_18, %c0_19] : memref<1024x896xbf16, #tpu.memory_space<vmem>>, vector<1024x896xbf16>
    %cst_20 = arith.constant dense<0.000000e+00> : vector<16x896xf32>
    %29 = tpu.matmul %27, %28, %cst_20 {dimension_numbers = #tpu.dot_dimension_numbers<[1], [0], [0], [1], [0, 0, 1, 1], [], []>} : vector<16x1024xbf16>, vector<1024x896xbf16>, vector<16x896xf32> -> vector<16x896xf32>
    %c0_21 = arith.constant 0 : index
    %c0_22 = arith.constant 0 : index
    %30 = vector.load %arg9[%c0_21, %c0_22] : memref<1x896xf32, #tpu.memory_space<vmem>>, vector<1x896xf32>
    %31 = vector.broadcast %30 : vector<1x896xf32> to vector<16x896xf32>
    %32 = arith.addf %29, %31 : vector<16x896xf32>
    %33 = math.tanh %32 : vector<16x896xf32>
    %34 = arith.truncf %33 : vector<16x896xf32> to vector<16x896xbf16>
    %c0_23 = arith.constant 0 : index
    %c0_24 = arith.constant 0 : index
    %35 = vector.load %arg10[%c0_23, %c0_24] : memref<16x896xbf16, #tpu.memory_space<vmem>>, vector<16x896xbf16>
    tpu.vector_store %arg10[%c0_23, %c0_24], %34 {strides = array<i32>} : memref<16x896xbf16, #tpu.memory_space<vmem>>, vector<16x896xbf16>,
    return
  }
  func.func @transform_0(%arg0: i32) -> (i32, i32) {
    %c0_i32 = arith.constant 0 : i32
    %c0_i32_0 = arith.constant 0 : i32
    return %arg0, %c0_i32 : i32, i32
  }
  func.func @transform_1(%arg0: i32) -> (i32, i32) {
    %c0_i32 = arith.constant 0 : i32
    %c0_i32_0 = arith.constant 0 : i32
    %c0_i32_1 = arith.constant 0 : i32
    return %c0_i32, %c0_i32_0 : i32, i32
  }
  func.func @transform_2(%arg0: i32) -> (i32, i32) {
    %c0_i32 = arith.constant 0 : i32
    %c0_i32_0 = arith.constant 0 : i32
    %c0_i32_1 = arith.constant 0 : i32
    return %c0_i32, %c0_i32_0 : i32, i32
  }
  func.func @transform_3(%arg0: i32) -> (i32, i32) {
    %c0_i32 = arith.constant 0 : i32
    %c0_i32_0 = arith.constant 0 : i32
    %c0_i32_1 = arith.constant 0 : i32
    return %c0_i32, %c0_i32_0 : i32, i32
  }
  func.func @transform_4(%arg0: i32) -> (i32, i32) {
    %c0_i32 = arith.constant 0 : i32
    %c0_i32_0 = arith.constant 0 : i32
    %c0_i32_1 = arith.constant 0 : i32
    return %c0_i32, %c0_i32_0 : i32, i32
  }
  func.func @transform_5(%arg0: i32) -> (i32, i32) {
    %c0_i32 = arith.constant 0 : i32
    %c0_i32_0 = arith.constant 0 : i32
    %c0_i32_1 = arith.constant 0 : i32
    return %c0_i32, %c0_i32_0 : i32, i32
  }
  func.func @transform_6(%arg0: i32) -> (i32, i32) {
    %c0_i32 = arith.constant 0 : i32
    %c0_i32_0 = arith.constant 0 : i32
    %c0_i32_1 = arith.constant 0 : i32
    return %c0_i32, %c0_i32_0 : i32, i32
  }
  func.func @transform_7(%arg0: i32) -> (i32, i32) {
    %c0_i32 = arith.constant 0 : i32
    %c0_i32_0 = arith.constant 0 : i32
    %c0_i32_1 = arith.constant 0 : i32
    return %c0_i32, %c0_i32_0 : i32, i32
  }
  func.func @transform_8(%arg0: i32) -> (i32, i32) {
    %c0_i32 = arith.constant 0 : i32
    %c0_i32_0 = arith.constant 0 : i32
    %c0_i32_1 = arith.constant 0 : i32
    return %c0_i32, %c0_i32_0 : i32, i32
  }
  func.func @transform_9(%arg0: i32) -> (i32, i32) {
    %c0_i32 = arith.constant 0 : i32
    %c0_i32_0 = arith.constant 0 : i32
    return %arg0, %c0_i32 : i32, i32
  }
}

</mosaic_0001>

<llo_original>
// kernel: generator_forward.1
$region0: #{generator_forward.1}
  #allocation0 [shape = 'u32[]', space=smem, size = 0x4, offset = 0x4, fixed_abs, tag = 'smem constant byte address 0x4 - core index']
  #allocation1 [shape = 'u32[144,128]{1,0:T(1,128)}', space=vmem, size = 0x12000, scoped, tag = 'internal scratch']
  %s0 = inlined_call_operand.vmem [shape: bf16[16,128], index: 0, kind: input, shape index: {}]
  %s1 = inlined_call_operand.vmem [shape: bf16[128,256], index: 1, kind: input, shape index: {}]
  %s2 = inlined_call_operand.vmem [shape: bf16[1,256], index: 2, kind: input, shape index: {}]
  %s3 = inlined_call_operand.vmem [shape: bf16[256,512], index: 3, kind: input, shape index: {}]
  %s4 = inlined_call_operand.vmem [shape: bf16[1,512], index: 4, kind: input, shape index: {}]
  %s5 = inlined_call_operand.vmem [shape: bf16[512,1024], index: 5, kind: input, shape index: {}]
  %s6 = inlined_call_operand.vmem [shape: bf16[1,1024], index: 6, kind: input, shape index: {}]
  %s7 = inlined_call_operand.vmem [shape: bf16[1024,896], index: 7, kind: input, shape index: {}]
  %s8 = inlined_call_operand.vmem [shape: f32[1,896], index: 8, kind: input, shape index: {}]
  %s9 = inlined_call_operand.vmem [shape: bf16[16,896], index: 9, kind: output, shape index: {}]
  %s10 = sld [smem:[#allocation0]]
  $region46: #{generator_forward.1} parent=0
    _
  %s12 = ssub.s32 1, %s10
  %s13 = scalar_select 0, %s12, %s10
  // Predicated region
  $region2: #{generator_forward.1} parent=0 // pred_check
    _
  $region3: #{generator_forward.1} parent=0 // pred_check_branch
    %15 = sbr.rel (0) target = $region5
  $region4: #{generator_forward.1} parent=0 // pred_region
    _
  $region5: #{generator_forward.1} parent=0 // pred_fallthru
    _
  // Predicated region
  $region6: #{generator_forward.1} parent=0 // pred_check
    _
  $region7: #{generator_forward.1} parent=0 // pred_check_branch
    %17 = sbr.rel (0) target = $region9
  $region8: #{generator_forward.1} parent=0 // pred_region
    _
  $region9: #{generator_forward.1} parent=0 // pred_fallthru
    _
  // Predicated region
  $region10: #{generator_forward.1} parent=0 // pred_check
    _
  $region11: #{generator_forward.1} parent=0 // pred_check_branch
    %19 = sbr.rel (0) target = $region13
  $region12: #{generator_forward.1} parent=0 // pred_region
    _
  $region13: #{generator_forward.1} parent=0 // pred_fallthru
    _
  // Predicated region
  $region14: #{generator_forward.1} parent=0 // pred_check
    _
  $region15: #{generator_forward.1} parent=0 // pred_check_branch
    %21 = sbr.rel (0) target = $region17
  $region16: #{generator_forward.1} parent=0 // pred_region
    _
  $region17: #{generator_forward.1} parent=0 // pred_fallthru
    _
  // Predicated region
  $region18: #{generator_forward.1} parent=0 // pred_check
    _
  $region19: #{generator_forward.1} parent=0 // pred_check_branch
    %23 = sbr.rel (0) target = $region21
  $region20: #{generator_forward.1} parent=0 // pred_region
    _
  $region21: #{generator_forward.1} parent=0 // pred_fallthru
    _
  // Predicated region
  $region22: #{generator_forward.1} parent=0 // pred_check
    _
  $region23: #{generator_forward.1} parent=0 // pred_check_branch
    %25 = sbr.rel (0) target = $region25
  $region24: #{generator_forward.1} parent=0 // pred_region
    _
  $region25: #{generator_forward.1} parent=0 // pred_fallthru
    _
  // Predicated region
  $region26: #{generator_forward.1} parent=0 // pred_check
    _
  $region27: #{generator_forward.1} parent=0 // pred_check_branch
    %27 = sbr.rel (0) target = $region29
  $region28: #{generator_forward.1} parent=0 // pred_region
    _
  $region29: #{generator_forward.1} parent=0 // pred_fallthru
    _
  // Predicated region
  $region30: #{generator_forward.1} parent=0 // pred_check
    _
  $region31: #{generator_forward.1} parent=0 // pred_check_branch
    %29 = sbr.rel (0) target = $region33
  $region32: #{generator_forward.1} parent=0 // pred_region
    _
  $region33: #{generator_forward.1} parent=0 // pred_fallthru
    _
  // Predicated region
  $region34: #{generator_forward.1} parent=0 // pred_check
    _
  $region35: #{generator_forward.1} parent=0 // pred_check_branch
    %31 = sbr.rel (0) target = $region37
  $region36: #{generator_forward.1} parent=0 // pred_region
    _
  $region37: #{generator_forward.1} parent=0 // pred_fallthru
    _
  %v34 = vld [vmem:[%s0] sm:$0xf]
  %v35 = vld [vmem:[%s0 + $0x4] sm:$0xf]
  %v36 = vld [vmem:[%s1] sm:$0xff]
  %v37 = vld [vmem:[%s1 + $0x8] sm:$0xff]
  %v38 = vld [vmem:[%s1 + $0x10] sm:$0xff]
  %v39 = vld [vmem:[%s1 + $0x18] sm:$0xff]
  %v40 = vld [vmem:[%s1 + $0x20] sm:$0xff]
  %v41 = vld [vmem:[%s1 + $0x28] sm:$0xff]
  %v42 = vld [vmem:[%s1 + $0x30] sm:$0xff]
  %v43 = vld [vmem:[%s1 + $0x38] sm:$0xff]
  %v44 = vld [vmem:[%s1 + $0x40] sm:$0xff]
  %v45 = vld [vmem:[%s1 + $0x48] sm:$0xff]
  %v46 = vld [vmem:[%s1 + $0x50] sm:$0xff]
  %v47 = vld [vmem:[%s1 + $0x58] sm:$0xff]
  %v48 = vld [vmem:[%s1 + $0x60] sm:$0xff]
  %v49 = vld [vmem:[%s1 + $0x68] sm:$0xff]
  %v50 = vld [vmem:[%s1 + $0x70] sm:$0xff]
  %v51 = vld [vmem:[%s1 + $0x78] sm:$0xff]
  %v54 = vunpack.c.l.b16 %v34
  %v55 = vunpack.c.l.b16 %v35
  %v56 = vpack.c.b16 %v55, %v54
  %v74 = vunpack.c.l.b16 %v36
  %v75 = vunpack.c.h.b16 %v36
  %v76 = vunpack.c.l.b16 %v37
  %v77 = vunpack.c.h.b16 %v37
  %v78 = vunpack.c.l.b16 %v38
  %v79 = vunpack.c.h.b16 %v38
  %v80 = vunpack.c.l.b16 %v39
  %v81 = vunpack.c.h.b16 %v39
  %v82 = vunpack.c.l.b16 %v40
  %v83 = vunpack.c.h.b16 %v40
  %v84 = vunpack.c.l.b16 %v41
  %v85 = vunpack.c.h.b16 %v41
  %v86 = vunpack.c.l.b16 %v42
  %v87 = vunpack.c.h.b16 %v42
  %v88 = vunpack.c.l.b16 %v43
  %v89 = vunpack.c.h.b16 %v43
  %v90 = vunpack.c.l.b16 %v44
  %v91 = vunpack.c.h.b16 %v44
  %v92 = vunpack.c.l.b16 %v45
  %v93 = vunpack.c.h.b16 %v45
  %v94 = vunpack.c.l.b16 %v46
  %v95 = vunpack.c.h.b16 %v46
  %v96 = vunpack.c.l.b16 %v47
  %v97 = vunpack.c.h.b16 %v47
  %v98 = vunpack.c.l.b16 %v48
  %v99 = vunpack.c.h.b16 %v48
  %v100 = vunpack.c.l.b16 %v49
  %v101 = vunpack.c.h.b16 %v49
  %v102 = vunpack.c.l.b16 %v50
  %v103 = vunpack.c.h.b16 %v50
  %v104 = vunpack.c.l.b16 %v51
  %v105 = vunpack.c.h.b16 %v51
  %v106 = vpack.c.b16 %v76, %v74
  %v107 = vpack.c.b16 %v77, %v75
  %v108 = vpack.c.b16 %v80, %v78
  %v109 = vpack.c.b16 %v81, %v79
  %v110 = vpack.c.b16 %v84, %v82
  %v111 = vpack.c.b16 %v85, %v83
  %v112 = vpack.c.b16 %v88, %v86
  %v113 = vpack.c.b16 %v89, %v87
  %v114 = vpack.c.b16 %v92, %v90
  %v115 = vpack.c.b16 %v93, %v91
  %v116 = vpack.c.b16 %v96, %v94
  %v117 = vpack.c.b16 %v97, %v95
  %v118 = vpack.c.b16 %v100, %v98
  %v119 = vpack.c.b16 %v101, %v99
  %v120 = vpack.c.b16 %v104, %v102
  %v121 = vpack.c.b16 %v105, %v103
  %138 = vmatprep.subr.bf16.mxu0 %v121
  %139 = vmatpush1.bf16.msra.mxu0 %v120
  %140 = vmatprep.subr.bf16.mxu0 %v119
  %141 = vmatpush1.bf16.msra.mxu0 %v118
  %142 = vmatprep.subr.bf16.mxu0 %v117
  %143 = vmatpush1.bf16.msra.mxu0 %v116
  %144 = vmatprep.subr.bf16.mxu0 %v115
  %145 = vmatpush1.bf16.msra.mxu0 %v114
  %146 = vmatprep.subr.bf16.mxu0 %v113
  %147 = vmatpush1.bf16.msra.mxu0 %v112
  %148 = vmatprep.subr.bf16.mxu0 %v111
  %149 = vmatpush1.bf16.msra.mxu0 %v110
  %150 = vmatprep.subr.bf16.mxu0 %v109
  %151 = vmatpush1.bf16.msra.mxu0 %v108
  %152 = vmatprep.subr.bf16.mxu0 %v107
  %153 = vmatpush1.bf16.msra.mxu0 %v106
  %154 = vmatprep.subr.bf16.mxu0 0
  %155 = vmatpush2.bf16.msra.mxu0 0
  %156 = vmatprep.subr.bf16.mxu0 0
  %157 = vmatpush2.bf16.msra.mxu0 0
  %158 = vmatprep.subr.bf16.mxu0 0
  %159 = vmatpush2.bf16.msra.mxu0 0
  %160 = vmatprep.subr.bf16.mxu0 0
  %161 = vmatpush2.bf16.msra.mxu0 0
  %162 = vmatprep.subr.bf16.mxu0 0
  %163 = vmatpush2.bf16.msra.mxu0 0
  %164 = vmatprep.subr.bf16.mxu0 0
  %165 = vmatpush2.bf16.msra.mxu0 0
  %166 = vmatprep.subr.bf16.mxu0 0
  %167 = vmatpush2.bf16.msra.mxu0 0
  %168 = vmatprep.subr.bf16.mxu0 0
  %169 = vmatpush2.bf16.msra.mxu0 0
  %170 = vmatprep.mubr.bf16.mxu0 0
  %171 = vmatmul.mubr.bf16.gmra.mxu0 %v56
  %v172 = vpop.f32.mrf.mxu0
  %v173 = vadd.f32 0.0, %v172
  %v174 = vpop.f32.mrf.mxu0
  %v175 = vadd.f32 0.0, %v174
  %v176 = vpop.f32.mrf.mxu0
  %v177 = vadd.f32 0.0, %v176
  %v178 = vpop.f32.mrf.mxu0
  %v179 = vadd.f32 0.0, %v178
  %180 = vdwg.mxu0
  %v181 = vpack.c.bf16 %v177, %v173
  %v182 = vpack.c.bf16 %v179, %v175
  %v183 = vld [vmem:[%s2] sm:$0x3]
  %v186 = vunpack.c.l.s4 1966171168
  %v187 = vunpack.c.0.s8 %v186
  %v188 = vlaneseq
  %v189 = vshrl.u32 %v188, 7
  %v190 = vsub.s32 %v187, %v189
  %v191 = vrot.slane %v183, %v190
  %v192 = vcombine.high %v191, %v191
  %v194 = vunpack.c.l.s4 1966171168
  %v195 = vunpack.c.0.s8 %v194
  %v196 = vlaneseq
  %v197 = vshrl.u32 %v196, 7
  %v198 = vsub.s32 %v195, %v197
  %v199 = vrot.slane %v191, %v198
  %v201 = vunpack.c.l.s4 1966171168
  %v202 = vunpack.c.0.s8 %v201
  %v203 = vlaneseq
  %v204 = vshrl.u32 %v203, 7
  %v205 = vsub.s32 %v202, %v204
  %v206 = vrot.slane %v192, %v205
  %v208 = vpack.i.b16 %v199, %v199
  %v210 = vlaneseq
  %v211 = vshrl.u32 %v210, 7
  %v212 = vsub.s32 0, %v211
  %v213 = vrot.slane %v208, %v212
  %v215 = vpack.i.b16 %v206, %v206
  %v217 = vlaneseq
  %v218 = vshrl.u32 %v217, 7
  %v219 = vsub.s32 0, %v218
  %v220 = vrot.slane %v215, %v219
  %v221 = vadd.bf16 %v181, %v213
  %v222 = vadd.bf16 %v182, %v220
  %v223 = vmul.bf16 %v221, 1009007652
  %v224 = vmul.bf16 %v222, 1009007652
  %v225 = vmax.bf16 %v221, %v223
  %v226 = vmax.bf16 %v222, %v224
  %v227 = vld [vmem:[%s3] sm:$0xff]
  %v228 = vld [vmem:[%s3 + $0x8] sm:$0xff]
  %v229 = vld [vmem:[%s3 + $0x10] sm:$0xff]
  %v230 = vld [vmem:[%s3 + $0x18] sm:$0xff]
  %v231 = vld [vmem:[%s3 + $0x20] sm:$0xff]
  %v232 = vld [vmem:[%s3 + $0x28] sm:$0xff]
  %v233 = vld [vmem:[%s3 + $0x30] sm:$0xff]
  %v234 = vld [vmem:[%s3 + $0x38] sm:$0xff]
  %v235 = vld [vmem:[%s3 + $0x40] sm:$0xff]
  %v236 = vld [vmem:[%s3 + $0x48] sm:$0xff]
  %v237 = vld [vmem:[%s3 + $0x50] sm:$0xff]
  %v238 = vld [vmem:[%s3 + $0x58] sm:$0xff]
  %v239 = vld [vmem:[%s3 + $0x60] sm:$0xff]
  %v240 = vld [vmem:[%s3 + $0x68] sm:$0xff]
  %v241 = vld [vmem:[%s3 + $0x70] sm:$0xff]
  %v242 = vld [vmem:[%s3 + $0x78] sm:$0xff]
  %v243 = vld [vmem:[%s3 + $0x80] sm:$0xff]
  %v244 = vld [vmem:[%s3 + $0x88] sm:$0xff]
  %v245 = vld [vmem:[%s3 + $0x90] sm:$0xff]
  %v246 = vld [vmem:[%s3 + $0x98] sm:$0xff]
  %v247 = vld [vmem:[%s3 + $0xa0] sm:$0xff]
  %v248 = vld [vmem:[%s3 + $0xa8] sm:$0xff]
  %v249 = vld [vmem:[%s3 + $0xb0] sm:$0xff]
  %v250 = vld [vmem:[%s3 + $0xb8] sm:$0xff]
  %v251 = vld [vmem:[%s3 + $0xc0] sm:$0xff]
  %v252 = vld [vmem:[%s3 + $0xc8] sm:$0xff]
  %v253 = vld [vmem:[%s3 + $0xd0] sm:$0xff]
  %v254 = vld [vmem:[%s3 + $0xd8] sm:$0xff]
  %v255 = vld [vmem:[%s3 + $0xe0] sm:$0xff]
  %v256 = vld [vmem:[%s3 + $0xe8] sm:$0xff]
  %v257 = vld [vmem:[%s3 + $0xf0] sm:$0xff]
  %v258 = vld [vmem:[%s3 + $0xf8] sm:$0xff]
  %v259 = vld [vmem:[%s3 + $0x100] sm:$0xff]
  %v260 = vld [vmem:[%s3 + $0x108] sm:$0xff]
  %v261 = vld [vmem:[%s3 + $0x110] sm:$0xff]
  %v262 = vld [vmem:[%s3 + $0x118] sm:$0xff]
  %v263 = vld [vmem:[%s3 + $0x120] sm:$0xff]
  %v264 = vld [vmem:[%s3 + $0x128] sm:$0xff]
  %v265 = vld [vmem:[%s3 + $0x130] sm:$0xff]
  %v266 = vld [vmem:[%s3 + $0x138] sm:$0xff]
  %v267 = vld [vmem:[%s3 + $0x140] sm:$0xff]
  %v268 = vld [vmem:[%s3 + $0x148] sm:$0xff]
  %v269 = vld [vmem:[%s3 + $0x150] sm:$0xff]
  %v270 = vld [vmem:[%s3 + $0x158] sm:$0xff]
  %v271 = vld [vmem:[%s3 + $0x160] sm:$0xff]
  %v272 = vld [vmem:[%s3 + $0x168] sm:$0xff]
  %v273 = vld [vmem:[%s3 + $0x170] sm:$0xff]
  %v274 = vld [vmem:[%s3 + $0x178] sm:$0xff]
  %v275 = vld [vmem:[%s3 + $0x180] sm:$0xff]
  %v276 = vld [vmem:[%s3 + $0x188] sm:$0xff]
  %v277 = vld [vmem:[%s3 + $0x190] sm:$0xff]
  %v278 = vld [vmem:[%s3 + $0x198] sm:$0xff]
  %v279 = vld [vmem:[%s3 + $0x1a0] sm:$0xff]
  %v280 = vld [vmem:[%s3 + $0x1a8] sm:$0xff]
  %v281 = vld [vmem:[%s3 + $0x1b0] sm:$0xff]
  %v282 = vld [vmem:[%s3 + $0x1b8] sm:$0xff]
  %v283 = vld [vmem:[%s3 + $0x1c0] sm:$0xff]
  %v284 = vld [vmem:[%s3 + $0x1c8] sm:$0xff]
  %v285 = vld [vmem:[%s3 + $0x1d0] sm:$0xff]
  %v286 = vld [vmem:[%s3 + $0x1d8] sm:$0xff]
  %v287 = vld [vmem:[%s3 + $0x1e0] sm:$0xff]
  %v288 = vld [vmem:[%s3 + $0x1e8] sm:$0xff]
  %v289 = vld [vmem:[%s3 + $0x1f0] sm:$0xff]
  %v290 = vld [vmem:[%s3 + $0x1f8] sm:$0xff]
  %v355 = vunpack.c.l.b16 %v227
  %v356 = vunpack.c.h.b16 %v227
  %v357 = vunpack.c.l.b16 %v228
  %v358 = vunpack.c.h.b16 %v228
  %v359 = vunpack.c.l.b16 %v229
  %v360 = vunpack.c.h.b16 %v229
  %v361 = vunpack.c.l.b16 %v230
  %v362 = vunpack.c.h.b16 %v230
  %v363 = vunpack.c.l.b16 %v231
  %v364 = vunpack.c.h.b16 %v231
  %v365 = vunpack.c.l.b16 %v232
  %v366 = vunpack.c.h.b16 %v232
  %v367 = vunpack.c.l.b16 %v233
  %v368 = vunpack.c.h.b16 %v233
  %v369 = vunpack.c.l.b16 %v234
  %v370 = vunpack.c.h.b16 %v234
  %v371 = vunpack.c.l.b16 %v235
  %v372 = vunpack.c.h.b16 %v235
  %v373 = vunpack.c.l.b16 %v236
  %v374 = vunpack.c.h.b16 %v236
  %v375 = vunpack.c.l.b16 %v237
  %v376 = vunpack.c.h.b16 %v237
  %v377 = vunpack.c.l.b16 %v238
  %v378 = vunpack.c.h.b16 %v238
  %v379 = vunpack.c.l.b16 %v239
  %v380 = vunpack.c.h.b16 %v239
  %v381 = vunpack.c.l.b16 %v240
  %v382 = vunpack.c.h.b16 %v240
  %v383 = vunpack.c.l.b16 %v241
  %v384 = vunpack.c.h.b16 %v241
  %v385 = vunpack.c.l.b16 %v242
  %v386 = vunpack.c.h.b16 %v242
  %v387 = vunpack.c.l.b16 %v243
  %v388 = vunpack.c.h.b16 %v243
  %v389 = vunpack.c.l.b16 %v244
  %v390 = vunpack.c.h.b16 %v244
  %v391 = vunpack.c.l.b16 %v245
  %v392 = vunpack.c.h.b16 %v245
  %v393 = vunpack.c.l.b16 %v246
  %v394 = vunpack.c.h.b16 %v246
  %v395 = vunpack.c.l.b16 %v247
  %v396 = vunpack.c.h.b16 %v247
  %v397 = vunpack.c.l.b16 %v248
  %v398 = vunpack.c.h.b16 %v248
  %v399 = vunpack.c.l.b16 %v249
  %v400 = vunpack.c.h.b16 %v249
  %v401 = vunpack.c.l.b16 %v250
  %v402 = vunpack.c.h.b16 %v250
  %v403 = vunpack.c.l.b16 %v251
  %v404 = vunpack.c.h.b16 %v251
  %v405 = vunpack.c.l.b16 %v252
  %v406 = vunpack.c.h.b16 %v252
  %v407 = vunpack.c.l.b16 %v253
  %v408 = vunpack.c.h.b16 %v253
  %v409 = vunpack.c.l.b16 %v254
  %v410 = vunpack.c.h.b16 %v254
  %v411 = vunpack.c.l.b16 %v255
  %v412 = vunpack.c.h.b16 %v255
  %v413 = vunpack.c.l.b16 %v256
  %v414 = vunpack.c.h.b16 %v256
  %v415 = vunpack.c.l.b16 %v257
  %v416 = vunpack.c.h.b16 %v257
  %v417 = vunpack.c.l.b16 %v258
  %v418 = vunpack.c.h.b16 %v258
  %v419 = vunpack.c.l.b16 %v259
  %v420 = vunpack.c.h.b16 %v259
  %v421 = vunpack.c.l.b16 %v260
  %v422 = vunpack.c.h.b16 %v260
  %v423 = vunpack.c.l.b16 %v261
  %v424 = vunpack.c.h.b16 %v261
  %v425 = vunpack.c.l.b16 %v262
  %v426 = vunpack.c.h.b16 %v262
  %v427 = vunpack.c.l.b16 %v263
  %v428 = vunpack.c.h.b16 %v263
  %v429 = vunpack.c.l.b16 %v264
  %v430 = vunpack.c.h.b16 %v264
  %v431 = vunpack.c.l.b16 %v265
  %v432 = vunpack.c.h.b16 %v265
  %v433 = vunpack.c.l.b16 %v266
  %v434 = vunpack.c.h.b16 %v266
  %v435 = vunpack.c.l.b16 %v267
  %v436 = vunpack.c.h.b16 %v267
  %v437 = vunpack.c.l.b16 %v268
  %v438 = vunpack.c.h.b16 %v268
  %v439 = vunpack.c.l.b16 %v269
  %v440 = vunpack.c.h.b16 %v269
  %v441 = vunpack.c.l.b16 %v270
  %v442 = vunpack.c.h.b16 %v270
  %v443 = vunpack.c.l.b16 %v271
  %v444 = vunpack.c.h.b16 %v271
  %v445 = vunpack.c.l.b16 %v272
  %v446 = vunpack.c.h.b16 %v272
  %v447 = vunpack.c.l.b16 %v273
  %v448 = vunpack.c.h.b16 %v273
  %v449 = vunpack.c.l.b16 %v274
  %v450 = vunpack.c.h.b16 %v274
  %v451 = vunpack.c.l.b16 %v275
  %v452 = vunpack.c.h.b16 %v275
  %v453 = vunpack.c.l.b16 %v276
  %v454 = vunpack.c.h.b16 %v276
  %v455 = vunpack.c.l.b16 %v277
  %v456 = vunpack.c.h.b16 %v277
  %v457 = vunpack.c.l.b16 %v278
  %v458 = vunpack.c.h.b16 %v278
  %v459 = vunpack.c.l.b16 %v279
  %v460 = vunpack.c.h.b16 %v279
  %v461 = vunpack.c.l.b16 %v280
  %v462 = vunpack.c.h.b16 %v280
  %v463 = vunpack.c.l.b16 %v281
  %v464 = vunpack.c.h.b16 %v281
  %v465 = vunpack.c.l.b16 %v282
  %v466 = vunpack.c.h.b16 %v282
  %v467 = vunpack.c.l.b16 %v283
  %v468 = vunpack.c.h.b16 %v283
  %v469 = vunpack.c.l.b16 %v284
  %v470 = vunpack.c.h.b16 %v284
  %v471 = vunpack.c.l.b16 %v285
  %v472 = vunpack.c.h.b16 %v285
  %v473 = vunpack.c.l.b16 %v286
  %v474 = vunpack.c.h.b16 %v286
  %v475 = vunpack.c.l.b16 %v287
  %v476 = vunpack.c.h.b16 %v287
  %v477 = vunpack.c.l.b16 %v288
  %v478 = vunpack.c.h.b16 %v288
  %v479 = vunpack.c.l.b16 %v289
  %v480 = vunpack.c.h.b16 %v289
  %v481 = vunpack.c.l.b16 %v290
  %v482 = vunpack.c.h.b16 %v290
  %v483 = vpack.c.b16 %v359, %v355
  %v484 = vpack.c.b16 %v360, %v356
  %v485 = vpack.c.b16 %v361, %v357
  %v486 = vpack.c.b16 %v362, %v358
  %v487 = vpack.c.b16 %v367, %v363
  %v488 = vpack.c.b16 %v368, %v364
  %v489 = vpack.c.b16 %v369, %v365
  %v490 = vpack.c.b16 %v370, %v366
  %v491 = vpack.c.b16 %v375, %v371
  %v492 = vpack.c.b16 %v376, %v372
  %v493 = vpack.c.b16 %v377, %v373
  %v494 = vpack.c.b16 %v378, %v374
  %v495 = vpack.c.b16 %v383, %v379
  %v496 = vpack.c.b16 %v384, %v380
  %v497 = vpack.c.b16 %v385, %v381
  %v498 = vpack.c.b16 %v386, %v382
  %v499 = vpack.c.b16 %v391, %v387
  %v500 = vpack.c.b16 %v392, %v388
  %v501 = vpack.c.b16 %v393, %v389
  %v502 = vpack.c.b16 %v394, %v390
  %v503 = vpack.c.b16 %v399, %v395
  %v504 = vpack.c.b16 %v400, %v396
  %v505 = vpack.c.b16 %v401, %v397
  %v506 = vpack.c.b16 %v402, %v398
  %v507 = vpack.c.b16 %v407, %v403
  %v508 = vpack.c.b16 %v408, %v404
  %v509 = vpack.c.b16 %v409, %v405
  %v510 = vpack.c.b16 %v410, %v406
  %v511 = vpack.c.b16 %v415, %v411
  %v512 = vpack.c.b16 %v416, %v412
  %v513 = vpack.c.b16 %v417, %v413
  %v514 = vpack.c.b16 %v418, %v414
  %v515 = vpack.c.b16 %v423, %v419
  %v516 = vpack.c.b16 %v424, %v420
  %v517 = vpack.c.b16 %v425, %v421
  %v518 = vpack.c.b16 %v426, %v422
  %v519 = vpack.c.b16 %v431, %v427
  %v520 = vpack.c.b16 %v432, %v428
  %v521 = vpack.c.b16 %v433, %v429
  %v522 = vpack.c.b16 %v434, %v430
  %v523 = vpack.c.b16 %v439, %v435
  %v524 = vpack.c.b16 %v440, %v436
  %v525 = vpack.c.b16 %v441, %v437
  %v526 = vpack.c.b16 %v442, %v438
  %v527 = vpack.c.b16 %v447, %v443
  %v528 = vpack.c.b16 %v448, %v444
  %v529 = vpack.c.b16 %v449, %v445
  %v530 = vpack.c.b16 %v450, %v446
  %v531 = vpack.c.b16 %v455, %v451
  %v532 = vpack.c.b16 %v456, %v452
  %v533 = vpack.c.b16 %v457, %v453
  %v534 = vpack.c.b16 %v458, %v454
  %v535 = vpack.c.b16 %v463, %v459
  %v536 = vpack.c.b16 %v464, %v460
  %v537 = vpack.c.b16 %v465, %v461
  %v538 = vpack.c.b16 %v466, %v462
  %v539 = vpack.c.b16 %v471, %v467
  %v540 = vpack.c.b16 %v472, %v468
  %v541 = vpack.c.b16 %v473, %v469
  %v542 = vpack.c.b16 %v474, %v470
  %v543 = vpack.c.b16 %v479, %v475
  %v544 = vpack.c.b16 %v480, %v476
  %v545 = vpack.c.b16 %v481, %v477
  %v546 = vpack.c.b16 %v482, %v478
  %611 = vmatprep.subr.bf16.mxu0 %v512
  %612 = vmatpush1.bf16.msra.mxu0 %v511
  %613 = vmatprep.subr.bf16.mxu0 %v508
  %614 = vmatpush1.bf16.msra.mxu0 %v507
  %615 = vmatprep.subr.bf16.mxu0 %v504
  %616 = vmatpush1.bf16.msra.mxu0 %v503
  %617 = vmatprep.subr.bf16.mxu0 %v500
  %618 = vmatpush1.bf16.msra.mxu0 %v499
  %619 = vmatprep.subr.bf16.mxu0 %v496
  %620 = vmatpush1.bf16.msra.mxu0 %v495
  %621 = vmatprep.subr.bf16.mxu0 %v492
  %622 = vmatpush1.bf16.msra.mxu0 %v491
  %623 = vmatprep.subr.bf16.mxu0 %v488
  %624 = vmatpush1.bf16.msra.mxu0 %v487
  %625 = vmatprep.subr.bf16.mxu0 %v484
  %626 = vmatpush1.bf16.msra.mxu0 %v483
  %627 = vmatprep.subr.bf16.mxu0 %v544
  %628 = vmatpush2.bf16.msra.mxu0 %v543
  %629 = vmatprep.subr.bf16.mxu0 %v540
  %630 = vmatpush2.bf16.msra.mxu0 %v539
  %631 = vmatprep.subr.bf16.mxu0 %v536
  %632 = vmatpush2.bf16.msra.mxu0 %v535
  %633 = vmatprep.subr.bf16.mxu0 %v532
  %634 = vmatpush2.bf16.msra.mxu0 %v531
  %635 = vmatprep.subr.bf16.mxu0 %v528
  %636 = vmatpush2.bf16.msra.mxu0 %v527
  %637 = vmatprep.subr.bf16.mxu0 %v524
  %638 = vmatpush2.bf16.msra.mxu0 %v523
  %639 = vmatprep.subr.bf16.mxu0 %v520
  %640 = vmatpush2.bf16.msra.mxu0 %v519
  %641 = vmatprep.subr.bf16.mxu0 %v516
  %642 = vmatpush2.bf16.msra.mxu0 %v515
  %643 = vmatprep.mubr.bf16.mxu0 %v226
  %644 = vmatmul.mubr.bf16.gmra.mxu0 %v225
  %v645 = vpop.f32.mrf.mxu0
  %v646 = vadd.f32 0.0, %v645
  %v647 = vpop.f32.mrf.mxu0
  %v648 = vadd.f32 0.0, %v647
  %v649 = vpop.f32.mrf.mxu0
  %v650 = vadd.f32 0.0, %v649
  %v651 = vpop.f32.mrf.mxu0
  %v652 = vadd.f32 0.0, %v651
  %653 = vdwg.mxu0
  %654 = vmatprep.subr.bf16.mxu0 %v514
  %655 = vmatpush1.bf16.msra.mxu0 %v513
  %656 = vmatprep.subr.bf16.mxu0 %v510
  %657 = vmatpush1.bf16.msra.mxu0 %v509
  %658 = vmatprep.subr.bf16.mxu0 %v506
  %659 = vmatpush1.bf16.msra.mxu0 %v505
  %660 = vmatprep.subr.bf16.mxu0 %v502
  %661 = vmatpush1.bf16.msra.mxu0 %v501
  %662 = vmatprep.subr.bf16.mxu0 %v498
  %663 = vmatpush1.bf16.msra.mxu0 %v497
  %664 = vmatprep.subr.bf16.mxu0 %v494
  %665 = vmatpush1.bf16.msra.mxu0 %v493
  %666 = vmatprep.subr.bf16.mxu0 %v490
  %667 = vmatpush1.bf16.msra.mxu0 %v489
  %668 = vmatprep.subr.bf16.mxu0 %v486
  %669 = vmatpush1.bf16.msra.mxu0 %v485
  %670 = vmatprep.subr.bf16.mxu0 %v546
  %671 = vmatpush2.bf16.msra.mxu0 %v545
  %672 = vmatprep.subr.bf16.mxu0 %v542
  %673 = vmatpush2.bf16.msra.mxu0 %v541
  %674 = vmatprep.subr.bf16.mxu0 %v538
  %675 = vmatpush2.bf16.msra.mxu0 %v537
  %676 = vmatprep.subr.bf16.mxu0 %v534
  %677 = vmatpush2.bf16.msra.mxu0 %v533
  %678 = vmatprep.subr.bf16.mxu0 %v530
  %679 = vmatpush2.bf16.msra.mxu0 %v529
  %680 = vmatprep.subr.bf16.mxu0 %v526
  %681 = vmatpush2.bf16.msra.mxu0 %v525
  %682 = vmatprep.subr.bf16.mxu0 %v522
  %683 = vmatpush2.bf16.msra.mxu0 %v521
  %684 = vmatprep.subr.bf16.mxu0 %v518
  %685 = vmatpush2.bf16.msra.mxu0 %v517
  %686 = vmatprep.mubr.bf16.mxu0 %v226
  %687 = vmatmul.mubr.bf16.gmra.mxu0 %v225
  %v688 = vpop.f32.mrf.mxu0
  %v689 = vadd.f32 0.0, %v688
  %v690 = vpop.f32.mrf.mxu0
  %v691 = vadd.f32 0.0, %v690
  %v692 = vpop.f32.mrf.mxu0
  %v693 = vadd.f32 0.0, %v692
  %v694 = vpop.f32.mrf.mxu0
  %v695 = vadd.f32 0.0, %v694
  %696 = vdwg.mxu0
  %v697 = vpack.c.bf16 %v650, %v646
  %v698 = vpack.c.bf16 %v652, %v648
  %v699 = vpack.c.bf16 %v693, %v689
  %v700 = vpack.c.bf16 %v695, %v691
  %v701 = vld [vmem:[%s4] sm:$0xf]
  %v704 = vunpack.c.l.s4 1966171168
  %v705 = vunpack.c.0.s8 %v704
  %v706 = vlaneseq
  %v707 = vshrl.u32 %v706, 7
  %v708 = vsub.s32 %v705, %v707
  %v709 = vrot.slane %v701, %v708
  %v710 = vcombine.high %v709, %v709
  %v712 = vunpack.c.l.s4 1966171168
  %v713 = vunpack.c.0.s8 %v712
  %v714 = vlaneseq
  %v715 = vshrl.u32 %v714, 7
  %v716 = vsub.s32 %v713, %v715
  %v717 = vrot.slane %v709, %v716
  %v719 = vunpack.c.l.s4 1966171168
  %v720 = vunpack.c.0.s8 %v719
  %v721 = vlaneseq
  %v722 = vshrl.u32 %v721, 7
  %v723 = vsub.s32 %v720, %v722
  %v724 = vrot.slane %v710, %v723
  %v725 = vcombine.high %v717, %v717
  %v726 = vcombine.high %v724, %v724
  %v728 = vpack.i.b16 %v717, %v717
  %v730 = vlaneseq
  %v731 = vshrl.u32 %v730, 7
  %v732 = vsub.s32 0, %v731
  %v733 = vrot.slane %v728, %v732
  %v735 = vpack.i.b16 %v724, %v724
  %v737 = vlaneseq
  %v738 = vshrl.u32 %v737, 7
  %v739 = vsub.s32 0, %v738
  %v740 = vrot.slane %v735, %v739
  %v742 = vpack.i.b16 %v725, %v725
  %v744 = vlaneseq
  %v745 = vshrl.u32 %v744, 7
  %v746 = vsub.s32 0, %v745
  %v747 = vrot.slane %v742, %v746
  %v749 = vpack.i.b16 %v726, %v726
  %v751 = vlaneseq
  %v752 = vshrl.u32 %v751, 7
  %v753 = vsub.s32 0, %v752
  %v754 = vrot.slane %v749, %v753
  %v755 = vadd.bf16 %v697, %v733
  %v756 = vadd.bf16 %v698, %v740
  %v757 = vadd.bf16 %v699, %v747
  %v758 = vadd.bf16 %v700, %v754
  %v759 = vmul.bf16 %v755, 1009007652
  %v760 = vmul.bf16 %v756, 1009007652
  %v761 = vmul.bf16 %v757, 1009007652
  %v762 = vmul.bf16 %v758, 1009007652
  %v763 = vmax.bf16 %v755, %v759
  %v764 = vmax.bf16 %v756, %v760
  %v765 = vmax.bf16 %v757, %v761
  %v766 = vmax.bf16 %v758, %v762
  %v767 = vld [vmem:[%s5] sm:$0xff]
  %v768 = vld [vmem:[%s5 + $0x8] sm:$0xff]
  %v769 = vld [vmem:[%s5 + $0x10] sm:$0xff]
  %v770 = vld [vmem:[%s5 + $0x18] sm:$0xff]
  %v771 = vld [vmem:[%s5 + $0x20] sm:$0xff]
  %v772 = vld [vmem:[%s5 + $0x28] sm:$0xff]
  %v773 = vld [vmem:[%s5 + $0x30] sm:$0xff]
  %v774 = vld [vmem:[%s5 + $0x38] sm:$0xff]
  %v775 = vld [vmem:[%s5 + $0x40] sm:$0xff]
  %v776 = vld [vmem:[%s5 + $0x48] sm:$0xff]
  %v777 = vld [vmem:[%s5 + $0x50] sm:$0xff]
  %v778 = vld [vmem:[%s5 + $0x58] sm:$0xff]
  %v779 = vld [vmem:[%s5 + $0x60] sm:$0xff]
  %v780 = vld [vmem:[%s5 + $0x68] sm:$0xff]
  %v781 = vld [vmem:[%s5 + $0x70] sm:$0xff]
  %v782 = vld [vmem:[%s5 + $0x78] sm:$0xff]
  %v783 = vld [vmem:[%s5 + $0x80] sm:$0xff]
  %v784 = vld [vmem:[%s5 + $0x88] sm:$0xff]
  %v785 = vld [vmem:[%s5 + $0x90] sm:$0xff]
  %v786 = vld [vmem:[%s5 + $0x98] sm:$0xff]
  %v787 = vld [vmem:[%s5 + $0xa0] sm:$0xff]
  %v788 = vld [vmem:[%s5 + $0xa8] sm:$0xff]
  %v789 = vld [vmem:[%s5 + $0xb0] sm:$0xff]
  %v790 = vld [vmem:[%s5 + $0xb8] sm:$0xff]
  %v791 = vld [vmem:[%s5 + $0xc0] sm:$0xff]
  %v792 = vld [vmem:[%s5 + $0xc8] sm:$0xff]
  %v793 = vld [vmem:[%s5 + $0xd0] sm:$0xff]
  %v794 = vld [vmem:[%s5 + $0xd8] sm:$0xff]
  %v795 = vld [vmem:[%s5 + $0xe0] sm:$0xff]
  %v796 = vld [vmem:[%s5 + $0xe8] sm:$0xff]
  %v797 = vld [vmem:[%s5 + $0xf0] sm:$0xff]
  %v798 = vld [vmem:[%s5 + $0xf8] sm:$0xff]
  %v799 = vld [vmem:[%s5 + $0x100] sm:$0xff]
  %v800 = vld [vmem:[%s5 + $0x108] sm:$0xff]
  %v801 = vld [vmem:[%s5 + $0x110] sm:$0xff]
  %v802 = vld [vmem:[%s5 + $0x118] sm:$0xff]
  %v803 = vld [vmem:[%s5 + $0x120] sm:$0xff]
  %v804 = vld [vmem:[%s5 + $0x128] sm:$0xff]
  %v805 = vld [vmem:[%s5 + $0x130] sm:$0xff]
  %v806 = vld [vmem:[%s5 + $0x138] sm:$0xff]
  %v807 = vld [vmem:[%s5 + $0x140] sm:$0xff]
  %v808 = vld [vmem:[%s5 + $0x148] sm:$0xff]
  %v809 = vld [vmem:[%s5 + $0x150] sm:$0xff]
  %v810 = vld [vmem:[%s5 + $0x158] sm:$0xff]
  %v811 = vld [vmem:[%s5 + $0x160] sm:$0xff]
  %v812 = vld [vmem:[%s5 + $0x168] sm:$0xff]
  %v813 = vld [vmem:[%s5 + $0x170] sm:$0xff]
  %v814 = vld [vmem:[%s5 + $0x178] sm:$0xff]
  %v815 = vld [vmem:[%s5 + $0x180] sm:$0xff]
  %v816 = vld [vmem:[%s5 + $0x188] sm:$0xff]
  %v817 = vld [vmem:[%s5 + $0x190] sm:$0xff]
  %v818 = vld [vmem:[%s5 + $0x198] sm:$0xff]
  %v819 = vld [vmem:[%s5 + $0x1a0] sm:$0xff]
  %v820 = vld [vmem:[%s5 + $0x1a8] sm:$0xff]
  %v821 = vld [vmem:[%s5 + $0x1b0] sm:$0xff]
  %v822 = vld [vmem:[%s5 + $0x1b8] sm:$0xff]
  %v823 = vld [vmem:[%s5 + $0x1c0] sm:$0xff]
  %v824 = vld [vmem:[%s5 + $0x1c8] sm:$0xff]
  %v825 = vld [vmem:[%s5 + $0x1d0] sm:$0xff]
  %v826 = vld [vmem:[%s5 + $0x1d8] sm:$0xff]
  %v827 = vld [vmem:[%s5 + $0x1e0] sm:$0xff]
  %v828 = vld [vmem:[%s5 + $0x1e8] sm:$0xff]
  %v829 = vld [vmem:[%s5 + $0x1f0] sm:$0xff]
  %v830 = vld [vmem:[%s5 + $0x1f8] sm:$0xff]
  %v831 = vld [vmem:[%s5 + $0x200] sm:$0xff]
  %v832 = vld [vmem:[%s5 + $0x208] sm:$0xff]
  %v833 = vld [vmem:[%s5 + $0x210] sm:$0xff]
  %v834 = vld [vmem:[%s5 + $0x218] sm:$0xff]
  %v835 = vld [vmem:[%s5 + $0x220] sm:$0xff]
  %v836 = vld [vmem:[%s5 + $0x228] sm:$0xff]
  %v837 = vld [vmem:[%s5 + $0x230] sm:$0xff]
  %v838 = vld [vmem:[%s5 + $0x238] sm:$0xff]
  %v839 = vld [vmem:[%s5 + $0x240] sm:$0xff]
  %v840 = vld [vmem:[%s5 + $0x248] sm:$0xff]
  %v841 = vld [vmem:[%s5 + $0x250] sm:$0xff]
  %v842 = vld [vmem:[%s5 + $0x258] sm:$0xff]
  %v843 = vld [vmem:[%s5 + $0x260] sm:$0xff]
  %v844 = vld [vmem:[%s5 + $0x268] sm:$0xff]
  %v845 = vld [vmem:[%s5 + $0x270] sm:$0xff]
  %v846 = vld [vmem:[%s5 + $0x278] sm:$0xff]
  %v847 = vld [vmem:[%s5 + $0x280] sm:$0xff]
  %v848 = vld [vmem:[%s5 + $0x288] sm:$0xff]
  %v849 = vld [vmem:[%s5 + $0x290] sm:$0xff]
  %v850 = vld [vmem:[%s5 + $0x298] sm:$0xff]
  %v851 = vld [vmem:[%s5 + $0x2a0] sm:$0xff]
  %v852 = vld [vmem:[%s5 + $0x2a8] sm:$0xff]
  %v853 = vld [vmem:[%s5 + $0x2b0] sm:$0xff]
  %v854 = vld [vmem:[%s5 + $0x2b8] sm:$0xff]
  %v855 = vld [vmem:[%s5 + $0x2c0] sm:$0xff]
  %v856 = vld [vmem:[%s5 + $0x2c8] sm:$0xff]
  %v857 = vld [vmem:[%s5 + $0x2d0] sm:$0xff]
  %v858 = vld [vmem:[%s5 + $0x2d8] sm:$0xff]
  %v859 = vld [vmem:[%s5 + $0x2e0] sm:$0xff]
  %v860 = vld [vmem:[%s5 + $0x2e8] sm:$0xff]
  %v861 = vld [vmem:[%s5 + $0x2f0] sm:$0xff]
  %v862 = vld [vmem:[%s5 + $0x2f8] sm:$0xff]
  %v863 = vld [vmem:[%s5 + $0x300] sm:$0xff]
  %v864 = vld [vmem:[%s5 + $0x308] sm:$0xff]
  %v865 = vld [vmem:[%s5 + $0x310] sm:$0xff]
  %v866 = vld [vmem:[%s5 + $0x318] sm:$0xff]
  %v867 = vld [vmem:[%s5 + $0x320] sm:$0xff]
  %v868 = vld [vmem:[%s5 + $0x328] sm:$0xff]
  %v869 = vld [vmem:[%s5 + $0x330] sm:$0xff]
  %v870 = vld [vmem:[%s5 + $0x338] sm:$0xff]
  %v871 = vld [vmem:[%s5 + $0x340] sm:$0xff]
  %v872 = vld [vmem:[%s5 + $0x348] sm:$0xff]
  %v873 = vld [vmem:[%s5 + $0x350] sm:$0xff]
  %v874 = vld [vmem:[%s5 + $0x358] sm:$0xff]
  %v875 = vld [vmem:[%s5 + $0x360] sm:$0xff]
  %v876 = vld [vmem:[%s5 + $0x368] sm:$0xff]
  %v877 = vld [vmem:[%s5 + $0x370] sm:$0xff]
  %v878 = vld [vmem:[%s5 + $0x378] sm:$0xff]
  %v879 = vld [vmem:[%s5 + $0x380] sm:$0xff]
  %v880 = vld [vmem:[%s5 + $0x388] sm:$0xff]
  %v881 = vld [vmem:[%s5 + $0x390] sm:$0xff]
  %v882 = vld [vmem:[%s5 + $0x398] sm:$0xff]
  %v883 = vld [vmem:[%s5 + $0x3a0] sm:$0xff]
  %v884 = vld [vmem:[%s5 + $0x3a8] sm:$0xff]
  %v885 = vld [vmem:[%s5 + $0x3b0] sm:$0xff]
  %v886 = vld [vmem:[%s5 + $0x3b8] sm:$0xff]
  %v887 = vld [vmem:[%s5 + $0x3c0] sm:$0xff]
  %v888 = vld [vmem:[%s5 + $0x3c8] sm:$0xff]
  %v889 = vld [vmem:[%s5 + $0x3d0] sm:$0xff]
  %v890 = vld [vmem:[%s5 + $0x3d8] sm:$0xff]
  %v891 = vld [vmem:[%s5 + $0x3e0] sm:$0xff]
  %v892 = vld [vmem:[%s5 + $0x3e8] sm:$0xff]
  %v893 = vld [vmem:[%s5 + $0x3f0] sm:$0xff]
  %v894 = vld [vmem:[%s5 + $0x3f8] sm:$0xff]
  %v895 = vld [vmem:[%s5 + $0x400] sm:$0xff]
  %v896 = vld [vmem:[%s5 + $0x408] sm:$0xff]
  %v897 = vld [vmem:[%s5 + $0x410] sm:$0xff]
  %v898 = vld [vmem:[%s5 + $0x418] sm:$0xff]
  %v899 = vld [vmem:[%s5 + $0x420] sm:$0xff]
  %v900 = vld [vmem:[%s5 + $0x428] sm:$0xff]
  %v901 = vld [vmem:[%s5 + $0x430] sm:$0xff]
  %v902 = vld [vmem:[%s5 + $0x438] sm:$0xff]
  %v903 = vld [vmem:[%s5 + $0x440] sm:$0xff]
  %v904 = vld [vmem:[%s5 + $0x448] sm:$0xff]
  %v905 = vld [vmem:[%s5 + $0x450] sm:$0xff]
  %v906 = vld [vmem:[%s5 + $0x458] sm:$0xff]
  %v907 = vld [vmem:[%s5 + $0x460] sm:$0xff]
  %v908 = vld [vmem:[%s5 + $0x468] sm:$0xff]
  %v909 = vld [vmem:[%s5 + $0x470] sm:$0xff]
  %v910 = vld [vmem:[%s5 + $0x478] sm:$0xff]
  %v911 = vld [vmem:[%s5 + $0x480] sm:$0xff]
  %v912 = vld [vmem:[%s5 + $0x488] sm:$0xff]
  %v913 = vld [vmem:[%s5 + $0x490] sm:$0xff]
  %v914 = vld [vmem:[%s5 + $0x498] sm:$0xff]
  %v915 = vld [vmem:[%s5 + $0x4a0] sm:$0xff]
  %v916 = vld [vmem:[%s5 + $0x4a8] sm:$0xff]
  %v917 = vld [vmem:[%s5 + $0x4b0] sm:$0xff]
  %v918 = vld [vmem:[%s5 + $0x4b8] sm:$0xff]
  %v919 = vld [vmem:[%s5 + $0x4c0] sm:$0xff]
  %v920 = vld [vmem:[%s5 + $0x4c8] sm:$0xff]
  %v921 = vld [vmem:[%s5 + $0x4d0] sm:$0xff]
  %v922 = vld [vmem:[%s5 + $0x4d8] sm:$0xff]
  %v923 = vld [vmem:[%s5 + $0x4e0] sm:$0xff]
  %v924 = vld [vmem:[%s5 + $0x4e8] sm:$0xff]
  %v925 = vld [vmem:[%s5 + $0x4f0] sm:$0xff]
  %v926 = vld [vmem:[%s5 + $0x4f8] sm:$0xff]
  %v927 = vld [vmem:[%s5 + $0x500] sm:$0xff]
  %v928 = vld [vmem:[%s5 + $0x508] sm:$0xff]
  %v929 = vld [vmem:[%s5 + $0x510] sm:$0xff]
  %v930 = vld [vmem:[%s5 + $0x518] sm:$0xff]
  %v931 = vld [vmem:[%s5 + $0x520] sm:$0xff]
  %v932 = vld [vmem:[%s5 + $0x528] sm:$0xff]
  %v933 = vld [vmem:[%s5 + $0x530] sm:$0xff]
  %v934 = vld [vmem:[%s5 + $0x538] sm:$0xff]
  %v935 = vld [vmem:[%s5 + $0x540] sm:$0xff]
  %v936 = vld [vmem:[%s5 + $0x548] sm:$0xff]
  %v937 = vld [vmem:[%s5 + $0x550] sm:$0xff]
  %v938 = vld [vmem:[%s5 + $0x558] sm:$0xff]
  %v939 = vld [vmem:[%s5 + $0x560] sm:$0xff]
  %v940 = vld [vmem:[%s5 + $0x568] sm:$0xff]
  %v941 = vld [vmem:[%s5 + $0x570] sm:$0xff]
  %v942 = vld [vmem:[%s5 + $0x578] sm:$0xff]
  %v943 = vld [vmem:[%s5 + $0x580] sm:$0xff]
  %v944 = vld [vmem:[%s5 + $0x588] sm:$0xff]
  %v945 = vld [vmem:[%s5 + $0x590] sm:$0xff]
  %v946 = vld [vmem:[%s5 + $0x598] sm:$0xff]
  %v947 = vld [vmem:[%s5 + $0x5a0] sm:$0xff]
  %v948 = vld [vmem:[%s5 + $0x5a8] sm:$0xff]
  %v949 = vld [vmem:[%s5 + $0x5b0] sm:$0xff]
  %v950 = vld [vmem:[%s5 + $0x5b8] sm:$0xff]
  %v951 = vld [vmem:[%s5 + $0x5c0] sm:$0xff]
  %v952 = vld [vmem:[%s5 + $0x5c8] sm:$0xff]
  %v953 = vld [vmem:[%s5 + $0x5d0] sm:$0xff]
  %v954 = vld [vmem:[%s5 + $0x5d8] sm:$0xff]
  %v955 = vld [vmem:[%s5 + $0x5e0] sm:$0xff]
  %v956 = vld [vmem:[%s5 + $0x5e8] sm:$0xff]
  %v957 = vld [vmem:[%s5 + $0x5f0] sm:$0xff]
  %v958 = vld [vmem:[%s5 + $0x5f8] sm:$0xff]
  %v959 = vld [vmem:[%s5 + $0x600] sm:$0xff]
  %v960 = vld [vmem:[%s5 + $0x608] sm:$0xff]
  %v961 = vld [vmem:[%s5 + $0x610] sm:$0xff]
  %v962 = vld [vmem:[%s5 + $0x618] sm:$0xff]
  %v963 = vld [vmem:[%s5 + $0x620] sm:$0xff]
  %v964 = vld [vmem:[%s5 + $0x628] sm:$0xff]
  %v965 = vld [vmem:[%s5 + $0x630] sm:$0xff]
  %v966 = vld [vmem:[%s5 + $0x638] sm:$0xff]
  %v967 = vld [vmem:[%s5 + $0x640] sm:$0xff]
  %v968 = vld [vmem:[%s5 + $0x648] sm:$0xff]
  %v969 = vld [vmem:[%s5 + $0x650] sm:$0xff]
  %v970 = vld [vmem:[%s5 + $0x658] sm:$0xff]
  %v971 = vld [vmem:[%s5 + $0x660] sm:$0xff]
  %v972 = vld [vmem:[%s5 + $0x668] sm:$0xff]
  %v973 = vld [vmem:[%s5 + $0x670] sm:$0xff]
  %v974 = vld [vmem:[%s5 + $0x678] sm:$0xff]
  %v975 = vld [vmem:[%s5 + $0x680] sm:$0xff]
  %v976 = vld [vmem:[%s5 + $0x688] sm:$0xff]
  %v977 = vld [vmem:[%s5 + $0x690] sm:$0xff]
  %v978 = vld [vmem:[%s5 + $0x698] sm:$0xff]
  %v979 = vld [vmem:[%s5 + $0x6a0] sm:$0xff]
  %v980 = vld [vmem:[%s5 + $0x6a8] sm:$0xff]
  %v981 = vld [vmem:[%s5 + $0x6b0] sm:$0xff]
  %v982 = vld [vmem:[%s5 + $0x6b8] sm:$0xff]
  %v983 = vld [vmem:[%s5 + $0x6c0] sm:$0xff]
  %v984 = vld [vmem:[%s5 + $0x6c8] sm:$0xff]
  %v985 = vld [vmem:[%s5 + $0x6d0] sm:$0xff]
  %v986 = vld [vmem:[%s5 + $0x6d8] sm:$0xff]
  %v987 = vld [vmem:[%s5 + $0x6e0] sm:$0xff]
  %v988 = vld [vmem:[%s5 + $0x6e8] sm:$0xff]
  %v989 = vld [vmem:[%s5 + $0x6f0] sm:$0xff]
  %v990 = vld [vmem:[%s5 + $0x6f8] sm:$0xff]
  %v991 = vld [vmem:[%s5 + $0x700] sm:$0xff]
  %v992 = vld [vmem:[%s5 + $0x708] sm:$0xff]
  %v993 = vld [vmem:[%s5 + $0x710] sm:$0xff]
  %v994 = vld [vmem:[%s5 + $0x718] sm:$0xff]
  %v995 = vld [vmem:[%s5 + $0x720] sm:$0xff]
  %v996 = vld [vmem:[%s5 + $0x728] sm:$0xff]
  %v997 = vld [vmem:[%s5 + $0x730] sm:$0xff]
  %v998 = vld [vmem:[%s5 + $0x738] sm:$0xff]
  %v999 = vld [vmem:[%s5 + $0x740] sm:$0xff]
  %v1000 = vld [vmem:[%s5 + $0x748] sm:$0xff]
  %v1001 = vld [vmem:[%s5 + $0x750] sm:$0xff]
  %v1002 = vld [vmem:[%s5 + $0x758] sm:$0xff]
  %v1003 = vld [vmem:[%s5 + $0x760] sm:$0xff]
  %v1004 = vld [vmem:[%s5 + $0x768] sm:$0xff]
  %v1005 = vld [vmem:[%s5 + $0x770] sm:$0xff]
  %v1006 = vld [vmem:[%s5 + $0x778] sm:$0xff]
  %v1007 = vld [vmem:[%s5 + $0x780] sm:$0xff]
  %v1008 = vld [vmem:[%s5 + $0x788] sm:$0xff]
  %v1009 = vld [vmem:[%s5 + $0x790] sm:$0xff]
  %v1010 = vld [vmem:[%s5 + $0x798] sm:$0xff]
  %v1011 = vld [vmem:[%s5 + $0x7a0] sm:$0xff]
  %v1012 = vld [vmem:[%s5 + $0x7a8] sm:$0xff]
  %v1013 = vld [vmem:[%s5 + $0x7b0] sm:$0xff]
  %v1014 = vld [vmem:[%s5 + $0x7b8] sm:$0xff]
  %v1015 = vld [vmem:[%s5 + $0x7c0] sm:$0xff]
  %v1016 = vld [vmem:[%s5 + $0x7c8] sm:$0xff]
  %v1017 = vld [vmem:[%s5 + $0x7d0] sm:$0xff]
  %v1018 = vld [vmem:[%s5 + $0x7d8] sm:$0xff]
  %v1019 = vld [vmem:[%s5 + $0x7e0] sm:$0xff]
  %v1020 = vld [vmem:[%s5 + $0x7e8] sm:$0xff]
  %v1021 = vld [vmem:[%s5 + $0x7f0] sm:$0xff]
  %v1022 = vld [vmem:[%s5 + $0x7f8] sm:$0xff]
  %v1279 = vunpack.c.l.b16 %v767
  %v1280 = vunpack.c.h.b16 %v767
  %v1281 = vunpack.c.l.b16 %v768
  %v1282 = vunpack.c.h.b16 %v768
  %v1283 = vunpack.c.l.b16 %v769
  %v1284 = vunpack.c.h.b16 %v769
  %v1285 = vunpack.c.l.b16 %v770
  %v1286 = vunpack.c.h.b16 %v770
  %v1287 = vunpack.c.l.b16 %v771
  %v1288 = vunpack.c.h.b16 %v771
  %v1289 = vunpack.c.l.b16 %v772
  %v1290 = vunpack.c.h.b16 %v772
  %v1291 = vunpack.c.l.b16 %v773
  %v1292 = vunpack.c.h.b16 %v773
  %v1293 = vunpack.c.l.b16 %v774
  %v1294 = vunpack.c.h.b16 %v774
  %v1295 = vunpack.c.l.b16 %v775
  %v1296 = vunpack.c.h.b16 %v775
  %v1297 = vunpack.c.l.b16 %v776
  %v1298 = vunpack.c.h.b16 %v776
  %v1299 = vunpack.c.l.b16 %v777
  %v1300 = vunpack.c.h.b16 %v777
  %v1301 = vunpack.c.l.b16 %v778
  %v1302 = vunpack.c.h.b16 %v778
  %v1303 = vunpack.c.l.b16 %v779
  %v1304 = vunpack.c.h.b16 %v779
  %v1305 = vunpack.c.l.b16 %v780
  %v1306 = vunpack.c.h.b16 %v780
  %v1307 = vunpack.c.l.b16 %v781
  %v1308 = vunpack.c.h.b16 %v781
  %v1309 = vunpack.c.l.b16 %v782
  %v1310 = vunpack.c.h.b16 %v782
  %v1311 = vunpack.c.l.b16 %v783
  %v1312 = vunpack.c.h.b16 %v783
  %v1313 = vunpack.c.l.b16 %v784
  %v1314 = vunpack.c.h.b16 %v784
  %v1315 = vunpack.c.l.b16 %v785
  %v1316 = vunpack.c.h.b16 %v785
  %v1317 = vunpack.c.l.b16 %v786
  %v1318 = vunpack.c.h.b16 %v786
  %v1319 = vunpack.c.l.b16 %v787
  %v1320 = vunpack.c.h.b16 %v787
  %v1321 = vunpack.c.l.b16 %v788
  %v1322 = vunpack.c.h.b16 %v788
  %v1323 = vunpack.c.l.b16 %v789
  %v1324 = vunpack.c.h.b16 %v789
  %v1325 = vunpack.c.l.b16 %v790
  %v1326 = vunpack.c.h.b16 %v790
  %v1327 = vunpack.c.l.b16 %v791
  %v1328 = vunpack.c.h.b16 %v791
  %v1329 = vunpack.c.l.b16 %v792
  %v1330 = vunpack.c.h.b16 %v792
  %v1331 = vunpack.c.l.b16 %v793
  %v1332 = vunpack.c.h.b16 %v793
  %v1333 = vunpack.c.l.b16 %v794
  %v1334 = vunpack.c.h.b16 %v794
  %v1335 = vunpack.c.l.b16 %v795
  %v1336 = vunpack.c.h.b16 %v795
  %v1337 = vunpack.c.l.b16 %v796
  %v1338 = vunpack.c.h.b16 %v796
  %v1339 = vunpack.c.l.b16 %v797
  %v1340 = vunpack.c.h.b16 %v797
  %v1341 = vunpack.c.l.b16 %v798
  %v1342 = vunpack.c.h.b16 %v798
  %v1343 = vunpack.c.l.b16 %v799
  %v1344 = vunpack.c.h.b16 %v799
  %v1345 = vunpack.c.l.b16 %v800
  %v1346 = vunpack.c.h.b16 %v800
  %v1347 = vunpack.c.l.b16 %v801
  %v1348 = vunpack.c.h.b16 %v801
  %v1349 = vunpack.c.l.b16 %v802
  %v1350 = vunpack.c.h.b16 %v802
  %v1351 = vunpack.c.l.b16 %v803
  %v1352 = vunpack.c.h.b16 %v803
  %v1353 = vunpack.c.l.b16 %v804
  %v1354 = vunpack.c.h.b16 %v804
  %v1355 = vunpack.c.l.b16 %v805
  %v1356 = vunpack.c.h.b16 %v805
  %v1357 = vunpack.c.l.b16 %v806
  %v1358 = vunpack.c.h.b16 %v806
  %v1359 = vunpack.c.l.b16 %v807
  %v1360 = vunpack.c.h.b16 %v807
  %v1361 = vunpack.c.l.b16 %v808
  %v1362 = vunpack.c.h.b16 %v808
  %v1363 = vunpack.c.l.b16 %v809
  %v1364 = vunpack.c.h.b16 %v809
  %v1365 = vunpack.c.l.b16 %v810
  %v1366 = vunpack.c.h.b16 %v810
  %v1367 = vunpack.c.l.b16 %v811
  %v1368 = vunpack.c.h.b16 %v811
  %v1369 = vunpack.c.l.b16 %v812
  %v1370 = vunpack.c.h.b16 %v812
  %v1371 = vunpack.c.l.b16 %v813
  %v1372 = vunpack.c.h.b16 %v813
  %v1373 = vunpack.c.l.b16 %v814
  %v1374 = vunpack.c.h.b16 %v814
  %v1375 = vunpack.c.l.b16 %v815
  %v1376 = vunpack.c.h.b16 %v815
  %v1377 = vunpack.c.l.b16 %v816
  %v1378 = vunpack.c.h.b16 %v816
  %v1379 = vunpack.c.l.b16 %v817
  %v1380 = vunpack.c.h.b16 %v817
  %v1381 = vunpack.c.l.b16 %v818
  %v1382 = vunpack.c.h.b16 %v818
  %v1383 = vunpack.c.l.b16 %v819
  %v1384 = vunpack.c.h.b16 %v819
  %v1385 = vunpack.c.l.b16 %v820
  %v1386 = vunpack.c.h.b16 %v820
  %v1387 = vunpack.c.l.b16 %v821
  %v1388 = vunpack.c.h.b16 %v821
  %v1389 = vunpack.c.l.b16 %v822
  %v1390 = vunpack.c.h.b16 %v822
  %v1391 = vunpack.c.l.b16 %v823
  %v1392 = vunpack.c.h.b16 %v823
  %v1393 = vunpack.c.l.b16 %v824
  %v1394 = vunpack.c.h.b16 %v824
  %v1395 = vunpack.c.l.b16 %v825
  %v1396 = vunpack.c.h.b16 %v825
  %v1397 = vunpack.c.l.b16 %v826
  %v1398 = vunpack.c.h.b16 %v826
  %v1399 = vunpack.c.l.b16 %v827
  %v1400 = vunpack.c.h.b16 %v827
  %v1401 = vunpack.c.l.b16 %v828
  %v1402 = vunpack.c.h.b16 %v828
  %v1403 = vunpack.c.l.b16 %v829
  %v1404 = vunpack.c.h.b16 %v829
  %v1405 = vunpack.c.l.b16 %v830
  %v1406 = vunpack.c.h.b16 %v830
  %v1407 = vunpack.c.l.b16 %v831
  %v1408 = vunpack.c.h.b16 %v831
  %v1409 = vunpack.c.l.b16 %v832
  %v1410 = vunpack.c.h.b16 %v832
  %v1411 = vunpack.c.l.b16 %v833
  %v1412 = vunpack.c.h.b16 %v833
  %v1413 = vunpack.c.l.b16 %v834
  %v1414 = vunpack.c.h.b16 %v834
  %v1415 = vunpack.c.l.b16 %v835
  %v1416 = vunpack.c.h.b16 %v835
  %v1417 = vunpack.c.l.b16 %v836
  %v1418 = vunpack.c.h.b16 %v836
  %v1419 = vunpack.c.l.b16 %v837
  %v1420 = vunpack.c.h.b16 %v837
  %v1421 = vunpack.c.l.b16 %v838
  %v1422 = vunpack.c.h.b16 %v838
  %v1423 = vunpack.c.l.b16 %v839
  %v1424 = vunpack.c.h.b16 %v839
  %v1425 = vunpack.c.l.b16 %v840
  %v1426 = vunpack.c.h.b16 %v840
  %v1427 = vunpack.c.l.b16 %v841
  %v1428 = vunpack.c.h.b16 %v841
  %v1429 = vunpack.c.l.b16 %v842
  %v1430 = vunpack.c.h.b16 %v842
  %v1431 = vunpack.c.l.b16 %v843
  %v1432 = vunpack.c.h.b16 %v843
  %v1433 = vunpack.c.l.b16 %v844
  %v1434 = vunpack.c.h.b16 %v844
  %v1435 = vunpack.c.l.b16 %v845
  %v1436 = vunpack.c.h.b16 %v845
  %v1437 = vunpack.c.l.b16 %v846
  %v1438 = vunpack.c.h.b16 %v846
  %v1439 = vunpack.c.l.b16 %v847
  %v1440 = vunpack.c.h.b16 %v847
  %v1441 = vunpack.c.l.b16 %v848
  %v1442 = vunpack.c.h.b16 %v848
  %v1443 = vunpack.c.l.b16 %v849
  %v1444 = vunpack.c.h.b16 %v849
  %v1445 = vunpack.c.l.b16 %v850
  %v1446 = vunpack.c.h.b16 %v850
  %v1447 = vunpack.c.l.b16 %v851
  %v1448 = vunpack.c.h.b16 %v851
  %v1449 = vunpack.c.l.b16 %v852
  %v1450 = vunpack.c.h.b16 %v852
  %v1451 = vunpack.c.l.b16 %v853
  %v1452 = vunpack.c.h.b16 %v853
  %v1453 = vunpack.c.l.b16 %v854
  %v1454 = vunpack.c.h.b16 %v854
  %v1455 = vunpack.c.l.b16 %v855
  %v1456 = vunpack.c.h.b16 %v855
  %v1457 = vunpack.c.l.b16 %v856
  %v1458 = vunpack.c.h.b16 %v856
  %v1459 = vunpack.c.l.b16 %v857
  %v1460 = vunpack.c.h.b16 %v857
  %v1461 = vunpack.c.l.b16 %v858
  %v1462 = vunpack.c.h.b16 %v858
  %v1463 = vunpack.c.l.b16 %v859
  %v1464 = vunpack.c.h.b16 %v859
  %v1465 = vunpack.c.l.b16 %v860
  %v1466 = vunpack.c.h.b16 %v860
  %v1467 = vunpack.c.l.b16 %v861
  %v1468 = vunpack.c.h.b16 %v861
  %v1469 = vunpack.c.l.b16 %v862
  %v1470 = vunpack.c.h.b16 %v862
  %v1471 = vunpack.c.l.b16 %v863
  %v1472 = vunpack.c.h.b16 %v863
  %v1473 = vunpack.c.l.b16 %v864
  %v1474 = vunpack.c.h.b16 %v864
  %v1475 = vunpack.c.l.b16 %v865
  %v1476 = vunpack.c.h.b16 %v865
  %v1477 = vunpack.c.l.b16 %v866
  %v1478 = vunpack.c.h.b16 %v866
  %v1479 = vunpack.c.l.b16 %v867
  %v1480 = vunpack.c.h.b16 %v867
  %v1481 = vunpack.c.l.b16 %v868
  %v1482 = vunpack.c.h.b16 %v868
  %v1483 = vunpack.c.l.b16 %v869
  %v1484 = vunpack.c.h.b16 %v869
  %v1485 = vunpack.c.l.b16 %v870
  %v1486 = vunpack.c.h.b16 %v870
  %v1487 = vunpack.c.l.b16 %v871
  %v1488 = vunpack.c.h.b16 %v871
  %v1489 = vunpack.c.l.b16 %v872
  %v1490 = vunpack.c.h.b16 %v872
  %v1491 = vunpack.c.l.b16 %v873
  %v1492 = vunpack.c.h.b16 %v873
  %v1493 = vunpack.c.l.b16 %v874
  %v1494 = vunpack.c.h.b16 %v874
  %v1495 = vunpack.c.l.b16 %v875
  %v1496 = vunpack.c.h.b16 %v875
  %v1497 = vunpack.c.l.b16 %v876
  %v1498 = vunpack.c.h.b16 %v876
  %v1499 = vunpack.c.l.b16 %v877
  %v1500 = vunpack.c.h.b16 %v877
  %v1501 = vunpack.c.l.b16 %v878
  %v1502 = vunpack.c.h.b16 %v878
  %v1503 = vunpack.c.l.b16 %v879
  %v1504 = vunpack.c.h.b16 %v879
  %v1505 = vunpack.c.l.b16 %v880
  %v1506 = vunpack.c.h.b16 %v880
  %v1507 = vunpack.c.l.b16 %v881
  %v1508 = vunpack.c.h.b16 %v881
  %v1509 = vunpack.c.l.b16 %v882
  %v1510 = vunpack.c.h.b16 %v882
  %v1511 = vunpack.c.l.b16 %v883
  %v1512 = vunpack.c.h.b16 %v883
  %v1513 = vunpack.c.l.b16 %v884
  %v1514 = vunpack.c.h.b16 %v884
  %v1515 = vunpack.c.l.b16 %v885
  %v1516 = vunpack.c.h.b16 %v885
  %v1517 = vunpack.c.l.b16 %v886
  %v1518 = vunpack.c.h.b16 %v886
  %v1519 = vunpack.c.l.b16 %v887
  %v1520 = vunpack.c.h.b16 %v887
  %v1521 = vunpack.c.l.b16 %v888
  %v1522 = vunpack.c.h.b16 %v888
  %v1523 = vunpack.c.l.b16 %v889
  %v1524 = vunpack.c.h.b16 %v889
  %v1525 = vunpack.c.l.b16 %v890
  %v1526 = vunpack.c.h.b16 %v890
  %v1527 = vunpack.c.l.b16 %v891
  %v1528 = vunpack.c.h.b16 %v891
  %v1529 = vunpack.c.l.b16 %v892
  %v1530 = vunpack.c.h.b16 %v892
  %v1531 = vunpack.c.l.b16 %v893
  %v1532 = vunpack.c.h.b16 %v893
  %v1533 = vunpack.c.l.b16 %v894
  %v1534 = vunpack.c.h.b16 %v894
  %v1535 = vunpack.c.l.b16 %v895
  %v1536 = vunpack.c.h.b16 %v895
  %v1537 = vunpack.c.l.b16 %v896
  %v1538 = vunpack.c.h.b16 %v896
  %v1539 = vunpack.c.l.b16 %v897
  %v1540 = vunpack.c.h.b16 %v897
  %v1541 = vunpack.c.l.b16 %v898
  %v1542 = vunpack.c.h.b16 %v898
  %v1543 = vunpack.c.l.b16 %v899
  %v1544 = vunpack.c.h.b16 %v899
  %v1545 = vunpack.c.l.b16 %v900
  %v1546 = vunpack.c.h.b16 %v900
  %v1547 = vunpack.c.l.b16 %v901
  %v1548 = vunpack.c.h.b16 %v901
  %v1549 = vunpack.c.l.b16 %v902
  %v1550 = vunpack.c.h.b16 %v902
  %v1551 = vunpack.c.l.b16 %v903
  %v1552 = vunpack.c.h.b16 %v903
  %v1553 = vunpack.c.l.b16 %v904
  %v1554 = vunpack.c.h.b16 %v904
  %v1555 = vunpack.c.l.b16 %v905
  %v1556 = vunpack.c.h.b16 %v905
  %v1557 = vunpack.c.l.b16 %v906
  %v1558 = vunpack.c.h.b16 %v906
  %v1559 = vunpack.c.l.b16 %v907
  %v1560 = vunpack.c.h.b16 %v907
  %v1561 = vunpack.c.l.b16 %v908
  %v1562 = vunpack.c.h.b16 %v908
  %v1563 = vunpack.c.l.b16 %v909
  %v1564 = vunpack.c.h.b16 %v909
  %v1565 = vunpack.c.l.b16 %v910
  %v1566 = vunpack.c.h.b16 %v910
  %v1567 = vunpack.c.l.b16 %v911
  %v1568 = vunpack.c.h.b16 %v911
  %v1569 = vunpack.c.l.b16 %v912
  %v1570 = vunpack.c.h.b16 %v912
  %v1571 = vunpack.c.l.b16 %v913
  %v1572 = vunpack.c.h.b16 %v913
  %v1573 = vunpack.c.l.b16 %v914
  %v1574 = vunpack.c.h.b16 %v914
  %v1575 = vunpack.c.l.b16 %v915
  %v1576 = vunpack.c.h.b16 %v915
  %v1577 = vunpack.c.l.b16 %v916
  %v1578 = vunpack.c.h.b16 %v916
  %v1579 = vunpack.c.l.b16 %v917
  %v1580 = vunpack.c.h.b16 %v917
  %v1581 = vunpack.c.l.b16 %v918
  %v1582 = vunpack.c.h.b16 %v918
  %v1583 = vunpack.c.l.b16 %v919
  %v1584 = vunpack.c.h.b16 %v919
  %v1585 = vunpack.c.l.b16 %v920
  %v1586 = vunpack.c.h.b16 %v920
  %v1587 = vunpack.c.l.b16 %v921
  %v1588 = vunpack.c.h.b16 %v921
  %v1589 = vunpack.c.l.b16 %v922
  %v1590 = vunpack.c.h.b16 %v922
  %v1591 = vunpack.c.l.b16 %v923
  %v1592 = vunpack.c.h.b16 %v923
  %v1593 = vunpack.c.l.b16 %v924
  %v1594 = vunpack.c.h.b16 %v924
  %v1595 = vunpack.c.l.b16 %v925
  %v1596 = vunpack.c.h.b16 %v925
  %v1597 = vunpack.c.l.b16 %v926
  %v1598 = vunpack.c.h.b16 %v926
  %v1599 = vunpack.c.l.b16 %v927
  %v1600 = vunpack.c.h.b16 %v927
  %v1601 = vunpack.c.l.b16 %v928
  %v1602 = vunpack.c.h.b16 %v928
  %v1603 = vunpack.c.l.b16 %v929
  %v1604 = vunpack.c.h.b16 %v929
  %v1605 = vunpack.c.l.b16 %v930
  %v1606 = vunpack.c.h.b16 %v930
  %v1607 = vunpack.c.l.b16 %v931
  %v1608 = vunpack.c.h.b16 %v931
  %v1609 = vunpack.c.l.b16 %v932
  %v1610 = vunpack.c.h.b16 %v932
  %v1611 = vunpack.c.l.b16 %v933
  %v1612 = vunpack.c.h.b16 %v933
  %v1613 = vunpack.c.l.b16 %v934
  %v1614 = vunpack.c.h.b16 %v934
  %v1615 = vunpack.c.l.b16 %v935
  %v1616 = vunpack.c.h.b16 %v935
  %v1617 = vunpack.c.l.b16 %v936
  %v1618 = vunpack.c.h.b16 %v936
  %v1619 = vunpack.c.l.b16 %v937
  %v1620 = vunpack.c.h.b16 %v937
  %v1621 = vunpack.c.l.b16 %v938
  %v1622 = vunpack.c.h.b16 %v938
  %v1623 = vunpack.c.l.b16 %v939
  %v1624 = vunpack.c.h.b16 %v939
  %v1625 = vunpack.c.l.b16 %v940
  %v1626 = vunpack.c.h.b16 %v940
  %v1627 = vunpack.c.l.b16 %v941
  %v1628 = vunpack.c.h.b16 %v941
  %v1629 = vunpack.c.l.b16 %v942
  %v1630 = vunpack.c.h.b16 %v942
  %v1631 = vunpack.c.l.b16 %v943
  %v1632 = vunpack.c.h.b16 %v943
  %v1633 = vunpack.c.l.b16 %v944
  %v1634 = vunpack.c.h.b16 %v944
  %v1635 = vunpack.c.l.b16 %v945
  %v1636 = vunpack.c.h.b16 %v945
  %v1637 = vunpack.c.l.b16 %v946
  %v1638 = vunpack.c.h.b16 %v946
  %v1639 = vunpack.c.l.b16 %v947
  %v1640 = vunpack.c.h.b16 %v947
  %v1641 = vunpack.c.l.b16 %v948
  %v1642 = vunpack.c.h.b16 %v948
  %v1643 = vunpack.c.l.b16 %v949
  %v1644 = vunpack.c.h.b16 %v949
  %v1645 = vunpack.c.l.b16 %v950
  %v1646 = vunpack.c.h.b16 %v950
  %v1647 = vunpack.c.l.b16 %v951
  %v1648 = vunpack.c.h.b16 %v951
  %v1649 = vunpack.c.l.b16 %v952
  %v1650 = vunpack.c.h.b16 %v952
  %v1651 = vunpack.c.l.b16 %v953
  %v1652 = vunpack.c.h.b16 %v953
  %v1653 = vunpack.c.l.b16 %v954
  %v1654 = vunpack.c.h.b16 %v954
  %v1655 = vunpack.c.l.b16 %v955
  %v1656 = vunpack.c.h.b16 %v955
  %v1657 = vunpack.c.l.b16 %v956
  %v1658 = vunpack.c.h.b16 %v956
  %v1659 = vunpack.c.l.b16 %v957
  %v1660 = vunpack.c.h.b16 %v957
  %v1661 = vunpack.c.l.b16 %v958
  %v1662 = vunpack.c.h.b16 %v958
  %v1663 = vunpack.c.l.b16 %v959
  %v1664 = vunpack.c.h.b16 %v959
  %v1665 = vunpack.c.l.b16 %v960
  %v1666 = vunpack.c.h.b16 %v960
  %v1667 = vunpack.c.l.b16 %v961
  %v1668 = vunpack.c.h.b16 %v961
  %v1669 = vunpack.c.l.b16 %v962
  %v1670 = vunpack.c.h.b16 %v962
  %v1671 = vunpack.c.l.b16 %v963
  %v1672 = vunpack.c.h.b16 %v963
  %v1673 = vunpack.c.l.b16 %v964
  %v1674 = vunpack.c.h.b16 %v964
  %v1675 = vunpack.c.l.b16 %v965
  %v1676 = vunpack.c.h.b16 %v965
  %v1677 = vunpack.c.l.b16 %v966
  %v1678 = vunpack.c.h.b16 %v966
  %v1679 = vunpack.c.l.b16 %v967
  %v1680 = vunpack.c.h.b16 %v967
  %v1681 = vunpack.c.l.b16 %v968
  %v1682 = vunpack.c.h.b16 %v968
  %v1683 = vunpack.c.l.b16 %v969
  %v1684 = vunpack.c.h.b16 %v969
  %v1685 = vunpack.c.l.b16 %v970
  %v1686 = vunpack.c.h.b16 %v970
  %v1687 = vunpack.c.l.b16 %v971
  %v1688 = vunpack.c.h.b16 %v971
  %v1689 = vunpack.c.l.b16 %v972
  %v1690 = vunpack.c.h.b16 %v972
  %v1691 = vunpack.c.l.b16 %v973
  %v1692 = vunpack.c.h.b16 %v973
  %v1693 = vunpack.c.l.b16 %v974
  %v1694 = vunpack.c.h.b16 %v974
  %v1695 = vunpack.c.l.b16 %v975
  %v1696 = vunpack.c.h.b16 %v975
  %v1697 = vunpack.c.l.b16 %v976
  %v1698 = vunpack.c.h.b16 %v976
  %v1699 = vunpack.c.l.b16 %v977
  %v1700 = vunpack.c.h.b16 %v977
  %v1701 = vunpack.c.l.b16 %v978
  %v1702 = vunpack.c.h.b16 %v978
  %v1703 = vunpack.c.l.b16 %v979
  %v1704 = vunpack.c.h.b16 %v979
  %v1705 = vunpack.c.l.b16 %v980
  %v1706 = vunpack.c.h.b16 %v980
  %v1707 = vunpack.c.l.b16 %v981
  %v1708 = vunpack.c.h.b16 %v981
  %v1709 = vunpack.c.l.b16 %v982
  %v1710 = vunpack.c.h.b16 %v982
  %v1711 = vunpack.c.l.b16 %v983
  %v1712 = vunpack.c.h.b16 %v983
  %v1713 = vunpack.c.l.b16 %v984
  %v1714 = vunpack.c.h.b16 %v984
  %v1715 = vunpack.c.l.b16 %v985
  %v1716 = vunpack.c.h.b16 %v985
  %v1717 = vunpack.c.l.b16 %v986
  %v1718 = vunpack.c.h.b16 %v986
  %v1719 = vunpack.c.l.b16 %v987
  %v1720 = vunpack.c.h.b16 %v987
  %v1721 = vunpack.c.l.b16 %v988
  %v1722 = vunpack.c.h.b16 %v988
  %v1723 = vunpack.c.l.b16 %v989
  %v1724 = vunpack.c.h.b16 %v989
  %v1725 = vunpack.c.l.b16 %v990
  %v1726 = vunpack.c.h.b16 %v990
  %v1727 = vunpack.c.l.b16 %v991
  %v1728 = vunpack.c.h.b16 %v991
  %v1729 = vunpack.c.l.b16 %v992
  %v1730 = vunpack.c.h.b16 %v992
  %v1731 = vunpack.c.l.b16 %v993
  %v1732 = vunpack.c.h.b16 %v993
  %v1733 = vunpack.c.l.b16 %v994
  %v1734 = vunpack.c.h.b16 %v994
  %v1735 = vunpack.c.l.b16 %v995
  %v1736 = vunpack.c.h.b16 %v995
  %v1737 = vunpack.c.l.b16 %v996
  %v1738 = vunpack.c.h.b16 %v996
  %v1739 = vunpack.c.l.b16 %v997
  %v1740 = vunpack.c.h.b16 %v997
  %v1741 = vunpack.c.l.b16 %v998
  %v1742 = vunpack.c.h.b16 %v998
  %v1743 = vunpack.c.l.b16 %v999
  %v1744 = vunpack.c.h.b16 %v999
  %v1745 = vunpack.c.l.b16 %v1000
  %v1746 = vunpack.c.h.b16 %v1000
  %v1747 = vunpack.c.l.b16 %v1001
  %v1748 = vunpack.c.h.b16 %v1001
  %v1749 = vunpack.c.l.b16 %v1002
  %v1750 = vunpack.c.h.b16 %v1002
  %v1751 = vunpack.c.l.b16 %v1003
  %v1752 = vunpack.c.h.b16 %v1003
  %v1753 = vunpack.c.l.b16 %v1004
  %v1754 = vunpack.c.h.b16 %v1004
  %v1755 = vunpack.c.l.b16 %v1005
  %v1756 = vunpack.c.h.b16 %v1005
  %v1757 = vunpack.c.l.b16 %v1006
  %v1758 = vunpack.c.h.b16 %v1006
  %v1759 = vunpack.c.l.b16 %v1007
  %v1760 = vunpack.c.h.b16 %v1007
  %v1761 = vunpack.c.l.b16 %v1008
  %v1762 = vunpack.c.h.b16 %v1008
  %v1763 = vunpack.c.l.b16 %v1009
  %v1764 = vunpack.c.h.b16 %v1009
  %v1765 = vunpack.c.l.b16 %v1010
  %v1766 = vunpack.c.h.b16 %v1010
  %v1767 = vunpack.c.l.b16 %v1011
  %v1768 = vunpack.c.h.b16 %v1011
  %v1769 = vunpack.c.l.b16 %v1012
  %v1770 = vunpack.c.h.b16 %v1012
  %v1771 = vunpack.c.l.b16 %v1013
  %v1772 = vunpack.c.h.b16 %v1013
  %v1773 = vunpack.c.l.b16 %v1014
  %v1774 = vunpack.c.h.b16 %v1014
  %v1775 = vunpack.c.l.b16 %v1015
  %v1776 = vunpack.c.h.b16 %v1015
  %v1777 = vunpack.c.l.b16 %v1016
  %v1778 = vunpack.c.h.b16 %v1016
  %v1779 = vunpack.c.l.b16 %v1017
  %v1780 = vunpack.c.h.b16 %v1017
  %v1781 = vunpack.c.l.b16 %v1018
  %v1782 = vunpack.c.h.b16 %v1018
  %v1783 = vunpack.c.l.b16 %v1019
  %v1784 = vunpack.c.h.b16 %v1019
  %v1785 = vunpack.c.l.b16 %v1020
  %v1786 = vunpack.c.h.b16 %v1020
  %v1787 = vunpack.c.l.b16 %v1021
  %v1788 = vunpack.c.h.b16 %v1021
  %v1789 = vunpack.c.l.b16 %v1022
  %v1790 = vunpack.c.h.b16 %v1022
  %v1791 = vpack.c.b16 %v1287, %v1279
  %v1792 = vpack.c.b16 %v1288, %v1280
  %v1793 = vpack.c.b16 %v1289, %v1281
  %v1794 = vpack.c.b16 %v1290, %v1282
  %v1795 = vpack.c.b16 %v1291, %v1283
  %v1796 = vpack.c.b16 %v1292, %v1284
  %v1797 = vpack.c.b16 %v1293, %v1285
  %v1798 = vpack.c.b16 %v1294, %v1286
  %v1799 = vpack.c.b16 %v1303, %v1295
  %v1800 = vpack.c.b16 %v1304, %v1296
  %v1801 = vpack.c.b16 %v1305, %v1297
  %v1802 = vpack.c.b16 %v1306, %v1298
  %v1803 = vpack.c.b16 %v1307, %v1299
  %v1804 = vpack.c.b16 %v1308, %v1300
  %v1805 = vpack.c.b16 %v1309, %v1301
  %v1806 = vpack.c.b16 %v1310, %v1302
  %v1807 = vpack.c.b16 %v1319, %v1311
  %v1808 = vpack.c.b16 %v1320, %v1312
  %v1809 = vpack.c.b16 %v1321, %v1313
  %v1810 = vpack.c.b16 %v1322, %v1314
  %v1811 = vpack.c.b16 %v1323, %v1315
  %v1812 = vpack.c.b16 %v1324, %v1316
  %v1813 = vpack.c.b16 %v1325, %v1317
  %v1814 = vpack.c.b16 %v1326, %v1318
  %v1815 = vpack.c.b16 %v1335, %v1327
  %v1816 = vpack.c.b16 %v1336, %v1328
  %v1817 = vpack.c.b16 %v1337, %v1329
  %v1818 = vpack.c.b16 %v1338, %v1330
  %v1819 = vpack.c.b16 %v1339, %v1331
  %v1820 = vpack.c.b16 %v1340, %v1332
  %v1821 = vpack.c.b16 %v1341, %v1333
  %v1822 = vpack.c.b16 %v1342, %v1334
  %v1823 = vpack.c.b16 %v1351, %v1343
  %v1824 = vpack.c.b16 %v1352, %v1344
  %v1825 = vpack.c.b16 %v1353, %v1345
  %v1826 = vpack.c.b16 %v1354, %v1346
  %v1827 = vpack.c.b16 %v1355, %v1347
  %v1828 = vpack.c.b16 %v1356, %v1348
  %v1829 = vpack.c.b16 %v1357, %v1349
  %v1830 = vpack.c.b16 %v1358, %v1350
  %v1831 = vpack.c.b16 %v1367, %v1359
  %v1832 = vpack.c.b16 %v1368, %v1360
  %v1833 = vpack.c.b16 %v1369, %v1361
  %v1834 = vpack.c.b16 %v1370, %v1362
  %v1835 = vpack.c.b16 %v1371, %v1363
  %v1836 = vpack.c.b16 %v1372, %v1364
  %v1837 = vpack.c.b16 %v1373, %v1365
  %v1838 = vpack.c.b16 %v1374, %v1366
  %v1839 = vpack.c.b16 %v1383, %v1375
  %v1840 = vpack.c.b16 %v1384, %v1376
  %v1841 = vpack.c.b16 %v1385, %v1377
  %v1842 = vpack.c.b16 %v1386, %v1378
  %v1843 = vpack.c.b16 %v1387, %v1379
  %v1844 = vpack.c.b16 %v1388, %v1380
  %v1845 = vpack.c.b16 %v1389, %v1381
  %v1846 = vpack.c.b16 %v1390, %v1382
  %v1847 = vpack.c.b16 %v1399, %v1391
  %v1848 = vpack.c.b16 %v1400, %v1392
  %v1849 = vpack.c.b16 %v1401, %v1393
  %v1850 = vpack.c.b16 %v1402, %v1394
  %v1851 = vpack.c.b16 %v1403, %v1395
  %v1852 = vpack.c.b16 %v1404, %v1396
  %v1853 = vpack.c.b16 %v1405, %v1397
  %v1854 = vpack.c.b16 %v1406, %v1398
  %v1855 = vpack.c.b16 %v1415, %v1407
  %v1856 = vpack.c.b16 %v1416, %v1408
  %v1857 = vpack.c.b16 %v1417, %v1409
  %v1858 = vpack.c.b16 %v1418, %v1410
  %v1859 = vpack.c.b16 %v1419, %v1411
  %v1860 = vpack.c.b16 %v1420, %v1412
  %v1861 = vpack.c.b16 %v1421, %v1413
  %v1862 = vpack.c.b16 %v1422, %v1414
  %v1863 = vpack.c.b16 %v1431, %v1423
  %v1864 = vpack.c.b16 %v1432, %v1424
  %v1865 = vpack.c.b16 %v1433, %v1425
  %v1866 = vpack.c.b16 %v1434, %v1426
  %v1867 = vpack.c.b16 %v1435, %v1427
  %v1868 = vpack.c.b16 %v1436, %v1428
  %v1869 = vpack.c.b16 %v1437, %v1429
  %v1870 = vpack.c.b16 %v1438, %v1430
  %v1871 = vpack.c.b16 %v1447, %v1439
  %v1872 = vpack.c.b16 %v1448, %v1440
  %v1873 = vpack.c.b16 %v1449, %v1441
  %v1874 = vpack.c.b16 %v1450, %v1442
  %v1875 = vpack.c.b16 %v1451, %v1443
  %v1876 = vpack.c.b16 %v1452, %v1444
  %v1877 = vpack.c.b16 %v1453, %v1445
  %v1878 = vpack.c.b16 %v1454, %v1446
  %v1879 = vpack.c.b16 %v1463, %v1455
  %v1880 = vpack.c.b16 %v1464, %v1456
  %v1881 = vpack.c.b16 %v1465, %v1457
  %v1882 = vpack.c.b16 %v1466, %v1458
  %v1883 = vpack.c.b16 %v1467, %v1459
  %v1884 = vpack.c.b16 %v1468, %v1460
  %v1885 = vpack.c.b16 %v1469, %v1461
  %v1886 = vpack.c.b16 %v1470, %v1462
  %v1887 = vpack.c.b16 %v1479, %v1471
  %v1888 = vpack.c.b16 %v1480, %v1472
  %v1889 = vpack.c.b16 %v1481, %v1473
  %v1890 = vpack.c.b16 %v1482, %v1474
  %v1891 = vpack.c.b16 %v1483, %v1475
  %v1892 = vpack.c.b16 %v1484, %v1476
  %v1893 = vpack.c.b16 %v1485, %v1477
  %v1894 = vpack.c.b16 %v1486, %v1478
  %v1895 = vpack.c.b16 %v1495, %v1487
  %v1896 = vpack.c.b16 %v1496, %v1488
  %v1897 = vpack.c.b16 %v1497, %v1489
  %v1898 = vpack.c.b16 %v1498, %v1490
  %v1899 = vpack.c.b16 %v1499, %v1491
  %v1900 = vpack.c.b16 %v1500, %v1492
  %v1901 = vpack.c.b16 %v1501, %v1493
  %v1902 = vpack.c.b16 %v1502, %v1494
  %v1903 = vpack.c.b16 %v1511, %v1503
  %v1904 = vpack.c.b16 %v1512, %v1504
  %v1905 = vpack.c.b16 %v1513, %v1505
  %v1906 = vpack.c.b16 %v1514, %v1506
  %v1907 = vpack.c.b16 %v1515, %v1507
  %v1908 = vpack.c.b16 %v1516, %v1508
  %v1909 = vpack.c.b16 %v1517, %v1509
  %v1910 = vpack.c.b16 %v1518, %v1510
  %v1911 = vpack.c.b16 %v1527, %v1519
  %v1912 = vpack.c.b16 %v1528, %v1520
  %v1913 = vpack.c.b16 %v1529, %v1521
  %v1914 = vpack.c.b16 %v1530, %v1522
  %v1915 = vpack.c.b16 %v1531, %v1523
  %v1916 = vpack.c.b16 %v1532, %v1524
  %v1917 = vpack.c.b16 %v1533, %v1525
  %v1918 = vpack.c.b16 %v1534, %v1526
  %v1919 = vpack.c.b16 %v1543, %v1535
  %v1920 = vpack.c.b16 %v1544, %v1536
  %v1921 = vpack.c.b16 %v1545, %v1537
  %v1922 = vpack.c.b16 %v1546, %v1538
  %v1923 = vpack.c.b16 %v1547, %v1539
  %v1924 = vpack.c.b16 %v1548, %v1540
  %v1925 = vpack.c.b16 %v1549, %v1541
  %v1926 = vpack.c.b16 %v1550, %v1542
  %v1927 = vpack.c.b16 %v1559, %v1551
  %v1928 = vpack.c.b16 %v1560, %v1552
  %v1929 = vpack.c.b16 %v1561, %v1553
  %v1930 = vpack.c.b16 %v1562, %v1554
  %v1931 = vpack.c.b16 %v1563, %v1555
  %v1932 = vpack.c.b16 %v1564, %v1556
  %v1933 = vpack.c.b16 %v1565, %v1557
  %v1934 = vpack.c.b16 %v1566, %v1558
  %v1935 = vpack.c.b16 %v1575, %v1567
  %v1936 = vpack.c.b16 %v1576, %v1568
  %v1937 = vpack.c.b16 %v1577, %v1569
  %v1938 = vpack.c.b16 %v1578, %v1570
  %v1939 = vpack.c.b16 %v1579, %v1571
  %v1940 = vpack.c.b16 %v1580, %v1572
  %v1941 = vpack.c.b16 %v1581, %v1573
  %v1942 = vpack.c.b16 %v1582, %v1574
  %v1943 = vpack.c.b16 %v1591, %v1583
  %v1944 = vpack.c.b16 %v1592, %v1584
  %v1945 = vpack.c.b16 %v1593, %v1585
  %v1946 = vpack.c.b16 %v1594, %v1586
  %v1947 = vpack.c.b16 %v1595, %v1587
  %v1948 = vpack.c.b16 %v1596, %v1588
  %v1949 = vpack.c.b16 %v1597, %v1589
  %v1950 = vpack.c.b16 %v1598, %v1590
  %v1951 = vpack.c.b16 %v1607, %v1599
  %v1952 = vpack.c.b16 %v1608, %v1600
  %v1953 = vpack.c.b16 %v1609, %v1601
  %v1954 = vpack.c.b16 %v1610, %v1602
  %v1955 = vpack.c.b16 %v1611, %v1603
  %v1956 = vpack.c.b16 %v1612, %v1604
  %v1957 = vpack.c.b16 %v1613, %v1605
  %v1958 = vpack.c.b16 %v1614, %v1606
  %v1959 = vpack.c.b16 %v1623, %v1615
  %v1960 = vpack.c.b16 %v1624, %v1616
  %v1961 = vpack.c.b16 %v1625, %v1617
  %v1962 = vpack.c.b16 %v1626, %v1618
  %v1963 = vpack.c.b16 %v1627, %v1619
  %v1964 = vpack.c.b16 %v1628, %v1620
  %v1965 = vpack.c.b16 %v1629, %v1621
  %v1966 = vpack.c.b16 %v1630, %v1622
  %v1967 = vpack.c.b16 %v1639, %v1631
  %v1968 = vpack.c.b16 %v1640, %v1632
  %v1969 = vpack.c.b16 %v1641, %v1633
  %v1970 = vpack.c.b16 %v1642, %v1634
  %v1971 = vpack.c.b16 %v1643, %v1635
  %v1972 = vpack.c.b16 %v1644, %v1636
  %v1973 = vpack.c.b16 %v1645, %v1637
  %v1974 = vpack.c.b16 %v1646, %v1638
  %v1975 = vpack.c.b16 %v1655, %v1647
  %v1976 = vpack.c.b16 %v1656, %v1648
  %v1977 = vpack.c.b16 %v1657, %v1649
  %v1978 = vpack.c.b16 %v1658, %v1650
  %v1979 = vpack.c.b16 %v1659, %v1651
  %v1980 = vpack.c.b16 %v1660, %v1652
  %v1981 = vpack.c.b16 %v1661, %v1653
  %v1982 = vpack.c.b16 %v1662, %v1654
  %v1983 = vpack.c.b16 %v1671, %v1663
  %v1984 = vpack.c.b16 %v1672, %v1664
  %v1985 = vpack.c.b16 %v1673, %v1665
  %v1986 = vpack.c.b16 %v1674, %v1666
  %v1987 = vpack.c.b16 %v1675, %v1667
  %v1988 = vpack.c.b16 %v1676, %v1668
  %v1989 = vpack.c.b16 %v1677, %v1669
  %v1990 = vpack.c.b16 %v1678, %v1670
  %v1991 = vpack.c.b16 %v1687, %v1679
  %v1992 = vpack.c.b16 %v1688, %v1680
  %v1993 = vpack.c.b16 %v1689, %v1681
  %v1994 = vpack.c.b16 %v1690, %v1682
  %v1995 = vpack.c.b16 %v1691, %v1683
  %v1996 = vpack.c.b16 %v1692, %v1684
  %v1997 = vpack.c.b16 %v1693, %v1685
  %v1998 = vpack.c.b16 %v1694, %v1686
  %v1999 = vpack.c.b16 %v1703, %v1695
  %v2000 = vpack.c.b16 %v1704, %v1696
  %v2001 = vpack.c.b16 %v1705, %v1697
  %v2002 = vpack.c.b16 %v1706, %v1698
  %v2003 = vpack.c.b16 %v1707, %v1699
  %v2004 = vpack.c.b16 %v1708, %v1700
  %v2005 = vpack.c.b16 %v1709, %v1701
  %v2006 = vpack.c.b16 %v1710, %v1702
  %v2007 = vpack.c.b16 %v1719, %v1711
  %v2008 = vpack.c.b16 %v1720, %v1712
  %v2009 = vpack.c.b16 %v1721, %v1713
  %v2010 = vpack.c.b16 %v1722, %v1714
  %v2011 = vpack.c.b16 %v1723, %v1715
  %v2012 = vpack.c.b16 %v1724, %v1716
  %v2013 = vpack.c.b16 %v1725, %v1717
  %v2014 = vpack.c.b16 %v1726, %v1718
  %v2015 = vpack.c.b16 %v1735, %v1727
  %v2016 = vpack.c.b16 %v1736, %v1728
  %v2017 = vpack.c.b16 %v1737, %v1729
  %v2018 = vpack.c.b16 %v1738, %v1730
  %v2019 = vpack.c.b16 %v1739, %v1731
  %v2020 = vpack.c.b16 %v1740, %v1732
  %v2021 = vpack.c.b16 %v1741, %v1733
  %v2022 = vpack.c.b16 %v1742, %v1734
  %v2023 = vpack.c.b16 %v1751, %v1743
  %v2024 = vpack.c.b16 %v1752, %v1744
  %v2025 = vpack.c.b16 %v1753, %v1745
  %v2026 = vpack.c.b16 %v1754, %v1746
  %v2027 = vpack.c.b16 %v1755, %v1747
  %v2028 = vpack.c.b16 %v1756, %v1748
  %v2029 = vpack.c.b16 %v1757, %v1749
  %v2030 = vpack.c.b16 %v1758, %v1750
  %v2031 = vpack.c.b16 %v1767, %v1759
  %v2032 = vpack.c.b16 %v1768, %v1760
  %v2033 = vpack.c.b16 %v1769, %v1761
  %v2034 = vpack.c.b16 %v1770, %v1762
  %v2035 = vpack.c.b16 %v1771, %v1763
  %v2036 = vpack.c.b16 %v1772, %v1764
  %v2037 = vpack.c.b16 %v1773, %v1765
  %v2038 = vpack.c.b16 %v1774, %v1766
  %v2039 = vpack.c.b16 %v1783, %v1775
  %v2040 = vpack.c.b16 %v1784, %v1776
  %v2041 = vpack.c.b16 %v1785, %v1777
  %v2042 = vpack.c.b16 %v1786, %v1778
  %v2043 = vpack.c.b16 %v1787, %v1779
  %v2044 = vpack.c.b16 %v1788, %v1780
  %v2045 = vpack.c.b16 %v1789, %v1781
  %v2046 = vpack.c.b16 %v1790, %v1782
  %2303 = vmatprep.subr.bf16.mxu0 %v1848
  %2304 = vmatpush1.bf16.msra.mxu0 %v1847
  %2305 = vmatprep.subr.bf16.mxu0 %v1840
  %2306 = vmatpush1.bf16.msra.mxu0 %v1839
  %2307 = vmatprep.subr.bf16.mxu0 %v1832
  %2308 = vmatpush1.bf16.msra.mxu0 %v1831
  %2309 = vmatprep.subr.bf16.mxu0 %v1824
  %2310 = vmatpush1.bf16.msra.mxu0 %v1823
  %2311 = vmatprep.subr.bf16.mxu0 %v1816
  %2312 = vmatpush1.bf16.msra.mxu0 %v1815
  %2313 = vmatprep.subr.bf16.mxu0 %v1808
  %2314 = vmatpush1.bf16.msra.mxu0 %v1807
  %2315 = vmatprep.subr.bf16.mxu0 %v1800
  %2316 = vmatpush1.bf16.msra.mxu0 %v1799
  %2317 = vmatprep.subr.bf16.mxu0 %v1792
  %2318 = vmatpush1.bf16.msra.mxu0 %v1791
  %2319 = vmatprep.subr.bf16.mxu0 %v1912
  %2320 = vmatpush2.bf16.msra.mxu0 %v1911
  %2321 = vmatprep.subr.bf16.mxu0 %v1904
  %2322 = vmatpush2.bf16.msra.mxu0 %v1903
  %2323 = vmatprep.subr.bf16.mxu0 %v1896
  %2324 = vmatpush2.bf16.msra.mxu0 %v1895
  %2325 = vmatprep.subr.bf16.mxu0 %v1888
  %2326 = vmatpush2.bf16.msra.mxu0 %v1887
  %2327 = vmatprep.subr.bf16.mxu0 %v1880
  %2328 = vmatpush2.bf16.msra.mxu0 %v1879
  %2329 = vmatprep.subr.bf16.mxu0 %v1872
  %2330 = vmatpush2.bf16.msra.mxu0 %v1871
  %2331 = vmatprep.subr.bf16.mxu0 %v1864
  %2332 = vmatpush2.bf16.msra.mxu0 %v1863
  %2333 = vmatprep.subr.bf16.mxu0 %v1856
  %2334 = vmatpush2.bf16.msra.mxu0 %v1855
  %2335 = vmatprep.mubr.bf16.mxu0 %v764
  %2336 = vmatmul.mubr.bf16.gmra.mxu0 %v763
  %v2337 = vpop.f32.mrf.mxu0
  %v2338 = vadd.f32 0.0, %v2337
  %v2339 = vpop.f32.mrf.mxu0
  %v2340 = vadd.f32 0.0, %v2339
  %v2341 = vpop.f32.mrf.mxu0
  %v2342 = vadd.f32 0.0, %v2341
  %v2343 = vpop.f32.mrf.mxu0
  %v2344 = vadd.f32 0.0, %v2343
  %2345 = vdwg.mxu0
  %2346 = vmatprep.subr.bf16.mxu0 %v1976
  %2347 = vmatpush1.bf16.msra.mxu0 %v1975
  %2348 = vmatprep.subr.bf16.mxu0 %v1968
  %2349 = vmatpush1.bf16.msra.mxu0 %v1967
  %2350 = vmatprep.subr.bf16.mxu0 %v1960
  %2351 = vmatpush1.bf16.msra.mxu0 %v1959
  %2352 = vmatprep.subr.bf16.mxu0 %v1952
  %2353 = vmatpush1.bf16.msra.mxu0 %v1951
  %2354 = vmatprep.subr.bf16.mxu0 %v1944
  %2355 = vmatpush1.bf16.msra.mxu0 %v1943
  %2356 = vmatprep.subr.bf16.mxu0 %v1936
  %2357 = vmatpush1.bf16.msra.mxu0 %v1935
  %2358 = vmatprep.subr.bf16.mxu0 %v1928
  %2359 = vmatpush1.bf16.msra.mxu0 %v1927
  %2360 = vmatprep.subr.bf16.mxu0 %v1920
  %2361 = vmatpush1.bf16.msra.mxu0 %v1919
  %2362 = vmatprep.subr.bf16.mxu0 %v2040
  %2363 = vmatpush2.bf16.msra.mxu0 %v2039
  %2364 = vmatprep.subr.bf16.mxu0 %v2032
  %2365 = vmatpush2.bf16.msra.mxu0 %v2031
  %2366 = vmatprep.subr.bf16.mxu0 %v2024
  %2367 = vmatpush2.bf16.msra.mxu0 %v2023
  %2368 = vmatprep.subr.bf16.mxu0 %v2016
  %2369 = vmatpush2.bf16.msra.mxu0 %v2015
  %2370 = vmatprep.subr.bf16.mxu0 %v2008
  %2371 = vmatpush2.bf16.msra.mxu0 %v2007
  %2372 = vmatprep.subr.bf16.mxu0 %v2000
  %2373 = vmatpush2.bf16.msra.mxu0 %v1999
  %2374 = vmatprep.subr.bf16.mxu0 %v1992
  %2375 = vmatpush2.bf16.msra.mxu0 %v1991
  %2376 = vmatprep.subr.bf16.mxu0 %v1984
  %2377 = vmatpush2.bf16.msra.mxu0 %v1983
  %2378 = vmatprep.mubr.bf16.mxu0 %v766
  %2379 = vmatmul.mubr.bf16.gmra.mxu0 %v765
  %v2380 = vpop.f32.mrf.mxu0
  %v2381 = vadd.f32 %v2338, %v2380
  %v2382 = vpop.f32.mrf.mxu0
  %v2383 = vadd.f32 %v2340, %v2382
  %v2384 = vpop.f32.mrf.mxu0
  %v2385 = vadd.f32 %v2342, %v2384
  %v2386 = vpop.f32.mrf.mxu0
  %v2387 = vadd.f32 %v2344, %v2386
  %2388 = vdwg.mxu0
  %2389 = vmatprep.subr.bf16.mxu0 %v1850
  %2390 = vmatpush1.bf16.msra.mxu0 %v1849
  %2391 = vmatprep.subr.bf16.mxu0 %v1842
  %2392 = vmatpush1.bf16.msra.mxu0 %v1841
  %2393 = vmatprep.subr.bf16.mxu0 %v1834
  %2394 = vmatpush1.bf16.msra.mxu0 %v1833
  %2395 = vmatprep.subr.bf16.mxu0 %v1826
  %2396 = vmatpush1.bf16.msra.mxu0 %v1825
  %2397 = vmatprep.subr.bf16.mxu0 %v1818
  %2398 = vmatpush1.bf16.msra.mxu0 %v1817
  %2399 = vmatprep.subr.bf16.mxu0 %v1810
  %2400 = vmatpush1.bf16.msra.mxu0 %v1809
  %2401 = vmatprep.subr.bf16.mxu0 %v1802
  %2402 = vmatpush1.bf16.msra.mxu0 %v1801
  %2403 = vmatprep.subr.bf16.mxu0 %v1794
  %2404 = vmatpush1.bf16.msra.mxu0 %v1793
  %2405 = vmatprep.subr.bf16.mxu0 %v1914
  %2406 = vmatpush2.bf16.msra.mxu0 %v1913
  %2407 = vmatprep.subr.bf16.mxu0 %v1906
  %2408 = vmatpush2.bf16.msra.mxu0 %v1905
  %2409 = vmatprep.subr.bf16.mxu0 %v1898
  %2410 = vmatpush2.bf16.msra.mxu0 %v1897
  %2411 = vmatprep.subr.bf16.mxu0 %v1890
  %2412 = vmatpush2.bf16.msra.mxu0 %v1889
  %2413 = vmatprep.subr.bf16.mxu0 %v1882
  %2414 = vmatpush2.bf16.msra.mxu0 %v1881
  %2415 = vmatprep.subr.bf16.mxu0 %v1874
  %2416 = vmatpush2.bf16.msra.mxu0 %v1873
  %2417 = vmatprep.subr.bf16.mxu0 %v1866
  %2418 = vmatpush2.bf16.msra.mxu0 %v1865
  %2419 = vmatprep.subr.bf16.mxu0 %v1858
  %2420 = vmatpush2.bf16.msra.mxu0 %v1857
  %2421 = vmatprep.mubr.bf16.mxu0 %v764
  %2422 = vmatmul.mubr.bf16.gmra.mxu0 %v763
  %v2423 = vpop.f32.mrf.mxu0
  %v2424 = vadd.f32 0.0, %v2423
  %v2425 = vpop.f32.mrf.mxu0
  %v2426 = vadd.f32 0.0, %v2425
  %v2427 = vpop.f32.mrf.mxu0
  %v2428 = vadd.f32 0.0, %v2427
  %v2429 = vpop.f32.mrf.mxu0
  %v2430 = vadd.f32 0.0, %v2429
  %2431 = vdwg.mxu0
  %2432 = vmatprep.subr.bf16.mxu0 %v1978
  %2433 = vmatpush1.bf16.msra.mxu0 %v1977
  %2434 = vmatprep.subr.bf16.mxu0 %v1970
  %2435 = vmatpush1.bf16.msra.mxu0 %v1969
  %2436 = vmatprep.subr.bf16.mxu0 %v1962
  %2437 = vmatpush1.bf16.msra.mxu0 %v1961
  %2438 = vmatprep.subr.bf16.mxu0 %v1954
  %2439 = vmatpush1.bf16.msra.mxu0 %v1953
  %2440 = vmatprep.subr.bf16.mxu0 %v1946
  %2441 = vmatpush1.bf16.msra.mxu0 %v1945
  %2442 = vmatprep.subr.bf16.mxu0 %v1938
  %2443 = vmatpush1.bf16.msra.mxu0 %v1937
  %2444 = vmatprep.subr.bf16.mxu0 %v1930
  %2445 = vmatpush1.bf16.msra.mxu0 %v1929
  %2446 = vmatprep.subr.bf16.mxu0 %v1922
  %2447 = vmatpush1.bf16.msra.mxu0 %v1921
  %2448 = vmatprep.subr.bf16.mxu0 %v2042
  %2449 = vmatpush2.bf16.msra.mxu0 %v2041
  %2450 = vmatprep.subr.bf16.mxu0 %v2034
  %2451 = vmatpush2.bf16.msra.mxu0 %v2033
  %2452 = vmatprep.subr.bf16.mxu0 %v2026
  %2453 = vmatpush2.bf16.msra.mxu0 %v2025
  %2454 = vmatprep.subr.bf16.mxu0 %v2018
  %2455 = vmatpush2.bf16.msra.mxu0 %v2017
  %2456 = vmatprep.subr.bf16.mxu0 %v2010
  %2457 = vmatpush2.bf16.msra.mxu0 %v2009
  %2458 = vmatprep.subr.bf16.mxu0 %v2002
  %2459 = vmatpush2.bf16.msra.mxu0 %v2001
  %2460 = vmatprep.subr.bf16.mxu0 %v1994
  %2461 = vmatpush2.bf16.msra.mxu0 %v1993
  %2462 = vmatprep.subr.bf16.mxu0 %v1986
  %2463 = vmatpush2.bf16.msra.mxu0 %v1985
  %2464 = vmatprep.mubr.bf16.mxu0 %v766
  %2465 = vmatmul.mubr.bf16.gmra.mxu0 %v765
  %v2466 = vpop.f32.mrf.mxu0
  %v2467 = vadd.f32 %v2424, %v2466
  %v2468 = vpop.f32.mrf.mxu0
  %v2469 = vadd.f32 %v2426, %v2468
  %v2470 = vpop.f32.mrf.mxu0
  %v2471 = vadd.f32 %v2428, %v2470
  %v2472 = vpop.f32.mrf.mxu0
  %v2473 = vadd.f32 %v2430, %v2472
  %2474 = vdwg.mxu0
  %2475 = vmatprep.subr.bf16.mxu0 %v1852
  %2476 = vmatpush1.bf16.msra.mxu0 %v1851
  %2477 = vmatprep.subr.bf16.mxu0 %v1844
  %2478 = vmatpush1.bf16.msra.mxu0 %v1843
  %2479 = vmatprep.subr.bf16.mxu0 %v1836
  %2480 = vmatpush1.bf16.msra.mxu0 %v1835
  %2481 = vmatprep.subr.bf16.mxu0 %v1828
  %2482 = vmatpush1.bf16.msra.mxu0 %v1827
  %2483 = vmatprep.subr.bf16.mxu0 %v1820
  %2484 = vmatpush1.bf16.msra.mxu0 %v1819
  %2485 = vmatprep.subr.bf16.mxu0 %v1812
  %2486 = vmatpush1.bf16.msra.mxu0 %v1811
  %2487 = vmatprep.subr.bf16.mxu0 %v1804
  %2488 = vmatpush1.bf16.msra.mxu0 %v1803
  %2489 = vmatprep.subr.bf16.mxu0 %v1796
  %2490 = vmatpush1.bf16.msra.mxu0 %v1795
  %2491 = vmatprep.subr.bf16.mxu0 %v1916
  %2492 = vmatpush2.bf16.msra.mxu0 %v1915
  %2493 = vmatprep.subr.bf16.mxu0 %v1908
  %2494 = vmatpush2.bf16.msra.mxu0 %v1907
  %2495 = vmatprep.subr.bf16.mxu0 %v1900
  %2496 = vmatpush2.bf16.msra.mxu0 %v1899
  %2497 = vmatprep.subr.bf16.mxu0 %v1892
  %2498 = vmatpush2.bf16.msra.mxu0 %v1891
  %2499 = vmatprep.subr.bf16.mxu0 %v1884
  %2500 = vmatpush2.bf16.msra.mxu0 %v1883
  %2501 = vmatprep.subr.bf16.mxu0 %v1876
  %2502 = vmatpush2.bf16.msra.mxu0 %v1875
  %2503 = vmatprep.subr.bf16.mxu0 %v1868
  %2504 = vmatpush2.bf16.msra.mxu0 %v1867
  %2505 = vmatprep.subr.bf16.mxu0 %v1860
  %2506 = vmatpush2.bf16.msra.mxu0 %v1859
  %2507 = vmatprep.mubr.bf16.mxu0 %v764
  %2508 = vmatmul.mubr.bf16.gmra.mxu0 %v763
  %v2509 = vpop.f32.mrf.mxu0
  %v2510 = vadd.f32 0.0, %v2509
  %v2511 = vpop.f32.mrf.mxu0
  %v2512 = vadd.f32 0.0, %v2511
  %v2513 = vpop.f32.mrf.mxu0
  %v2514 = vadd.f32 0.0, %v2513
  %v2515 = vpop.f32.mrf.mxu0
  %v2516 = vadd.f32 0.0, %v2515
  %2517 = vdwg.mxu0
  %2518 = vmatprep.subr.bf16.mxu0 %v1980
  %2519 = vmatpush1.bf16.msra.mxu0 %v1979
  %2520 = vmatprep.subr.bf16.mxu0 %v1972
  %2521 = vmatpush1.bf16.msra.mxu0 %v1971
  %2522 = vmatprep.subr.bf16.mxu0 %v1964
  %2523 = vmatpush1.bf16.msra.mxu0 %v1963
  %2524 = vmatprep.subr.bf16.mxu0 %v1956
  %2525 = vmatpush1.bf16.msra.mxu0 %v1955
  %2526 = vmatprep.subr.bf16.mxu0 %v1948
  %2527 = vmatpush1.bf16.msra.mxu0 %v1947
  %2528 = vmatprep.subr.bf16.mxu0 %v1940
  %2529 = vmatpush1.bf16.msra.mxu0 %v1939
  %2530 = vmatprep.subr.bf16.mxu0 %v1932
  %2531 = vmatpush1.bf16.msra.mxu0 %v1931
  %2532 = vmatprep.subr.bf16.mxu0 %v1924
  %2533 = vmatpush1.bf16.msra.mxu0 %v1923
  %2534 = vmatprep.subr.bf16.mxu0 %v2044
  %2535 = vmatpush2.bf16.msra.mxu0 %v2043
  %2536 = vmatprep.subr.bf16.mxu0 %v2036
  %2537 = vmatpush2.bf16.msra.mxu0 %v2035
  %2538 = vmatprep.subr.bf16.mxu0 %v2028
  %2539 = vmatpush2.bf16.msra.mxu0 %v2027
  %2540 = vmatprep.subr.bf16.mxu0 %v2020
  %2541 = vmatpush2.bf16.msra.mxu0 %v2019
  %2542 = vmatprep.subr.bf16.mxu0 %v2012
  %2543 = vmatpush2.bf16.msra.mxu0 %v2011
  %2544 = vmatprep.subr.bf16.mxu0 %v2004
  %2545 = vmatpush2.bf16.msra.mxu0 %v2003
  %2546 = vmatprep.subr.bf16.mxu0 %v1996
  %2547 = vmatpush2.bf16.msra.mxu0 %v1995
  %2548 = vmatprep.subr.bf16.mxu0 %v1988
  %2549 = vmatpush2.bf16.msra.mxu0 %v1987
  %2550 = vmatprep.mubr.bf16.mxu0 %v766
  %2551 = vmatmul.mubr.bf16.gmra.mxu0 %v765
  %v2552 = vpop.f32.mrf.mxu0
  %v2553 = vadd.f32 %v2510, %v2552
  %v2554 = vpop.f32.mrf.mxu0
  %v2555 = vadd.f32 %v2512, %v2554
  %v2556 = vpop.f32.mrf.mxu0
  %v2557 = vadd.f32 %v2514, %v2556
  %v2558 = vpop.f32.mrf.mxu0
  %v2559 = vadd.f32 %v2516, %v2558
  %2560 = vdwg.mxu0
  %2561 = vmatprep.subr.bf16.mxu0 %v1854
  %2562 = vmatpush1.bf16.msra.mxu0 %v1853
  %2563 = vmatprep.subr.bf16.mxu0 %v1846
  %2564 = vmatpush1.bf16.msra.mxu0 %v1845
  %2565 = vmatprep.subr.bf16.mxu0 %v1838
  %2566 = vmatpush1.bf16.msra.mxu0 %v1837
  %2567 = vmatprep.subr.bf16.mxu0 %v1830
  %2568 = vmatpush1.bf16.msra.mxu0 %v1829
  %2569 = vmatprep.subr.bf16.mxu0 %v1822
  %2570 = vmatpush1.bf16.msra.mxu0 %v1821
  %2571 = vmatprep.subr.bf16.mxu0 %v1814
  %2572 = vmatpush1.bf16.msra.mxu0 %v1813
  %2573 = vmatprep.subr.bf16.mxu0 %v1806
  %2574 = vmatpush1.bf16.msra.mxu0 %v1805
  %2575 = vmatprep.subr.bf16.mxu0 %v1798
  %2576 = vmatpush1.bf16.msra.mxu0 %v1797
  %2577 = vmatprep.subr.bf16.mxu0 %v1918
  %2578 = vmatpush2.bf16.msra.mxu0 %v1917
  %2579 = vmatprep.subr.bf16.mxu0 %v1910
  %2580 = vmatpush2.bf16.msra.mxu0 %v1909
  %2581 = vmatprep.subr.bf16.mxu0 %v1902
  %2582 = vmatpush2.bf16.msra.mxu0 %v1901
  %2583 = vmatprep.subr.bf16.mxu0 %v1894
  %2584 = vmatpush2.bf16.msra.mxu0 %v1893
  %2585 = vmatprep.subr.bf16.mxu0 %v1886
  %2586 = vmatpush2.bf16.msra.mxu0 %v1885
  %2587 = vmatprep.subr.bf16.mxu0 %v1878
  %2588 = vmatpush2.bf16.msra.mxu0 %v1877
  %2589 = vmatprep.subr.bf16.mxu0 %v1870
  %2590 = vmatpush2.bf16.msra.mxu0 %v1869
  %2591 = vmatprep.subr.bf16.mxu0 %v1862
  %2592 = vmatpush2.bf16.msra.mxu0 %v1861
  %2593 = vmatprep.mubr.bf16.mxu0 %v764
  %2594 = vmatmul.mubr.bf16.gmra.mxu0 %v763
  %v2595 = vpop.f32.mrf.mxu0
  %v2596 = vadd.f32 0.0, %v2595
  %v2597 = vpop.f32.mrf.mxu0
  %v2598 = vadd.f32 0.0, %v2597
  %v2599 = vpop.f32.mrf.mxu0
  %v2600 = vadd.f32 0.0, %v2599
  %v2601 = vpop.f32.mrf.mxu0
  %v2602 = vadd.f32 0.0, %v2601
  %2603 = vdwg.mxu0
  %2604 = vmatprep.subr.bf16.mxu0 %v1982
  %2605 = vmatpush1.bf16.msra.mxu0 %v1981
  %2606 = vmatprep.subr.bf16.mxu0 %v1974
  %2607 = vmatpush1.bf16.msra.mxu0 %v1973
  %2608 = vmatprep.subr.bf16.mxu0 %v1966
  %2609 = vmatpush1.bf16.msra.mxu0 %v1965
  %2610 = vmatprep.subr.bf16.mxu0 %v1958
  %2611 = vmatpush1.bf16.msra.mxu0 %v1957
  %2612 = vmatprep.subr.bf16.mxu0 %v1950
  %2613 = vmatpush1.bf16.msra.mxu0 %v1949
  %2614 = vmatprep.subr.bf16.mxu0 %v1942
  %2615 = vmatpush1.bf16.msra.mxu0 %v1941
  %2616 = vmatprep.subr.bf16.mxu0 %v1934
  %2617 = vmatpush1.bf16.msra.mxu0 %v1933
  %2618 = vmatprep.subr.bf16.mxu0 %v1926
  %2619 = vmatpush1.bf16.msra.mxu0 %v1925
  %2620 = vmatprep.subr.bf16.mxu0 %v2046
  %2621 = vmatpush2.bf16.msra.mxu0 %v2045
  %2622 = vmatprep.subr.bf16.mxu0 %v2038
  %2623 = vmatpush2.bf16.msra.mxu0 %v2037
  %2624 = vmatprep.subr.bf16.mxu0 %v2030
  %2625 = vmatpush2.bf16.msra.mxu0 %v2029
  %2626 = vmatprep.subr.bf16.mxu0 %v2022
  %2627 = vmatpush2.bf16.msra.mxu0 %v2021
  %2628 = vmatprep.subr.bf16.mxu0 %v2014
  %2629 = vmatpush2.bf16.msra.mxu0 %v2013
  %2630 = vmatprep.subr.bf16.mxu0 %v2006
  %2631 = vmatpush2.bf16.msra.mxu0 %v2005
  %2632 = vmatprep.subr.bf16.mxu0 %v1998
  %2633 = vmatpush2.bf16.msra.mxu0 %v1997
  %2634 = vmatprep.subr.bf16.mxu0 %v1990
  %2635 = vmatpush2.bf16.msra.mxu0 %v1989
  %2636 = vmatprep.mubr.bf16.mxu0 %v766
  %2637 = vmatmul.mubr.bf16.gmra.mxu0 %v765
  %v2638 = vpop.f32.mrf.mxu0
  %v2639 = vadd.f32 %v2596, %v2638
  %v2640 = vpop.f32.mrf.mxu0
  %v2641 = vadd.f32 %v2598, %v2640
  %v2642 = vpop.f32.mrf.mxu0
  %v2643 = vadd.f32 %v2600, %v2642
  %v2644 = vpop.f32.mrf.mxu0
  %v2645 = vadd.f32 %v2602, %v2644
  %2646 = vdwg.mxu0
  %v2647 = vpack.c.bf16 %v2385, %v2381
  %v2648 = vpack.c.bf16 %v2387, %v2383
  %v2649 = vpack.c.bf16 %v2471, %v2467
  %v2650 = vpack.c.bf16 %v2473, %v2469
  %v2651 = vpack.c.bf16 %v2557, %v2553
  %v2652 = vpack.c.bf16 %v2559, %v2555
  %v2653 = vpack.c.bf16 %v2643, %v2639
  %v2654 = vpack.c.bf16 %v2645, %v2641
  %v2655 = vld [vmem:[%s6] sm:$0xff]
  %v2657 = vcombine.high %v2655, %v2655
  %v2659 = vunpack.c.l.s4 1966171168
  %v2660 = vunpack.c.0.s8 %v2659
  %v2661 = vlaneseq
  %v2662 = vshrl.u32 %v2661, 7
  %v2663 = vsub.s32 %v2660, %v2662
  %v2664 = vrot.slane %v2655, %v2663
  %v2666 = vunpack.c.l.s4 1966171168
  %v2667 = vunpack.c.0.s8 %v2666
  %v2668 = vlaneseq
  %v2669 = vshrl.u32 %v2668, 7
  %v2670 = vsub.s32 %v2667, %v2669
  %v2671 = vrot.slane %v2657, %v2670
  %v2672 = vcombine.high %v2664, %v2664
  %v2673 = vcombine.high %v2671, %v2671
  %v2675 = vunpack.c.l.s4 1966171168
  %v2676 = vunpack.c.0.s8 %v2675
  %v2677 = vlaneseq
  %v2678 = vshrl.u32 %v2677, 7
  %v2679 = vsub.s32 %v2676, %v2678
  %v2680 = vrot.slane %v2664, %v2679
  %v2682 = vunpack.c.l.s4 1966171168
  %v2683 = vunpack.c.0.s8 %v2682
  %v2684 = vlaneseq
  %v2685 = vshrl.u32 %v2684, 7
  %v2686 = vsub.s32 %v2683, %v2685
  %v2687 = vrot.slane %v2671, %v2686
  %v2689 = vunpack.c.l.s4 1966171168
  %v2690 = vunpack.c.0.s8 %v2689
  %v2691 = vlaneseq
  %v2692 = vshrl.u32 %v2691, 7
  %v2693 = vsub.s32 %v2690, %v2692
  %v2694 = vrot.slane %v2672, %v2693
  %v2696 = vunpack.c.l.s4 1966171168
  %v2697 = vunpack.c.0.s8 %v2696
  %v2698 = vlaneseq
  %v2699 = vshrl.u32 %v2698, 7
  %v2700 = vsub.s32 %v2697, %v2699
  %v2701 = vrot.slane %v2673, %v2700
  %v2702 = vcombine.high %v2680, %v2680
  %v2703 = vcombine.high %v2687, %v2687
  %v2704 = vcombine.high %v2694, %v2694
  %v2705 = vcombine.high %v2701, %v2701
  %v2707 = vpack.i.b16 %v2680, %v2680
  %v2709 = vlaneseq
  %v2710 = vshrl.u32 %v2709, 7
  %v2711 = vsub.s32 0, %v2710
  %v2712 = vrot.slane %v2707, %v2711
  %v2714 = vpack.i.b16 %v2694, %v2694
  %v2716 = vlaneseq
  %v2717 = vshrl.u32 %v2716, 7
  %v2718 = vsub.s32 0, %v2717
  %v2719 = vrot.slane %v2714, %v2718
  %v2721 = vpack.i.b16 %v2702, %v2702
  %v2723 = vlaneseq
  %v2724 = vshrl.u32 %v2723, 7
  %v2725 = vsub.s32 0, %v2724
  %v2726 = vrot.slane %v2721, %v2725
  %v2728 = vpack.i.b16 %v2704, %v2704
  %v2730 = vlaneseq
  %v2731 = vshrl.u32 %v2730, 7
  %v2732 = vsub.s32 0, %v2731
  %v2733 = vrot.slane %v2728, %v2732
  %v2735 = vpack.i.b16 %v2687, %v2687
  %v2737 = vlaneseq
  %v2738 = vshrl.u32 %v2737, 7
  %v2739 = vsub.s32 0, %v2738
  %v2740 = vrot.slane %v2735, %v2739
  %v2742 = vpack.i.b16 %v2701, %v2701
  %v2744 = vlaneseq
  %v2745 = vshrl.u32 %v2744, 7
  %v2746 = vsub.s32 0, %v2745
  %v2747 = vrot.slane %v2742, %v2746
  %v2749 = vpack.i.b16 %v2703, %v2703
  %v2751 = vlaneseq
  %v2752 = vshrl.u32 %v2751, 7
  %v2753 = vsub.s32 0, %v2752
  %v2754 = vrot.slane %v2749, %v2753
  %v2756 = vpack.i.b16 %v2705, %v2705
  %v2758 = vlaneseq
  %v2759 = vshrl.u32 %v2758, 7
  %v2760 = vsub.s32 0, %v2759
  %v2761 = vrot.slane %v2756, %v2760
  %v2762 = vadd.bf16 %v2647, %v2712
  %v2763 = vadd.bf16 %v2648, %v2719
  %v2764 = vadd.bf16 %v2649, %v2726
  %v2765 = vadd.bf16 %v2650, %v2733
  %v2766 = vadd.bf16 %v2651, %v2740
  %v2767 = vadd.bf16 %v2652, %v2747
  %v2768 = vadd.bf16 %v2653, %v2754
  %v2769 = vadd.bf16 %v2654, %v2761
  %v2770 = vmul.bf16 %v2762, 1009007652
  %v2771 = vmul.bf16 %v2763, 1009007652
  %v2772 = vmul.bf16 %v2764, 1009007652
  %v2773 = vmul.bf16 %v2765, 1009007652
  %v2774 = vmul.bf16 %v2766, 1009007652
  %v2775 = vmul.bf16 %v2767, 1009007652
  %v2776 = vmul.bf16 %v2768, 1009007652
  %v2777 = vmul.bf16 %v2769, 1009007652
  %v2778 = vmax.bf16 %v2762, %v2770
  %v2779 = vmax.bf16 %v2763, %v2771
  %v2780 = vmax.bf16 %v2764, %v2772
  %v2781 = vmax.bf16 %v2765, %v2773
  %v2782 = vmax.bf16 %v2766, %v2774
  %v2783 = vmax.bf16 %v2767, %v2775
  %v2784 = vmax.bf16 %v2768, %v2776
  %v2785 = vmax.bf16 %v2769, %v2777
  %v2786 = vld [vmem:[%s7] sm:$0xff]
  %v2787 = vld [vmem:[%s7 + $0x8] sm:$0xff]
  %v2788 = vld [vmem:[%s7 + $0x10] sm:$0xff]
  %v2789 = vld [vmem:[%s7 + $0x18] sm:$0xf]
  %v2790 = vld [vmem:[%s7 + $0x1c] sm:$0xff]
  %v2791 = vld [vmem:[%s7 + $0x24] sm:$0xff]
  %v2792 = vld [vmem:[%s7 + $0x2c] sm:$0xff]
  %v2793 = vld [vmem:[%s7 + $0x34] sm:$0xf]
  %v2794 = vld [vmem:[%s7 + $0x38] sm:$0xff]
  %v2795 = vld [vmem:[%s7 + $0x40] sm:$0xff]
  %v2796 = vld [vmem:[%s7 + $0x48] sm:$0xff]
  %v2797 = vld [vmem:[%s7 + $0x50] sm:$0xf]
  %v2798 = vld [vmem:[%s7 + $0x54] sm:$0xff]
  %v2799 = vld [vmem:[%s7 + $0x5c] sm:$0xff]
  %v2800 = vld [vmem:[%s7 + $0x64] sm:$0xff]
  %v2801 = vld [vmem:[%s7 + $0x6c] sm:$0xf]
  %v2802 = vld [vmem:[%s7 + $0x70] sm:$0xff]
  %v2803 = vld [vmem:[%s7 + $0x78] sm:$0xff]
  %v2804 = vld [vmem:[%s7 + $0x80] sm:$0xff]
  %v2805 = vld [vmem:[%s7 + $0x88] sm:$0xf]
  %v2806 = vld [vmem:[%s7 + $0x8c] sm:$0xff]
  %v2807 = vld [vmem:[%s7 + $0x94] sm:$0xff]
  %v2808 = vld [vmem:[%s7 + $0x9c] sm:$0xff]
  %v2809 = vld [vmem:[%s7 + $0xa4] sm:$0xf]
  %v2810 = vld [vmem:[%s7 + $0xa8] sm:$0xff]
  %v2811 = vld [vmem:[%s7 + $0xb0] sm:$0xff]
  %v2812 = vld [vmem:[%s7 + $0xb8] sm:$0xff]
  %v2813 = vld [vmem:[%s7 + $0xc0] sm:$0xf]
  %v2814 = vld [vmem:[%s7 + $0xc4] sm:$0xff]
  %v2815 = vld [vmem:[%s7 + $0xcc] sm:$0xff]
  %v2816 = vld [vmem:[%s7 + $0xd4] sm:$0xff]
  %v2817 = vld [vmem:[%s7 + $0xdc] sm:$0xf]
  %v2818 = vld [vmem:[%s7 + $0xe0] sm:$0xff]
  %v2819 = vld [vmem:[%s7 + $0xe8] sm:$0xff]
  %v2820 = vld [vmem:[%s7 + $0xf0] sm:$0xff]
  %v2821 = vld [vmem:[%s7 + $0xf8] sm:$0xf]
  %v2822 = vld [vmem:[%s7 + $0xfc] sm:$0xff]
  %v2823 = vld [vmem:[%s7 + $0x104] sm:$0xff]
  %v2824 = vld [vmem:[%s7 + $0x10c] sm:$0xff]
  %v2825 = vld [vmem:[%s7 + $0x114] sm:$0xf]
  %v2826 = vld [vmem:[%s7 + $0x118] sm:$0xff]
  %v2827 = vld [vmem:[%s7 + $0x120] sm:$0xff]
  %v2828 = vld [vmem:[%s7 + $0x128] sm:$0xff]
  %v2829 = vld [vmem:[%s7 + $0x130] sm:$0xf]
  %v2830 = vld [vmem:[%s7 + $0x134] sm:$0xff]
  %v2831 = vld [vmem:[%s7 + $0x13c] sm:$0xff]
  %v2832 = vld [vmem:[%s7 + $0x144] sm:$0xff]
  %v2833 = vld [vmem:[%s7 + $0x14c] sm:$0xf]
  %v2834 = vld [vmem:[%s7 + $0x150] sm:$0xff]
  %v2835 = vld [vmem:[%s7 + $0x158] sm:$0xff]
  %v2836 = vld [vmem:[%s7 + $0x160] sm:$0xff]
  %v2837 = vld [vmem:[%s7 + $0x168] sm:$0xf]
  %v2838 = vld [vmem:[%s7 + $0x16c] sm:$0xff]
  %v2839 = vld [vmem:[%s7 + $0x174] sm:$0xff]
  %v2840 = vld [vmem:[%s7 + $0x17c] sm:$0xff]
  %v2841 = vld [vmem:[%s7 + $0x184] sm:$0xf]
  %v2842 = vld [vmem:[%s7 + $0x188] sm:$0xff]
  %v2843 = vld [vmem:[%s7 + $0x190] sm:$0xff]
  %v2844 = vld [vmem:[%s7 + $0x198] sm:$0xff]
  %v2845 = vld [vmem:[%s7 + $0x1a0] sm:$0xf]
  %v2846 = vld [vmem:[%s7 + $0x1a4] sm:$0xff]
  %v2847 = vld [vmem:[%s7 + $0x1ac] sm:$0xff]
  %v2848 = vld [vmem:[%s7 + $0x1b4] sm:$0xff]
  %v2849 = vld [vmem:[%s7 + $0x1bc] sm:$0xf]
  %v2850 = vld [vmem:[%s7 + $0x1c0] sm:$0xff]
  %v2851 = vld [vmem:[%s7 + $0x1c8] sm:$0xff]
  %v2852 = vld [vmem:[%s7 + $0x1d0] sm:$0xff]
  %v2853 = vld [vmem:[%s7 + $0x1d8] sm:$0xf]
  %v2854 = vld [vmem:[%s7 + $0x1dc] sm:$0xff]
  %v2855 = vld [vmem:[%s7 + $0x1e4] sm:$0xff]
  %v2856 = vld [vmem:[%s7 + $0x1ec] sm:$0xff]
  %v2857 = vld [vmem:[%s7 + $0x1f4] sm:$0xf]
  %v2858 = vld [vmem:[%s7 + $0x1f8] sm:$0xff]
  %v2859 = vld [vmem:[%s7 + $0x200] sm:$0xff]
  %v2860 = vld [vmem:[%s7 + $0x208] sm:$0xff]
  %v2861 = vld [vmem:[%s7 + $0x210] sm:$0xf]
  %v2862 = vld [vmem:[%s7 + $0x214] sm:$0xff]
  %v2863 = vld [vmem:[%s7 + $0x21c] sm:$0xff]
  %v2864 = vld [vmem:[%s7 + $0x224] sm:$0xff]
  %v2865 = vld [vmem:[%s7 + $0x22c] sm:$0xf]
  %v2866 = vld [vmem:[%s7 + $0x230] sm:$0xff]
  %v2867 = vld [vmem:[%s7 + $0x238] sm:$0xff]
  %v2868 = vld [vmem:[%s7 + $0x240] sm:$0xff]
  %v2869 = vld [vmem:[%s7 + $0x248] sm:$0xf]
  %v2870 = vld [vmem:[%s7 + $0x24c] sm:$0xff]
  %v2871 = vld [vmem:[%s7 + $0x254] sm:$0xff]
  %v2872 = vld [vmem:[%s7 + $0x25c] sm:$0xff]
  %v2873 = vld [vmem:[%s7 + $0x264] sm:$0xf]
  %v2874 = vld [vmem:[%s7 + $0x268] sm:$0xff]
  %v2875 = vld [vmem:[%s7 + $0x270] sm:$0xff]
  %v2876 = vld [vmem:[%s7 + $0x278] sm:$0xff]
  %v2877 = vld [vmem:[%s7 + $0x280] sm:$0xf]
  %v2878 = vld [vmem:[%s7 + $0x284] sm:$0xff]
  %v2879 = vld [vmem:[%s7 + $0x28c] sm:$0xff]
  %v2880 = vld [vmem:[%s7 + $0x294] sm:$0xff]
  %v2881 = vld [vmem:[%s7 + $0x29c] sm:$0xf]
  %v2882 = vld [vmem:[%s7 + $0x2a0] sm:$0xff]
  %v2883 = vld [vmem:[%s7 + $0x2a8] sm:$0xff]
  %v2884 = vld [vmem:[%s7 + $0x2b0] sm:$0xff]
  %v2885 = vld [vmem:[%s7 + $0x2b8] sm:$0xf]
  %v2886 = vld [vmem:[%s7 + $0x2bc] sm:$0xff]
  %v2887 = vld [vmem:[%s7 + $0x2c4] sm:$0xff]
  %v2888 = vld [vmem:[%s7 + $0x2cc] sm:$0xff]
  %v2889 = vld [vmem:[%s7 + $0x2d4] sm:$0xf]
  %v2890 = vld [vmem:[%s7 + $0x2d8] sm:$0xff]
  %v2891 = vld [vmem:[%s7 + $0x2e0] sm:$0xff]
  %v2892 = vld [vmem:[%s7 + $0x2e8] sm:$0xff]
  %v2893 = vld [vmem:[%s7 + $0x2f0] sm:$0xf]
  %v2894 = vld [vmem:[%s7 + $0x2f4] sm:$0xff]
  %v2895 = vld [vmem:[%s7 + $0x2fc] sm:$0xff]
  %v2896 = vld [vmem:[%s7 + $0x304] sm:$0xff]
  %v2897 = vld [vmem:[%s7 + $0x30c] sm:$0xf]
  %v2898 = vld [vmem:[%s7 + $0x310] sm:$0xff]
  %v2899 = vld [vmem:[%s7 + $0x318] sm:$0xff]
  %v2900 = vld [vmem:[%s7 + $0x320] sm:$0xff]
  %v2901 = vld [vmem:[%s7 + $0x328] sm:$0xf]
  %v2902 = vld [vmem:[%s7 + $0x32c] sm:$0xff]
  %v2903 = vld [vmem:[%s7 + $0x334] sm:$0xff]
  %v2904 = vld [vmem:[%s7 + $0x33c] sm:$0xff]
  %v2905 = vld [vmem:[%s7 + $0x344] sm:$0xf]
  %v2906 = vld [vmem:[%s7 + $0x348] sm:$0xff]
  %v2907 = vld [vmem:[%s7 + $0x350] sm:$0xff]
  %v2908 = vld [vmem:[%s7 + $0x358] sm:$0xff]
  %v2909 = vld [vmem:[%s7 + $0x360] sm:$0xf]
  %v2910 = vld [vmem:[%s7 + $0x364] sm:$0xff]
  %v2911 = vld [vmem:[%s7 + $0x36c] sm:$0xff]
  %v2912 = vld [vmem:[%s7 + $0x374] sm:$0xff]
  %v2913 = vld [vmem:[%s7 + $0x37c] sm:$0xf]
  %v2914 = vld [vmem:[%s7 + $0x380] sm:$0xff]
  %v2915 = vld [vmem:[%s7 + $0x388] sm:$0xff]
  %v2916 = vld [vmem:[%s7 + $0x390] sm:$0xff]
  %v2917 = vld [vmem:[%s7 + $0x398] sm:$0xf]
  %v2918 = vld [vmem:[%s7 + $0x39c] sm:$0xff]
  %v2919 = vld [vmem:[%s7 + $0x3a4] sm:$0xff]
  %v2920 = vld [vmem:[%s7 + $0x3ac] sm:$0xff]
  %v2921 = vld [vmem:[%s7 + $0x3b4] sm:$0xf]
  %v2922 = vld [vmem:[%s7 + $0x3b8] sm:$0xff]
  %v2923 = vld [vmem:[%s7 + $0x3c0] sm:$0xff]
  %v2924 = vld [vmem:[%s7 + $0x3c8] sm:$0xff]
  %v2925 = vld [vmem:[%s7 + $0x3d0] sm:$0xf]
  %v2926 = vld [vmem:[%s7 + $0x3d4] sm:$0xff]
  %v2927 = vld [vmem:[%s7 + $0x3dc] sm:$0xff]
  %v2928 = vld [vmem:[%s7 + $0x3e4] sm:$0xff]
  %v2929 = vld [vmem:[%s7 + $0x3ec] sm:$0xf]
  %v2930 = vld [vmem:[%s7 + $0x3f0] sm:$0xff]
  %v2931 = vld [vmem:[%s7 + $0x3f8] sm:$0xff]
  %v2932 = vld [vmem:[%s7 + $0x400] sm:$0xff]
  %v2933 = vld [vmem:[%s7 + $0x408] sm:$0xf]
  %v2934 = vld [vmem:[%s7 + $0x40c] sm:$0xff]
  %v2935 = vld [vmem:[%s7 + $0x414] sm:$0xff]
  %v2936 = vld [vmem:[%s7 + $0x41c] sm:$0xff]
  %v2937 = vld [vmem:[%s7 + $0x424] sm:$0xf]
  %v2938 = vld [vmem:[%s7 + $0x428] sm:$0xff]
  %v2939 = vld [vmem:[%s7 + $0x430] sm:$0xff]
  %v2940 = vld [vmem:[%s7 + $0x438] sm:$0xff]
  %v2941 = vld [vmem:[%s7 + $0x440] sm:$0xf]
  %v2942 = vld [vmem:[%s7 + $0x444] sm:$0xff]
  %v2943 = vld [vmem:[%s7 + $0x44c] sm:$0xff]
  %v2944 = vld [vmem:[%s7 + $0x454] sm:$0xff]
  %v2945 = vld [vmem:[%s7 + $0x45c] sm:$0xf]
  %v2946 = vld [vmem:[%s7 + $0x460] sm:$0xff]
  %v2947 = vld [vmem:[%s7 + $0x468] sm:$0xff]
  %v2948 = vld [vmem:[%s7 + $0x470] sm:$0xff]
  %v2949 = vld [vmem:[%s7 + $0x478] sm:$0xf]
  %v2950 = vld [vmem:[%s7 + $0x47c] sm:$0xff]
  %v2951 = vld [vmem:[%s7 + $0x484] sm:$0xff]
  %v2952 = vld [vmem:[%s7 + $0x48c] sm:$0xff]
  %v2953 = vld [vmem:[%s7 + $0x494] sm:$0xf]
  %v2954 = vld [vmem:[%s7 + $0x498] sm:$0xff]
  %v2955 = vld [vmem:[%s7 + $0x4a0] sm:$0xff]
  %v2956 = vld [vmem:[%s7 + $0x4a8] sm:$0xff]
  %v2957 = vld [vmem:[%s7 + $0x4b0] sm:$0xf]
  %v2958 = vld [vmem:[%s7 + $0x4b4] sm:$0xff]
  %v2959 = vld [vmem:[%s7 + $0x4bc] sm:$0xff]
  %v2960 = vld [vmem:[%s7 + $0x4c4] sm:$0xff]
  %v2961 = vld [vmem:[%s7 + $0x4cc] sm:$0xf]
  %v2962 = vld [vmem:[%s7 + $0x4d0] sm:$0xff]
  %v2963 = vld [vmem:[%s7 + $0x4d8] sm:$0xff]
  %v2964 = vld [vmem:[%s7 + $0x4e0] sm:$0xff]
  %v2965 = vld [vmem:[%s7 + $0x4e8] sm:$0xf]
  %v2966 = vld [vmem:[%s7 + $0x4ec] sm:$0xff]
  %v2967 = vld [vmem:[%s7 + $0x4f4] sm:$0xff]
  %v2968 = vld [vmem:[%s7 + $0x4fc] sm:$0xff]
  %v2969 = vld [vmem:[%s7 + $0x504] sm:$0xf]
  %v2970 = vld [vmem:[%s7 + $0x508] sm:$0xff]
  %v2971 = vld [vmem:[%s7 + $0x510] sm:$0xff]
  %v2972 = vld [vmem:[%s7 + $0x518] sm:$0xff]
  %v2973 = vld [vmem:[%s7 + $0x520] sm:$0xf]
  %v2974 = vld [vmem:[%s7 + $0x524] sm:$0xff]
  %v2975 = vld [vmem:[%s7 + $0x52c] sm:$0xff]
  %v2976 = vld [vmem:[%s7 + $0x534] sm:$0xff]
  %v2977 = vld [vmem:[%s7 + $0x53c] sm:$0xf]
  %v2978 = vld [vmem:[%s7 + $0x540] sm:$0xff]
  %v2979 = vld [vmem:[%s7 + $0x548] sm:$0xff]
  %v2980 = vld [vmem:[%s7 + $0x550] sm:$0xff]
  %v2981 = vld [vmem:[%s7 + $0x558] sm:$0xf]
  %v2982 = vld [vmem:[%s7 + $0x55c] sm:$0xff]
  %v2983 = vld [vmem:[%s7 + $0x564] sm:$0xff]
  %v2984 = vld [vmem:[%s7 + $0x56c] sm:$0xff]
  %v2985 = vld [vmem:[%s7 + $0x574] sm:$0xf]
  %v2986 = vld [vmem:[%s7 + $0x578] sm:$0xff]
  %v2987 = vld [vmem:[%s7 + $0x580] sm:$0xff]
  %v2988 = vld [vmem:[%s7 + $0x588] sm:$0xff]
  %v2989 = vld [vmem:[%s7 + $0x590] sm:$0xf]
  %v2990 = vld [vmem:[%s7 + $0x594] sm:$0xff]
  %v2991 = vld [vmem:[%s7 + $0x59c] sm:$0xff]
  %v2992 = vld [vmem:[%s7 + $0x5a4] sm:$0xff]
  %v2993 = vld [vmem:[%s7 + $0x5ac] sm:$0xf]
  %v2994 = vld [vmem:[%s7 + $0x5b0] sm:$0xff]
  %v2995 = vld [vmem:[%s7 + $0x5b8] sm:$0xff]
  %v2996 = vld [vmem:[%s7 + $0x5c0] sm:$0xff]
  %v2997 = vld [vmem:[%s7 + $0x5c8] sm:$0xf]
  %v2998 = vld [vmem:[%s7 + $0x5cc] sm:$0xff]
  %v2999 = vld [vmem:[%s7 + $0x5d4] sm:$0xff]
  %v3000 = vld [vmem:[%s7 + $0x5dc] sm:$0xff]
  %v3001 = vld [vmem:[%s7 + $0x5e4] sm:$0xf]
  %v3002 = vld [vmem:[%s7 + $0x5e8] sm:$0xff]
  %v3003 = vld [vmem:[%s7 + $0x5f0] sm:$0xff]
  %v3004 = vld [vmem:[%s7 + $0x5f8] sm:$0xff]
  %v3005 = vld [vmem:[%s7 + $0x600] sm:$0xf]
  %v3006 = vld [vmem:[%s7 + $0x604] sm:$0xff]
  %v3007 = vld [vmem:[%s7 + $0x60c] sm:$0xff]
  %v3008 = vld [vmem:[%s7 + $0x614] sm:$0xff]
  %v3009 = vld [vmem:[%s7 + $0x61c] sm:$0xf]
  %v3010 = vld [vmem:[%s7 + $0x620] sm:$0xff]
  %v3011 = vld [vmem:[%s7 + $0x628] sm:$0xff]
  %v3012 = vld [vmem:[%s7 + $0x630] sm:$0xff]
  %v3013 = vld [vmem:[%s7 + $0x638] sm:$0xf]
  %v3014 = vld [vmem:[%s7 + $0x63c] sm:$0xff]
  %v3015 = vld [vmem:[%s7 + $0x644] sm:$0xff]
  %v3016 = vld [vmem:[%s7 + $0x64c] sm:$0xff]
  %v3017 = vld [vmem:[%s7 + $0x654] sm:$0xf]
  %v3018 = vld [vmem:[%s7 + $0x658] sm:$0xff]
  %v3019 = vld [vmem:[%s7 + $0x660] sm:$0xff]
  %v3020 = vld [vmem:[%s7 + $0x668] sm:$0xff]
  %v3021 = vld [vmem:[%s7 + $0x670] sm:$0xf]
  %v3022 = vld [vmem:[%s7 + $0x674] sm:$0xff]
  %v3023 = vld [vmem:[%s7 + $0x67c] sm:$0xff]
  %v3024 = vld [vmem:[%s7 + $0x684] sm:$0xff]
  %v3025 = vld [vmem:[%s7 + $0x68c] sm:$0xf]
  %v3026 = vld [vmem:[%s7 + $0x690] sm:$0xff]
  %v3027 = vld [vmem:[%s7 + $0x698] sm:$0xff]
  %v3028 = vld [vmem:[%s7 + $0x6a0] sm:$0xff]
  %v3029 = vld [vmem:[%s7 + $0x6a8] sm:$0xf]
  %v3030 = vld [vmem:[%s7 + $0x6ac] sm:$0xff]
  %v3031 = vld [vmem:[%s7 + $0x6b4] sm:$0xff]
  %v3032 = vld [vmem:[%s7 + $0x6bc] sm:$0xff]
  %v3033 = vld [vmem:[%s7 + $0x6c4] sm:$0xf]
  %v3034 = vld [vmem:[%s7 + $0x6c8] sm:$0xff]
  %v3035 = vld [vmem:[%s7 + $0x6d0] sm:$0xff]
  %v3036 = vld [vmem:[%s7 + $0x6d8] sm:$0xff]
  %v3037 = vld [vmem:[%s7 + $0x6e0] sm:$0xf]
  %v3038 = vld [vmem:[%s7 + $0x6e4] sm:$0xff]
  %v3039 = vld [vmem:[%s7 + $0x6ec] sm:$0xff]
  %v3040 = vld [vmem:[%s7 + $0x6f4] sm:$0xff]
  %v3041 = vld [vmem:[%s7 + $0x6fc] sm:$0xf]
  %v3042 = vld [vmem:[%s7 + $0x700] sm:$0xff]
  %v3043 = vld [vmem:[%s7 + $0x708] sm:$0xff]
  %v3044 = vld [vmem:[%s7 + $0x710] sm:$0xff]
  %v3045 = vld [vmem:[%s7 + $0x718] sm:$0xf]
  %v3046 = vld [vmem:[%s7 + $0x71c] sm:$0xff]
  %v3047 = vld [vmem:[%s7 + $0x724] sm:$0xff]
  %v3048 = vld [vmem:[%s7 + $0x72c] sm:$0xff]
  %v3049 = vld [vmem:[%s7 + $0x734] sm:$0xf]
  %v3050 = vld [vmem:[%s7 + $0x738] sm:$0xff]
  %v3051 = vld [vmem:[%s7 + $0x740] sm:$0xff]
  %v3052 = vld [vmem:[%s7 + $0x748] sm:$0xff]
  %v3053 = vld [vmem:[%s7 + $0x750] sm:$0xf]
  %v3054 = vld [vmem:[%s7 + $0x754] sm:$0xff]
  %v3055 = vld [vmem:[%s7 + $0x75c] sm:$0xff]
  %v3056 = vld [vmem:[%s7 + $0x764] sm:$0xff]
  %v3057 = vld [vmem:[%s7 + $0x76c] sm:$0xf]
  %v3058 = vld [vmem:[%s7 + $0x770] sm:$0xff]
  %v3059 = vld [vmem:[%s7 + $0x778] sm:$0xff]
  %v3060 = vld [vmem:[%s7 + $0x780] sm:$0xff]
  %v3061 = vld [vmem:[%s7 + $0x788] sm:$0xf]
  %v3062 = vld [vmem:[%s7 + $0x78c] sm:$0xff]
  %v3063 = vld [vmem:[%s7 + $0x794] sm:$0xff]
  %v3064 = vld [vmem:[%s7 + $0x79c] sm:$0xff]
  %v3065 = vld [vmem:[%s7 + $0x7a4] sm:$0xf]
  %v3066 = vld [vmem:[%s7 + $0x7a8] sm:$0xff]
  %v3067 = vld [vmem:[%s7 + $0x7b0] sm:$0xff]
  %v3068 = vld [vmem:[%s7 + $0x7b8] sm:$0xff]
  %v3069 = vld [vmem:[%s7 + $0x7c0] sm:$0xf]
  %v3070 = vld [vmem:[%s7 + $0x7c4] sm:$0xff]
  %v3071 = vld [vmem:[%s7 + $0x7cc] sm:$0xff]
  %v3072 = vld [vmem:[%s7 + $0x7d4] sm:$0xff]
  %v3073 = vld [vmem:[%s7 + $0x7dc] sm:$0xf]
  %v3074 = vld [vmem:[%s7 + $0x7e0] sm:$0xff]
  %v3075 = vld [vmem:[%s7 + $0x7e8] sm:$0xff]
  %v3076 = vld [vmem:[%s7 + $0x7f0] sm:$0xff]
  %v3077 = vld [vmem:[%s7 + $0x7f8] sm:$0xf]
  %v3078 = vld [vmem:[%s7 + $0x7fc] sm:$0xff]
  %v3079 = vld [vmem:[%s7 + $0x804] sm:$0xff]
  %v3080 = vld [vmem:[%s7 + $0x80c] sm:$0xff]
  %v3081 = vld [vmem:[%s7 + $0x814] sm:$0xf]
  %v3082 = vld [vmem:[%s7 + $0x818] sm:$0xff]
  %v3083 = vld [vmem:[%s7 + $0x820] sm:$0xff]
  %v3084 = vld [vmem:[%s7 + $0x828] sm:$0xff]
  %v3085 = vld [vmem:[%s7 + $0x830] sm:$0xf]
  %v3086 = vld [vmem:[%s7 + $0x834] sm:$0xff]
  %v3087 = vld [vmem:[%s7 + $0x83c] sm:$0xff]
  %v3088 = vld [vmem:[%s7 + $0x844] sm:$0xff]
  %v3089 = vld [vmem:[%s7 + $0x84c] sm:$0xf]
  %v3090 = vld [vmem:[%s7 + $0x850] sm:$0xff]
  %v3091 = vld [vmem:[%s7 + $0x858] sm:$0xff]
  %v3092 = vld [vmem:[%s7 + $0x860] sm:$0xff]
  %v3093 = vld [vmem:[%s7 + $0x868] sm:$0xf]
  %v3094 = vld [vmem:[%s7 + $0x86c] sm:$0xff]
  %v3095 = vld [vmem:[%s7 + $0x874] sm:$0xff]
  %v3096 = vld [vmem:[%s7 + $0x87c] sm:$0xff]
  %v3097 = vld [vmem:[%s7 + $0x884] sm:$0xf]
  %v3098 = vld [vmem:[%s7 + $0x888] sm:$0xff]
  %v3099 = vld [vmem:[%s7 + $0x890] sm:$0xff]
  %v3100 = vld [vmem:[%s7 + $0x898] sm:$0xff]
  %v3101 = vld [vmem:[%s7 + $0x8a0] sm:$0xf]
  %v3102 = vld [vmem:[%s7 + $0x8a4] sm:$0xff]
  %v3103 = vld [vmem:[%s7 + $0x8ac] sm:$0xff]
  %v3104 = vld [vmem:[%s7 + $0x8b4] sm:$0xff]
  %v3105 = vld [vmem:[%s7 + $0x8bc] sm:$0xf]
  %v3106 = vld [vmem:[%s7 + $0x8c0] sm:$0xff]
  %v3107 = vld [vmem:[%s7 + $0x8c8] sm:$0xff]
  %v3108 = vld [vmem:[%s7 + $0x8d0] sm:$0xff]
  %v3109 = vld [vmem:[%s7 + $0x8d8] sm:$0xf]
  %v3110 = vld [vmem:[%s7 + $0x8dc] sm:$0xff]
  %v3111 = vld [vmem:[%s7 + $0x8e4] sm:$0xff]
  %v3112 = vld [vmem:[%s7 + $0x8ec] sm:$0xff]
  %v3113 = vld [vmem:[%s7 + $0x8f4] sm:$0xf]
  %v3114 = vld [vmem:[%s7 + $0x8f8] sm:$0xff]
  %v3115 = vld [vmem:[%s7 + $0x900] sm:$0xff]
  %v3116 = vld [vmem:[%s7 + $0x908] sm:$0xff]
  %v3117 = vld [vmem:[%s7 + $0x910] sm:$0xf]
  %v3118 = vld [vmem:[%s7 + $0x914] sm:$0xff]
  %v3119 = vld [vmem:[%s7 + $0x91c] sm:$0xff]
  %v3120 = vld [vmem:[%s7 + $0x924] sm:$0xff]
  %v3121 = vld [vmem:[%s7 + $0x92c] sm:$0xf]
  %v3122 = vld [vmem:[%s7 + $0x930] sm:$0xff]
  %v3123 = vld [vmem:[%s7 + $0x938] sm:$0xff]
  %v3124 = vld [vmem:[%s7 + $0x940] sm:$0xff]
  %v3125 = vld [vmem:[%s7 + $0x948] sm:$0xf]
  %v3126 = vld [vmem:[%s7 + $0x94c] sm:$0xff]
  %v3127 = vld [vmem:[%s7 + $0x954] sm:$0xff]
  %v3128 = vld [vmem:[%s7 + $0x95c] sm:$0xff]
  %v3129 = vld [vmem:[%s7 + $0x964] sm:$0xf]
  %v3130 = vld [vmem:[%s7 + $0x968] sm:$0xff]
  %v3131 = vld [vmem:[%s7 + $0x970] sm:$0xff]
  %v3132 = vld [vmem:[%s7 + $0x978] sm:$0xff]
  %v3133 = vld [vmem:[%s7 + $0x980] sm:$0xf]
  %v3134 = vld [vmem:[%s7 + $0x984] sm:$0xff]
  %v3135 = vld [vmem:[%s7 + $0x98c] sm:$0xff]
  %v3136 = vld [vmem:[%s7 + $0x994] sm:$0xff]
  %v3137 = vld [vmem:[%s7 + $0x99c] sm:$0xf]
  %v3138 = vld [vmem:[%s7 + $0x9a0] sm:$0xff]
  %v3139 = vld [vmem:[%s7 + $0x9a8] sm:$0xff]
  %v3140 = vld [vmem:[%s7 + $0x9b0] sm:$0xff]
  %v3141 = vld [vmem:[%s7 + $0x9b8] sm:$0xf]
  %v3142 = vld [vmem:[%s7 + $0x9bc] sm:$0xff]
  %v3143 = vld [vmem:[%s7 + $0x9c4] sm:$0xff]
  %v3144 = vld [vmem:[%s7 + $0x9cc] sm:$0xff]
  %v3145 = vld [vmem:[%s7 + $0x9d4] sm:$0xf]
  %v3146 = vld [vmem:[%s7 + $0x9d8] sm:$0xff]
  %v3147 = vld [vmem:[%s7 + $0x9e0] sm:$0xff]
  %v3148 = vld [vmem:[%s7 + $0x9e8] sm:$0xff]
  %v3149 = vld [vmem:[%s7 + $0x9f0] sm:$0xf]
  %v3150 = vld [vmem:[%s7 + $0x9f4] sm:$0xff]
  %v3151 = vld [vmem:[%s7 + $0x9fc] sm:$0xff]
  %v3152 = vld [vmem:[%s7 + $0xa04] sm:$0xff]
  %v3153 = vld [vmem:[%s7 + $0xa0c] sm:$0xf]
  %v3154 = vld [vmem:[%s7 + $0xa10] sm:$0xff]
  %v3155 = vld [vmem:[%s7 + $0xa18] sm:$0xff]
  %v3156 = vld [vmem:[%s7 + $0xa20] sm:$0xff]
  %v3157 = vld [vmem:[%s7 + $0xa28] sm:$0xf]
  %v3158 = vld [vmem:[%s7 + $0xa2c] sm:$0xff]
  %v3159 = vld [vmem:[%s7 + $0xa34] sm:$0xff]
  %v3160 = vld [vmem:[%s7 + $0xa3c] sm:$0xff]
  %v3161 = vld [vmem:[%s7 + $0xa44] sm:$0xf]
  %v3162 = vld [vmem:[%s7 + $0xa48] sm:$0xff]
  %v3163 = vld [vmem:[%s7 + $0xa50] sm:$0xff]
  %v3164 = vld [vmem:[%s7 + $0xa58] sm:$0xff]
  %v3165 = vld [vmem:[%s7 + $0xa60] sm:$0xf]
  %v3166 = vld [vmem:[%s7 + $0xa64] sm:$0xff]
  %v3167 = vld [vmem:[%s7 + $0xa6c] sm:$0xff]
  %v3168 = vld [vmem:[%s7 + $0xa74] sm:$0xff]
  %v3169 = vld [vmem:[%s7 + $0xa7c] sm:$0xf]
  %v3170 = vld [vmem:[%s7 + $0xa80] sm:$0xff]
  %v3171 = vld [vmem:[%s7 + $0xa88] sm:$0xff]
  %v3172 = vld [vmem:[%s7 + $0xa90] sm:$0xff]
  %v3173 = vld [vmem:[%s7 + $0xa98] sm:$0xf]
  %v3174 = vld [vmem:[%s7 + $0xa9c] sm:$0xff]
  %v3175 = vld [vmem:[%s7 + $0xaa4] sm:$0xff]
  %v3176 = vld [vmem:[%s7 + $0xaac] sm:$0xff]
  %v3177 = vld [vmem:[%s7 + $0xab4] sm:$0xf]
  %v3178 = vld [vmem:[%s7 + $0xab8] sm:$0xff]
  %v3179 = vld [vmem:[%s7 + $0xac0] sm:$0xff]
  %v3180 = vld [vmem:[%s7 + $0xac8] sm:$0xff]
  %v3181 = vld [vmem:[%s7 + $0xad0] sm:$0xf]
  %v3182 = vld [vmem:[%s7 + $0xad4] sm:$0xff]
  %v3183 = vld [vmem:[%s7 + $0xadc] sm:$0xff]
  %v3184 = vld [vmem:[%s7 + $0xae4] sm:$0xff]
  %v3185 = vld [vmem:[%s7 + $0xaec] sm:$0xf]
  %v3186 = vld [vmem:[%s7 + $0xaf0] sm:$0xff]
  %v3187 = vld [vmem:[%s7 + $0xaf8] sm:$0xff]
  %v3188 = vld [vmem:[%s7 + $0xb00] sm:$0xff]
  %v3189 = vld [vmem:[%s7 + $0xb08] sm:$0xf]
  %v3190 = vld [vmem:[%s7 + $0xb0c] sm:$0xff]
  %v3191 = vld [vmem:[%s7 + $0xb14] sm:$0xff]
  %v3192 = vld [vmem:[%s7 + $0xb1c] sm:$0xff]
  %v3193 = vld [vmem:[%s7 + $0xb24] sm:$0xf]
  %v3194 = vld [vmem:[%s7 + $0xb28] sm:$0xff]
  %v3195 = vld [vmem:[%s7 + $0xb30] sm:$0xff]
  %v3196 = vld [vmem:[%s7 + $0xb38] sm:$0xff]
  %v3197 = vld [vmem:[%s7 + $0xb40] sm:$0xf]
  %v3198 = vld [vmem:[%s7 + $0xb44] sm:$0xff]
  %v3199 = vld [vmem:[%s7 + $0xb4c] sm:$0xff]
  %v3200 = vld [vmem:[%s7 + $0xb54] sm:$0xff]
  %v3201 = vld [vmem:[%s7 + $0xb5c] sm:$0xf]
  %v3202 = vld [vmem:[%s7 + $0xb60] sm:$0xff]
  %v3203 = vld [vmem:[%s7 + $0xb68] sm:$0xff]
  %v3204 = vld [vmem:[%s7 + $0xb70] sm:$0xff]
  %v3205 = vld [vmem:[%s7 + $0xb78] sm:$0xf]
  %v3206 = vld [vmem:[%s7 + $0xb7c] sm:$0xff]
  %v3207 = vld [vmem:[%s7 + $0xb84] sm:$0xff]
  %v3208 = vld [vmem:[%s7 + $0xb8c] sm:$0xff]
  %v3209 = vld [vmem:[%s7 + $0xb94] sm:$0xf]
  %v3210 = vld [vmem:[%s7 + $0xb98] sm:$0xff]
  %v3211 = vld [vmem:[%s7 + $0xba0] sm:$0xff]
  %v3212 = vld [vmem:[%s7 + $0xba8] sm:$0xff]
  %v3213 = vld [vmem:[%s7 + $0xbb0] sm:$0xf]
  %v3214 = vld [vmem:[%s7 + $0xbb4] sm:$0xff]
  %v3215 = vld [vmem:[%s7 + $0xbbc] sm:$0xff]
  %v3216 = vld [vmem:[%s7 + $0xbc4] sm:$0xff]
  %v3217 = vld [vmem:[%s7 + $0xbcc] sm:$0xf]
  %v3218 = vld [vmem:[%s7 + $0xbd0] sm:$0xff]
  %v3219 = vld [vmem:[%s7 + $0xbd8] sm:$0xff]
  %v3220 = vld [vmem:[%s7 + $0xbe0] sm:$0xff]
  %v3221 = vld [vmem:[%s7 + $0xbe8] sm:$0xf]
  %v3222 = vld [vmem:[%s7 + $0xbec] sm:$0xff]
  %v3223 = vld [vmem:[%s7 + $0xbf4] sm:$0xff]
  %v3224 = vld [vmem:[%s7 + $0xbfc] sm:$0xff]
  %v3225 = vld [vmem:[%s7 + $0xc04] sm:$0xf]
  %v3226 = vld [vmem:[%s7 + $0xc08] sm:$0xff]
  %v3227 = vld [vmem:[%s7 + $0xc10] sm:$0xff]
  %v3228 = vld [vmem:[%s7 + $0xc18] sm:$0xff]
  %v3229 = vld [vmem:[%s7 + $0xc20] sm:$0xf]
  %v3230 = vld [vmem:[%s7 + $0xc24] sm:$0xff]
  %v3231 = vld [vmem:[%s7 + $0xc2c] sm:$0xff]
  %v3232 = vld [vmem:[%s7 + $0xc34] sm:$0xff]
  %v3233 = vld [vmem:[%s7 + $0xc3c] sm:$0xf]
  %v3234 = vld [vmem:[%s7 + $0xc40] sm:$0xff]
  %v3235 = vld [vmem:[%s7 + $0xc48] sm:$0xff]
  %v3236 = vld [vmem:[%s7 + $0xc50] sm:$0xff]
  %v3237 = vld [vmem:[%s7 + $0xc58] sm:$0xf]
  %v3238 = vld [vmem:[%s7 + $0xc5c] sm:$0xff]
  %v3239 = vld [vmem:[%s7 + $0xc64] sm:$0xff]
  %v3240 = vld [vmem:[%s7 + $0xc6c] sm:$0xff]
  %v3241 = vld [vmem:[%s7 + $0xc74] sm:$0xf]
  %v3242 = vld [vmem:[%s7 + $0xc78] sm:$0xff]
  %v3243 = vld [vmem:[%s7 + $0xc80] sm:$0xff]
  %v3244 = vld [vmem:[%s7 + $0xc88] sm:$0xff]
  %v3245 = vld [vmem:[%s7 + $0xc90] sm:$0xf]
  %v3246 = vld [vmem:[%s7 + $0xc94] sm:$0xff]
  %v3247 = vld [vmem:[%s7 + $0xc9c] sm:$0xff]
  %v3248 = vld [vmem:[%s7 + $0xca4] sm:$0xff]
  %v3249 = vld [vmem:[%s7 + $0xcac] sm:$0xf]
  %v3250 = vld [vmem:[%s7 + $0xcb0] sm:$0xff]
  %v3251 = vld [vmem:[%s7 + $0xcb8] sm:$0xff]
  %v3252 = vld [vmem:[%s7 + $0xcc0] sm:$0xff]
  %v3253 = vld [vmem:[%s7 + $0xcc8] sm:$0xf]
  %v3254 = vld [vmem:[%s7 + $0xccc] sm:$0xff]
  %v3255 = vld [vmem:[%s7 + $0xcd4] sm:$0xff]
  %v3256 = vld [vmem:[%s7 + $0xcdc] sm:$0xff]
  %v3257 = vld [vmem:[%s7 + $0xce4] sm:$0xf]
  %v3258 = vld [vmem:[%s7 + $0xce8] sm:$0xff]
  %v3259 = vld [vmem:[%s7 + $0xcf0] sm:$0xff]
  %v3260 = vld [vmem:[%s7 + $0xcf8] sm:$0xff]
  %v3261 = vld [vmem:[%s7 + $0xd00] sm:$0xf]
  %v3262 = vld [vmem:[%s7 + $0xd04] sm:$0xff]
  %v3263 = vld [vmem:[%s7 + $0xd0c] sm:$0xff]
  %v3264 = vld [vmem:[%s7 + $0xd14] sm:$0xff]
  %v3265 = vld [vmem:[%s7 + $0xd1c] sm:$0xf]
  %v3266 = vld [vmem:[%s7 + $0xd20] sm:$0xff]
  %v3267 = vld [vmem:[%s7 + $0xd28] sm:$0xff]
  %v3268 = vld [vmem:[%s7 + $0xd30] sm:$0xff]
  %v3269 = vld [vmem:[%s7 + $0xd38] sm:$0xf]
  %v3270 = vld [vmem:[%s7 + $0xd3c] sm:$0xff]
  %v3271 = vld [vmem:[%s7 + $0xd44] sm:$0xff]
  %v3272 = vld [vmem:[%s7 + $0xd4c] sm:$0xff]
  %v3273 = vld [vmem:[%s7 + $0xd54] sm:$0xf]
  %v3274 = vld [vmem:[%s7 + $0xd58] sm:$0xff]
  %v3275 = vld [vmem:[%s7 + $0xd60] sm:$0xff]
  %v3276 = vld [vmem:[%s7 + $0xd68] sm:$0xff]
  %v3277 = vld [vmem:[%s7 + $0xd70] sm:$0xf]
  %v3278 = vld [vmem:[%s7 + $0xd74] sm:$0xff]
  %v3279 = vld [vmem:[%s7 + $0xd7c] sm:$0xff]
  %v3280 = vld [vmem:[%s7 + $0xd84] sm:$0xff]
  %v3281 = vld [vmem:[%s7 + $0xd8c] sm:$0xf]
  %v3282 = vld [vmem:[%s7 + $0xd90] sm:$0xff]
  %v3283 = vld [vmem:[%s7 + $0xd98] sm:$0xff]
  %v3284 = vld [vmem:[%s7 + $0xda0] sm:$0xff]
  %v3285 = vld [vmem:[%s7 + $0xda8] sm:$0xf]
  %v3286 = vld [vmem:[%s7 + $0xdac] sm:$0xff]
  %v3287 = vld [vmem:[%s7 + $0xdb4] sm:$0xff]
  %v3288 = vld [vmem:[%s7 + $0xdbc] sm:$0xff]
  %v3289 = vld [vmem:[%s7 + $0xdc4] sm:$0xf]
  %v3290 = vld [vmem:[%s7 + $0xdc8] sm:$0xff]
  %v3291 = vld [vmem:[%s7 + $0xdd0] sm:$0xff]
  %v3292 = vld [vmem:[%s7 + $0xdd8] sm:$0xff]
  %v3293 = vld [vmem:[%s7 + $0xde0] sm:$0xf]
  %v3294 = vld [vmem:[%s7 + $0xde4] sm:$0xff]
  %v3295 = vld [vmem:[%s7 + $0xdec] sm:$0xff]
  %v3296 = vld [vmem:[%s7 + $0xdf4] sm:$0xff]
  %v3297 = vld [vmem:[%s7 + $0xdfc] sm:$0xf]
  %v3298 = vld [vmem:[%s8] sm:$0xff]
  %v3300 = vlaneseq
  %v3301 = vshrl.u32 %v3300, 7
  %v3302 = vsub.s32 0, %v3301
  %v3303 = vrot.slane %v3298, %v3302
  %v3304 = vlaneseq
  %v3305 = vshrl.u32 %v3304, 7
  %v3306 = vsub.s32 1, %v3305
  %v3307 = vrot.slane %v3298, %v3306
  %v3308 = vlaneseq
  %v3309 = vshrl.u32 %v3308, 7
  %v3310 = vsub.s32 2, %v3309
  %v3311 = vrot.slane %v3298, %v3310
  %v3312 = vlaneseq
  %v3313 = vshrl.u32 %v3312, 7
  %v3314 = vsub.s32 3, %v3313
  %v3315 = vrot.slane %v3298, %v3314
  %v3316 = vlaneseq
  %v3317 = vshrl.u32 %v3316, 7
  %v3318 = vsub.s32 4, %v3317
  %v3319 = vrot.slane %v3298, %v3318
  %v3320 = vlaneseq
  %v3321 = vshrl.u32 %v3320, 7
  %v3322 = vsub.s32 5, %v3321
  %v3323 = vrot.slane %v3298, %v3322
  %v3324 = vlaneseq
  %v3325 = vshrl.u32 %v3324, 7
  %v3326 = vsub.s32 6, %v3325
  %v3327 = vrot.slane %v3298, %v3326
  %v3847 = vunpack.c.l.b16 %v2786
  %v3848 = vunpack.c.h.b16 %v2786
  %v3849 = vunpack.c.l.b16 %v2787
  %v3850 = vunpack.c.h.b16 %v2787
  %v3851 = vunpack.c.l.b16 %v2788
  %v3852 = vunpack.c.h.b16 %v2788
  %v3853 = vunpack.c.l.b16 %v2789
  %v3854 = vunpack.c.l.b16 %v2790
  %v3855 = vunpack.c.h.b16 %v2790
  %v3856 = vunpack.c.l.b16 %v2791
  %v3857 = vunpack.c.h.b16 %v2791
  %v3858 = vunpack.c.l.b16 %v2792
  %v3859 = vunpack.c.h.b16 %v2792
  %v3860 = vunpack.c.l.b16 %v2793
  %v3861 = vunpack.c.l.b16 %v2794
  %v3862 = vunpack.c.h.b16 %v2794
  %v3863 = vunpack.c.l.b16 %v2795
  %v3864 = vunpack.c.h.b16 %v2795
  %v3865 = vunpack.c.l.b16 %v2796
  %v3866 = vunpack.c.h.b16 %v2796
  %v3867 = vunpack.c.l.b16 %v2797
  %v3868 = vunpack.c.l.b16 %v2798
  %v3869 = vunpack.c.h.b16 %v2798
  %v3870 = vunpack.c.l.b16 %v2799
  %v3871 = vunpack.c.h.b16 %v2799
  %v3872 = vunpack.c.l.b16 %v2800
  %v3873 = vunpack.c.h.b16 %v2800
  %v3874 = vunpack.c.l.b16 %v2801
  %v3875 = vunpack.c.l.b16 %v2802
  %v3876 = vunpack.c.h.b16 %v2802
  %v3877 = vunpack.c.l.b16 %v2803
  %v3878 = vunpack.c.h.b16 %v2803
  %v3879 = vunpack.c.l.b16 %v2804
  %v3880 = vunpack.c.h.b16 %v2804
  %v3881 = vunpack.c.l.b16 %v2805
  %v3882 = vunpack.c.l.b16 %v2806
  %v3883 = vunpack.c.h.b16 %v2806
  %v3884 = vunpack.c.l.b16 %v2807
  %v3885 = vunpack.c.h.b16 %v2807
  %v3886 = vunpack.c.l.b16 %v2808
  %v3887 = vunpack.c.h.b16 %v2808
  %v3888 = vunpack.c.l.b16 %v2809
  %v3889 = vunpack.c.l.b16 %v2810
  %v3890 = vunpack.c.h.b16 %v2810
  %v3891 = vunpack.c.l.b16 %v2811
  %v3892 = vunpack.c.h.b16 %v2811
  %v3893 = vunpack.c.l.b16 %v2812
  %v3894 = vunpack.c.h.b16 %v2812
  %v3895 = vunpack.c.l.b16 %v2813
  %v3896 = vunpack.c.l.b16 %v2814
  %v3897 = vunpack.c.h.b16 %v2814
  %v3898 = vunpack.c.l.b16 %v2815
  %v3899 = vunpack.c.h.b16 %v2815
  %v3900 = vunpack.c.l.b16 %v2816
  %v3901 = vunpack.c.h.b16 %v2816
  %v3902 = vunpack.c.l.b16 %v2817
  %v3903 = vunpack.c.l.b16 %v2818
  %v3904 = vunpack.c.h.b16 %v2818
  %v3905 = vunpack.c.l.b16 %v2819
  %v3906 = vunpack.c.h.b16 %v2819
  %v3907 = vunpack.c.l.b16 %v2820
  %v3908 = vunpack.c.h.b16 %v2820
  %v3909 = vunpack.c.l.b16 %v2821
  %v3910 = vunpack.c.l.b16 %v2822
  %v3911 = vunpack.c.h.b16 %v2822
  %v3912 = vunpack.c.l.b16 %v2823
  %v3913 = vunpack.c.h.b16 %v2823
  %v3914 = vunpack.c.l.b16 %v2824
  %v3915 = vunpack.c.h.b16 %v2824
  %v3916 = vunpack.c.l.b16 %v2825
  %v3917 = vunpack.c.l.b16 %v2826
  %v3918 = vunpack.c.h.b16 %v2826
  %v3919 = vunpack.c.l.b16 %v2827
  %v3920 = vunpack.c.h.b16 %v2827
  %v3921 = vunpack.c.l.b16 %v2828
  %v3922 = vunpack.c.h.b16 %v2828
  %v3923 = vunpack.c.l.b16 %v2829
  %v3924 = vunpack.c.l.b16 %v2830
  %v3925 = vunpack.c.h.b16 %v2830
  %v3926 = vunpack.c.l.b16 %v2831
  %v3927 = vunpack.c.h.b16 %v2831
  %v3928 = vunpack.c.l.b16 %v2832
  %v3929 = vunpack.c.h.b16 %v2832
  %v3930 = vunpack.c.l.b16 %v2833
  %v3931 = vunpack.c.l.b16 %v2834
  %v3932 = vunpack.c.h.b16 %v2834
  %v3933 = vunpack.c.l.b16 %v2835
  %v3934 = vunpack.c.h.b16 %v2835
  %v3935 = vunpack.c.l.b16 %v2836
  %v3936 = vunpack.c.h.b16 %v2836
  %v3937 = vunpack.c.l.b16 %v2837
  %v3938 = vunpack.c.l.b16 %v2838
  %v3939 = vunpack.c.h.b16 %v2838
  %v3940 = vunpack.c.l.b16 %v2839
  %v3941 = vunpack.c.h.b16 %v2839
  %v3942 = vunpack.c.l.b16 %v2840
  %v3943 = vunpack.c.h.b16 %v2840
  %v3944 = vunpack.c.l.b16 %v2841
  %v3945 = vunpack.c.l.b16 %v2842
  %v3946 = vunpack.c.h.b16 %v2842
  %v3947 = vunpack.c.l.b16 %v2843
  %v3948 = vunpack.c.h.b16 %v2843
  %v3949 = vunpack.c.l.b16 %v2844
  %v3950 = vunpack.c.h.b16 %v2844
  %v3951 = vunpack.c.l.b16 %v2845
  %v3952 = vunpack.c.l.b16 %v2846
  %v3953 = vunpack.c.h.b16 %v2846
  %v3954 = vunpack.c.l.b16 %v2847
  %v3955 = vunpack.c.h.b16 %v2847
  %v3956 = vunpack.c.l.b16 %v2848
  %v3957 = vunpack.c.h.b16 %v2848
  %v3958 = vunpack.c.l.b16 %v2849
  %v3959 = vunpack.c.l.b16 %v2850
  %v3960 = vunpack.c.h.b16 %v2850
  %v3961 = vunpack.c.l.b16 %v2851
  %v3962 = vunpack.c.h.b16 %v2851
  %v3963 = vunpack.c.l.b16 %v2852
  %v3964 = vunpack.c.h.b16 %v2852
  %v3965 = vunpack.c.l.b16 %v2853
  %v3966 = vunpack.c.l.b16 %v2854
  %v3967 = vunpack.c.h.b16 %v2854
  %v3968 = vunpack.c.l.b16 %v2855
  %v3969 = vunpack.c.h.b16 %v2855
  %v3970 = vunpack.c.l.b16 %v2856
  %v3971 = vunpack.c.h.b16 %v2856
  %v3972 = vunpack.c.l.b16 %v2857
  %v3973 = vunpack.c.l.b16 %v2858
  %v3974 = vunpack.c.h.b16 %v2858
  %v3975 = vunpack.c.l.b16 %v2859
  %v3976 = vunpack.c.h.b16 %v2859
  %v3977 = vunpack.c.l.b16 %v2860
  %v3978 = vunpack.c.h.b16 %v2860
  %v3979 = vunpack.c.l.b16 %v2861
  %v3980 = vunpack.c.l.b16 %v2862
  %v3981 = vunpack.c.h.b16 %v2862
  %v3982 = vunpack.c.l.b16 %v2863
  %v3983 = vunpack.c.h.b16 %v2863
  %v3984 = vunpack.c.l.b16 %v2864
  %v3985 = vunpack.c.h.b16 %v2864
  %v3986 = vunpack.c.l.b16 %v2865
  %v3987 = vunpack.c.l.b16 %v2866
  %v3988 = vunpack.c.h.b16 %v2866
  %v3989 = vunpack.c.l.b16 %v2867
  %v3990 = vunpack.c.h.b16 %v2867
  %v3991 = vunpack.c.l.b16 %v2868
  %v3992 = vunpack.c.h.b16 %v2868
  %v3993 = vunpack.c.l.b16 %v2869
  %v3994 = vunpack.c.l.b16 %v2870
  %v3995 = vunpack.c.h.b16 %v2870
  %v3996 = vunpack.c.l.b16 %v2871
  %v3997 = vunpack.c.h.b16 %v2871
  %v3998 = vunpack.c.l.b16 %v2872
  %v3999 = vunpack.c.h.b16 %v2872
  %v4000 = vunpack.c.l.b16 %v2873
  %v4001 = vunpack.c.l.b16 %v2874
  %v4002 = vunpack.c.h.b16 %v2874
  %v4003 = vunpack.c.l.b16 %v2875
  %v4004 = vunpack.c.h.b16 %v2875
  %v4005 = vunpack.c.l.b16 %v2876
  %v4006 = vunpack.c.h.b16 %v2876
  %v4007 = vunpack.c.l.b16 %v2877
  %v4008 = vunpack.c.l.b16 %v2878
  %v4009 = vunpack.c.h.b16 %v2878
  %v4010 = vunpack.c.l.b16 %v2879
  %v4011 = vunpack.c.h.b16 %v2879
  %v4012 = vunpack.c.l.b16 %v2880
  %v4013 = vunpack.c.h.b16 %v2880
  %v4014 = vunpack.c.l.b16 %v2881
  %v4015 = vunpack.c.l.b16 %v2882
  %v4016 = vunpack.c.h.b16 %v2882
  %v4017 = vunpack.c.l.b16 %v2883
  %v4018 = vunpack.c.h.b16 %v2883
  %v4019 = vunpack.c.l.b16 %v2884
  %v4020 = vunpack.c.h.b16 %v2884
  %v4021 = vunpack.c.l.b16 %v2885
  %v4022 = vunpack.c.l.b16 %v2886
  %v4023 = vunpack.c.h.b16 %v2886
  %v4024 = vunpack.c.l.b16 %v2887
  %v4025 = vunpack.c.h.b16 %v2887
  %v4026 = vunpack.c.l.b16 %v2888
  %v4027 = vunpack.c.h.b16 %v2888
  %v4028 = vunpack.c.l.b16 %v2889
  %v4029 = vunpack.c.l.b16 %v2890
  %v4030 = vunpack.c.h.b16 %v2890
  %v4031 = vunpack.c.l.b16 %v2891
  %v4032 = vunpack.c.h.b16 %v2891
  %v4033 = vunpack.c.l.b16 %v2892
  %v4034 = vunpack.c.h.b16 %v2892
  %v4035 = vunpack.c.l.b16 %v2893
  %v4036 = vunpack.c.l.b16 %v2894
  %v4037 = vunpack.c.h.b16 %v2894
  %v4038 = vunpack.c.l.b16 %v2895
  %v4039 = vunpack.c.h.b16 %v2895
  %v4040 = vunpack.c.l.b16 %v2896
  %v4041 = vunpack.c.h.b16 %v2896
  %v4042 = vunpack.c.l.b16 %v2897
  %v4043 = vunpack.c.l.b16 %v2898
  %v4044 = vunpack.c.h.b16 %v2898
  %v4045 = vunpack.c.l.b16 %v2899
  %v4046 = vunpack.c.h.b16 %v2899
  %v4047 = vunpack.c.l.b16 %v2900
  %v4048 = vunpack.c.h.b16 %v2900
  %v4049 = vunpack.c.l.b16 %v2901
  %v4050 = vunpack.c.l.b16 %v2902
  %v4051 = vunpack.c.h.b16 %v2902
  %v4052 = vunpack.c.l.b16 %v2903
  %v4053 = vunpack.c.h.b16 %v2903
  %v4054 = vunpack.c.l.b16 %v2904
  %v4055 = vunpack.c.h.b16 %v2904
  %v4056 = vunpack.c.l.b16 %v2905
  %v4057 = vunpack.c.l.b16 %v2906
  %v4058 = vunpack.c.h.b16 %v2906
  %v4059 = vunpack.c.l.b16 %v2907
  %v4060 = vunpack.c.h.b16 %v2907
  %v4061 = vunpack.c.l.b16 %v2908
  %v4062 = vunpack.c.h.b16 %v2908
  %v4063 = vunpack.c.l.b16 %v2909
  %v4064 = vunpack.c.l.b16 %v2910
  %v4065 = vunpack.c.h.b16 %v2910
  %v4066 = vunpack.c.l.b16 %v2911
  %v4067 = vunpack.c.h.b16 %v2911
  %v4068 = vunpack.c.l.b16 %v2912
  %v4069 = vunpack.c.h.b16 %v2912
  %v4070 = vunpack.c.l.b16 %v2913
  %v4071 = vunpack.c.l.b16 %v2914
  %v4072 = vunpack.c.h.b16 %v2914
  %v4073 = vunpack.c.l.b16 %v2915
  %v4074 = vunpack.c.h.b16 %v2915
  %v4075 = vunpack.c.l.b16 %v2916
  %v4076 = vunpack.c.h.b16 %v2916
  %v4077 = vunpack.c.l.b16 %v2917
  %v4078 = vunpack.c.l.b16 %v2918
  %v4079 = vunpack.c.h.b16 %v2918
  %v4080 = vunpack.c.l.b16 %v2919
  %v4081 = vunpack.c.h.b16 %v2919
  %v4082 = vunpack.c.l.b16 %v2920
  %v4083 = vunpack.c.h.b16 %v2920
  %v4084 = vunpack.c.l.b16 %v2921
  %v4085 = vunpack.c.l.b16 %v2922
  %v4086 = vunpack.c.h.b16 %v2922
  %v4087 = vunpack.c.l.b16 %v2923
  %v4088 = vunpack.c.h.b16 %v2923
  %v4089 = vunpack.c.l.b16 %v2924
  %v4090 = vunpack.c.h.b16 %v2924
  %v4091 = vunpack.c.l.b16 %v2925
  %v4092 = vunpack.c.l.b16 %v2926
  %v4093 = vunpack.c.h.b16 %v2926
  %v4094 = vunpack.c.l.b16 %v2927
  %v4095 = vunpack.c.h.b16 %v2927
  %v4096 = vunpack.c.l.b16 %v2928
  %v4097 = vunpack.c.h.b16 %v2928
  %v4098 = vunpack.c.l.b16 %v2929
  %v4099 = vunpack.c.l.b16 %v2930
  %v4100 = vunpack.c.h.b16 %v2930
  %v4101 = vunpack.c.l.b16 %v2931
  %v4102 = vunpack.c.h.b16 %v2931
  %v4103 = vunpack.c.l.b16 %v2932
  %v4104 = vunpack.c.h.b16 %v2932
  %v4105 = vunpack.c.l.b16 %v2933
  %v4106 = vunpack.c.l.b16 %v2934
  %v4107 = vunpack.c.h.b16 %v2934
  %v4108 = vunpack.c.l.b16 %v2935
  %v4109 = vunpack.c.h.b16 %v2935
  %v4110 = vunpack.c.l.b16 %v2936
  %v4111 = vunpack.c.h.b16 %v2936
  %v4112 = vunpack.c.l.b16 %v2937
  %v4113 = vunpack.c.l.b16 %v2938
  %v4114 = vunpack.c.h.b16 %v2938
  %v4115 = vunpack.c.l.b16 %v2939
  %v4116 = vunpack.c.h.b16 %v2939
  %v4117 = vunpack.c.l.b16 %v2940
  %v4118 = vunpack.c.h.b16 %v2940
  %v4119 = vunpack.c.l.b16 %v2941
  %v4120 = vunpack.c.l.b16 %v2942
  %v4121 = vunpack.c.h.b16 %v2942
  %v4122 = vunpack.c.l.b16 %v2943
  %v4123 = vunpack.c.h.b16 %v2943
  %v4124 = vunpack.c.l.b16 %v2944
  %v4125 = vunpack.c.h.b16 %v2944
  %v4126 = vunpack.c.l.b16 %v2945
  %v4127 = vunpack.c.l.b16 %v2946
  %v4128 = vunpack.c.h.b16 %v2946
  %v4129 = vunpack.c.l.b16 %v2947
  %v4130 = vunpack.c.h.b16 %v2947
  %v4131 = vunpack.c.l.b16 %v2948
  %v4132 = vunpack.c.h.b16 %v2948
  %v4133 = vunpack.c.l.b16 %v2949
  %v4134 = vunpack.c.l.b16 %v2950
  %v4135 = vunpack.c.h.b16 %v2950
  %v4136 = vunpack.c.l.b16 %v2951
  %v4137 = vunpack.c.h.b16 %v2951
  %v4138 = vunpack.c.l.b16 %v2952
  %v4139 = vunpack.c.h.b16 %v2952
  %v4140 = vunpack.c.l.b16 %v2953
  %v4141 = vunpack.c.l.b16 %v2954
  %v4142 = vunpack.c.h.b16 %v2954
  %v4143 = vunpack.c.l.b16 %v2955
  %v4144 = vunpack.c.h.b16 %v2955
  %v4145 = vunpack.c.l.b16 %v2956
  %v4146 = vunpack.c.h.b16 %v2956
  %v4147 = vunpack.c.l.b16 %v2957
  %v4148 = vunpack.c.l.b16 %v2958
  %v4149 = vunpack.c.h.b16 %v2958
  %v4150 = vunpack.c.l.b16 %v2959
  %v4151 = vunpack.c.h.b16 %v2959
  %v4152 = vunpack.c.l.b16 %v2960
  %v4153 = vunpack.c.h.b16 %v2960
  %v4154 = vunpack.c.l.b16 %v2961
  %v4155 = vunpack.c.l.b16 %v2962
  %v4156 = vunpack.c.h.b16 %v2962
  %v4157 = vunpack.c.l.b16 %v2963
  %v4158 = vunpack.c.h.b16 %v2963
  %v4159 = vunpack.c.l.b16 %v2964
  %v4160 = vunpack.c.h.b16 %v2964
  %v4161 = vunpack.c.l.b16 %v2965
  %v4162 = vunpack.c.l.b16 %v2966
  %v4163 = vunpack.c.h.b16 %v2966
  %v4164 = vunpack.c.l.b16 %v2967
  %v4165 = vunpack.c.h.b16 %v2967
  %v4166 = vunpack.c.l.b16 %v2968
  %v4167 = vunpack.c.h.b16 %v2968
  %v4168 = vunpack.c.l.b16 %v2969
  %v4169 = vunpack.c.l.b16 %v2970
  %v4170 = vunpack.c.h.b16 %v2970
  %v4171 = vunpack.c.l.b16 %v2971
  %v4172 = vunpack.c.h.b16 %v2971
  %v4173 = vunpack.c.l.b16 %v2972
  %v4174 = vunpack.c.h.b16 %v2972
  %v4175 = vunpack.c.l.b16 %v2973
  %v4176 = vunpack.c.l.b16 %v2974
  %v4177 = vunpack.c.h.b16 %v2974
  %v4178 = vunpack.c.l.b16 %v2975
  %v4179 = vunpack.c.h.b16 %v2975
  %v4180 = vunpack.c.l.b16 %v2976
  %v4181 = vunpack.c.h.b16 %v2976
  %v4182 = vunpack.c.l.b16 %v2977
  %v4183 = vunpack.c.l.b16 %v2978
  %v4184 = vunpack.c.h.b16 %v2978
  %v4185 = vunpack.c.l.b16 %v2979
  %v4186 = vunpack.c.h.b16 %v2979
  %v4187 = vunpack.c.l.b16 %v2980
  %v4188 = vunpack.c.h.b16 %v2980
  %v4189 = vunpack.c.l.b16 %v2981
  %v4190 = vunpack.c.l.b16 %v2982
  %v4191 = vunpack.c.h.b16 %v2982
  %v4192 = vunpack.c.l.b16 %v2983
  %v4193 = vunpack.c.h.b16 %v2983
  %v4194 = vunpack.c.l.b16 %v2984
  %v4195 = vunpack.c.h.b16 %v2984
  %v4196 = vunpack.c.l.b16 %v2985
  %v4197 = vunpack.c.l.b16 %v2986
  %v4198 = vunpack.c.h.b16 %v2986
  %v4199 = vunpack.c.l.b16 %v2987
  %v4200 = vunpack.c.h.b16 %v2987
  %v4201 = vunpack.c.l.b16 %v2988
  %v4202 = vunpack.c.h.b16 %v2988
  %v4203 = vunpack.c.l.b16 %v2989
  %v4204 = vunpack.c.l.b16 %v2990
  %v4205 = vunpack.c.h.b16 %v2990
  %v4206 = vunpack.c.l.b16 %v2991
  %v4207 = vunpack.c.h.b16 %v2991
  %v4208 = vunpack.c.l.b16 %v2992
  %v4209 = vunpack.c.h.b16 %v2992
  %v4210 = vunpack.c.l.b16 %v2993
  %v4211 = vunpack.c.l.b16 %v2994
  %v4212 = vunpack.c.h.b16 %v2994
  %v4213 = vunpack.c.l.b16 %v2995
  %v4214 = vunpack.c.h.b16 %v2995
  %v4215 = vunpack.c.l.b16 %v2996
  %v4216 = vunpack.c.h.b16 %v2996
  %v4217 = vunpack.c.l.b16 %v2997
  %v4218 = vunpack.c.l.b16 %v2998
  %v4219 = vunpack.c.h.b16 %v2998
  %v4220 = vunpack.c.l.b16 %v2999
  %v4221 = vunpack.c.h.b16 %v2999
  %v4222 = vunpack.c.l.b16 %v3000
  %v4223 = vunpack.c.h.b16 %v3000
  %v4224 = vunpack.c.l.b16 %v3001
  %v4225 = vunpack.c.l.b16 %v3002
  %v4226 = vunpack.c.h.b16 %v3002
  %v4227 = vunpack.c.l.b16 %v3003
  %v4228 = vunpack.c.h.b16 %v3003
  %v4229 = vunpack.c.l.b16 %v3004
  %v4230 = vunpack.c.h.b16 %v3004
  %v4231 = vunpack.c.l.b16 %v3005
  %v4232 = vunpack.c.l.b16 %v3006
  %v4233 = vunpack.c.h.b16 %v3006
  %v4234 = vunpack.c.l.b16 %v3007
  %v4235 = vunpack.c.h.b16 %v3007
  %v4236 = vunpack.c.l.b16 %v3008
  %v4237 = vunpack.c.h.b16 %v3008
  %v4238 = vunpack.c.l.b16 %v3009
  %v4239 = vunpack.c.l.b16 %v3010
  %v4240 = vunpack.c.h.b16 %v3010
  %v4241 = vunpack.c.l.b16 %v3011
  %v4242 = vunpack.c.h.b16 %v3011
  %v4243 = vunpack.c.l.b16 %v3012
  %v4244 = vunpack.c.h.b16 %v3012
  %v4245 = vunpack.c.l.b16 %v3013
  %v4246 = vunpack.c.l.b16 %v3014
  %v4247 = vunpack.c.h.b16 %v3014
  %v4248 = vunpack.c.l.b16 %v3015
  %v4249 = vunpack.c.h.b16 %v3015
  %v4250 = vunpack.c.l.b16 %v3016
  %v4251 = vunpack.c.h.b16 %v3016
  %v4252 = vunpack.c.l.b16 %v3017
  %v4253 = vunpack.c.l.b16 %v3018
  %v4254 = vunpack.c.h.b16 %v3018
  %v4255 = vunpack.c.l.b16 %v3019
  %v4256 = vunpack.c.h.b16 %v3019
  %v4257 = vunpack.c.l.b16 %v3020
  %v4258 = vunpack.c.h.b16 %v3020
  %v4259 = vunpack.c.l.b16 %v3021
  %v4260 = vunpack.c.l.b16 %v3022
  %v4261 = vunpack.c.h.b16 %v3022
  %v4262 = vunpack.c.l.b16 %v3023
  %v4263 = vunpack.c.h.b16 %v3023
  %v4264 = vunpack.c.l.b16 %v3024
  %v4265 = vunpack.c.h.b16 %v3024
  %v4266 = vunpack.c.l.b16 %v3025
  %v4267 = vunpack.c.l.b16 %v3026
  %v4268 = vunpack.c.h.b16 %v3026
  %v4269 = vunpack.c.l.b16 %v3027
  %v4270 = vunpack.c.h.b16 %v3027
  %v4271 = vunpack.c.l.b16 %v3028
  %v4272 = vunpack.c.h.b16 %v3028
  %v4273 = vunpack.c.l.b16 %v3029
  %v4274 = vunpack.c.l.b16 %v3030
  %v4275 = vunpack.c.h.b16 %v3030
  %v4276 = vunpack.c.l.b16 %v3031
  %v4277 = vunpack.c.h.b16 %v3031
  %v4278 = vunpack.c.l.b16 %v3032
  %v4279 = vunpack.c.h.b16 %v3032
  %v4280 = vunpack.c.l.b16 %v3033
  %v4281 = vunpack.c.l.b16 %v3034
  %v4282 = vunpack.c.h.b16 %v3034
  %v4283 = vunpack.c.l.b16 %v3035
  %v4284 = vunpack.c.h.b16 %v3035
  %v4285 = vunpack.c.l.b16 %v3036
  %v4286 = vunpack.c.h.b16 %v3036
  %v4287 = vunpack.c.l.b16 %v3037
  %v4288 = vunpack.c.l.b16 %v3038
  %v4289 = vunpack.c.h.b16 %v3038
  %v4290 = vunpack.c.l.b16 %v3039
  %v4291 = vunpack.c.h.b16 %v3039
  %v4292 = vunpack.c.l.b16 %v3040
  %v4293 = vunpack.c.h.b16 %v3040
  %v4294 = vunpack.c.l.b16 %v3041
  %v4295 = vunpack.c.l.b16 %v3042
  %v4296 = vunpack.c.h.b16 %v3042
  %v4297 = vunpack.c.l.b16 %v3043
  %v4298 = vunpack.c.h.b16 %v3043
  %v4299 = vunpack.c.l.b16 %v3044
  %v4300 = vunpack.c.h.b16 %v3044
  %v4301 = vunpack.c.l.b16 %v3045
  %v4302 = vunpack.c.l.b16 %v3046
  %v4303 = vunpack.c.h.b16 %v3046
  %v4304 = vunpack.c.l.b16 %v3047
  %v4305 = vunpack.c.h.b16 %v3047
  %v4306 = vunpack.c.l.b16 %v3048
  %v4307 = vunpack.c.h.b16 %v3048
  %v4308 = vunpack.c.l.b16 %v3049
  %v4309 = vunpack.c.l.b16 %v3050
  %v4310 = vunpack.c.h.b16 %v3050
  %v4311 = vunpack.c.l.b16 %v3051
  %v4312 = vunpack.c.h.b16 %v3051
  %v4313 = vunpack.c.l.b16 %v3052
  %v4314 = vunpack.c.h.b16 %v3052
  %v4315 = vunpack.c.l.b16 %v3053
  %v4316 = vunpack.c.l.b16 %v3054
  %v4317 = vunpack.c.h.b16 %v3054
  %v4318 = vunpack.c.l.b16 %v3055
  %v4319 = vunpack.c.h.b16 %v3055
  %v4320 = vunpack.c.l.b16 %v3056
  %v4321 = vunpack.c.h.b16 %v3056
  %v4322 = vunpack.c.l.b16 %v3057
  %v4323 = vunpack.c.l.b16 %v3058
  %v4324 = vunpack.c.h.b16 %v3058
  %v4325 = vunpack.c.l.b16 %v3059
  %v4326 = vunpack.c.h.b16 %v3059
  %v4327 = vunpack.c.l.b16 %v3060
  %v4328 = vunpack.c.h.b16 %v3060
  %v4329 = vunpack.c.l.b16 %v3061
  %v4330 = vunpack.c.l.b16 %v3062
  %v4331 = vunpack.c.h.b16 %v3062
  %v4332 = vunpack.c.l.b16 %v3063
  %v4333 = vunpack.c.h.b16 %v3063
  %v4334 = vunpack.c.l.b16 %v3064
  %v4335 = vunpack.c.h.b16 %v3064
  %v4336 = vunpack.c.l.b16 %v3065
  %v4337 = vunpack.c.l.b16 %v3066
  %v4338 = vunpack.c.h.b16 %v3066
  %v4339 = vunpack.c.l.b16 %v3067
  %v4340 = vunpack.c.h.b16 %v3067
  %v4341 = vunpack.c.l.b16 %v3068
  %v4342 = vunpack.c.h.b16 %v3068
  %v4343 = vunpack.c.l.b16 %v3069
  %v4344 = vunpack.c.l.b16 %v3070
  %v4345 = vunpack.c.h.b16 %v3070
  %v4346 = vunpack.c.l.b16 %v3071
  %v4347 = vunpack.c.h.b16 %v3071
  %v4348 = vunpack.c.l.b16 %v3072
  %v4349 = vunpack.c.h.b16 %v3072
  %v4350 = vunpack.c.l.b16 %v3073
  %v4351 = vunpack.c.l.b16 %v3074
  %v4352 = vunpack.c.h.b16 %v3074
  %v4353 = vunpack.c.l.b16 %v3075
  %v4354 = vunpack.c.h.b16 %v3075
  %v4355 = vunpack.c.l.b16 %v3076
  %v4356 = vunpack.c.h.b16 %v3076
  %v4357 = vunpack.c.l.b16 %v3077
  %v4358 = vunpack.c.l.b16 %v3078
  %v4359 = vunpack.c.h.b16 %v3078
  %v4360 = vunpack.c.l.b16 %v3079
  %v4361 = vunpack.c.h.b16 %v3079
  %v4362 = vunpack.c.l.b16 %v3080
  %v4363 = vunpack.c.h.b16 %v3080
  %v4364 = vunpack.c.l.b16 %v3081
  %v4365 = vunpack.c.l.b16 %v3082
  %v4366 = vunpack.c.h.b16 %v3082
  %v4367 = vunpack.c.l.b16 %v3083
  %v4368 = vunpack.c.h.b16 %v3083
  %v4369 = vunpack.c.l.b16 %v3084
  %v4370 = vunpack.c.h.b16 %v3084
  %v4371 = vunpack.c.l.b16 %v3085
  %v4372 = vunpack.c.l.b16 %v3086
  %v4373 = vunpack.c.h.b16 %v3086
  %v4374 = vunpack.c.l.b16 %v3087
  %v4375 = vunpack.c.h.b16 %v3087
  %v4376 = vunpack.c.l.b16 %v3088
  %v4377 = vunpack.c.h.b16 %v3088
  %v4378 = vunpack.c.l.b16 %v3089
  %v4379 = vunpack.c.l.b16 %v3090
  %v4380 = vunpack.c.h.b16 %v3090
  %v4381 = vunpack.c.l.b16 %v3091
  %v4382 = vunpack.c.h.b16 %v3091
  %v4383 = vunpack.c.l.b16 %v3092
  %v4384 = vunpack.c.h.b16 %v3092
  %v4385 = vunpack.c.l.b16 %v3093
  %v4386 = vunpack.c.l.b16 %v3094
  %v4387 = vunpack.c.h.b16 %v3094
  %v4388 = vunpack.c.l.b16 %v3095
  %v4389 = vunpack.c.h.b16 %v3095
  %v4390 = vunpack.c.l.b16 %v3096
  %v4391 = vunpack.c.h.b16 %v3096
  %v4392 = vunpack.c.l.b16 %v3097
  %v4393 = vunpack.c.l.b16 %v3098
  %v4394 = vunpack.c.h.b16 %v3098
  %v4395 = vunpack.c.l.b16 %v3099
  %v4396 = vunpack.c.h.b16 %v3099
  %v4397 = vunpack.c.l.b16 %v3100
  %v4398 = vunpack.c.h.b16 %v3100
  %v4399 = vunpack.c.l.b16 %v3101
  %v4400 = vunpack.c.l.b16 %v3102
  %v4401 = vunpack.c.h.b16 %v3102
  %v4402 = vunpack.c.l.b16 %v3103
  %v4403 = vunpack.c.h.b16 %v3103
  %v4404 = vunpack.c.l.b16 %v3104
  %v4405 = vunpack.c.h.b16 %v3104
  %v4406 = vunpack.c.l.b16 %v3105
  %v4407 = vunpack.c.l.b16 %v3106
  %v4408 = vunpack.c.h.b16 %v3106
  %v4409 = vunpack.c.l.b16 %v3107
  %v4410 = vunpack.c.h.b16 %v3107
  %v4411 = vunpack.c.l.b16 %v3108
  %v4412 = vunpack.c.h.b16 %v3108
  %v4413 = vunpack.c.l.b16 %v3109
  %v4414 = vunpack.c.l.b16 %v3110
  %v4415 = vunpack.c.h.b16 %v3110
  %v4416 = vunpack.c.l.b16 %v3111
  %v4417 = vunpack.c.h.b16 %v3111
  %v4418 = vunpack.c.l.b16 %v3112
  %v4419 = vunpack.c.h.b16 %v3112
  %v4420 = vunpack.c.l.b16 %v3113
  %v4421 = vunpack.c.l.b16 %v3114
  %v4422 = vunpack.c.h.b16 %v3114
  %v4423 = vunpack.c.l.b16 %v3115
  %v4424 = vunpack.c.h.b16 %v3115
  %v4425 = vunpack.c.l.b16 %v3116
  %v4426 = vunpack.c.h.b16 %v3116
  %v4427 = vunpack.c.l.b16 %v3117
  %v4428 = vunpack.c.l.b16 %v3118
  %v4429 = vunpack.c.h.b16 %v3118
  %v4430 = vunpack.c.l.b16 %v3119
  %v4431 = vunpack.c.h.b16 %v3119
  %v4432 = vunpack.c.l.b16 %v3120
  %v4433 = vunpack.c.h.b16 %v3120
  %v4434 = vunpack.c.l.b16 %v3121
  %v4435 = vunpack.c.l.b16 %v3122
  %v4436 = vunpack.c.h.b16 %v3122
  %v4437 = vunpack.c.l.b16 %v3123
  %v4438 = vunpack.c.h.b16 %v3123
  %v4439 = vunpack.c.l.b16 %v3124
  %v4440 = vunpack.c.h.b16 %v3124
  %v4441 = vunpack.c.l.b16 %v3125
  %v4442 = vunpack.c.l.b16 %v3126
  %v4443 = vunpack.c.h.b16 %v3126
  %v4444 = vunpack.c.l.b16 %v3127
  %v4445 = vunpack.c.h.b16 %v3127
  %v4446 = vunpack.c.l.b16 %v3128
  %v4447 = vunpack.c.h.b16 %v3128
  %v4448 = vunpack.c.l.b16 %v3129
  %v4449 = vunpack.c.l.b16 %v3130
  %v4450 = vunpack.c.h.b16 %v3130
  %v4451 = vunpack.c.l.b16 %v3131
  %v4452 = vunpack.c.h.b16 %v3131
  %v4453 = vunpack.c.l.b16 %v3132
  %v4454 = vunpack.c.h.b16 %v3132
  %v4455 = vunpack.c.l.b16 %v3133
  %v4456 = vunpack.c.l.b16 %v3134
  %v4457 = vunpack.c.h.b16 %v3134
  %v4458 = vunpack.c.l.b16 %v3135
  %v4459 = vunpack.c.h.b16 %v3135
  %v4460 = vunpack.c.l.b16 %v3136
  %v4461 = vunpack.c.h.b16 %v3136
  %v4462 = vunpack.c.l.b16 %v3137
  %v4463 = vunpack.c.l.b16 %v3138
  %v4464 = vunpack.c.h.b16 %v3138
  %v4465 = vunpack.c.l.b16 %v3139
  %v4466 = vunpack.c.h.b16 %v3139
  %v4467 = vunpack.c.l.b16 %v3140
  %v4468 = vunpack.c.h.b16 %v3140
  %v4469 = vunpack.c.l.b16 %v3141
  %v4470 = vunpack.c.l.b16 %v3142
  %v4471 = vunpack.c.h.b16 %v3142
  %v4472 = vunpack.c.l.b16 %v3143
  %v4473 = vunpack.c.h.b16 %v3143
  %v4474 = vunpack.c.l.b16 %v3144
  %v4475 = vunpack.c.h.b16 %v3144
  %v4476 = vunpack.c.l.b16 %v3145
  %v4477 = vunpack.c.l.b16 %v3146
  %v4478 = vunpack.c.h.b16 %v3146
  %v4479 = vunpack.c.l.b16 %v3147
  %v4480 = vunpack.c.h.b16 %v3147
  %v4481 = vunpack.c.l.b16 %v3148
  %v4482 = vunpack.c.h.b16 %v3148
  %v4483 = vunpack.c.l.b16 %v3149
  %v4484 = vunpack.c.l.b16 %v3150
  %v4485 = vunpack.c.h.b16 %v3150
  %v4486 = vunpack.c.l.b16 %v3151
  %v4487 = vunpack.c.h.b16 %v3151
  %v4488 = vunpack.c.l.b16 %v3152
  %v4489 = vunpack.c.h.b16 %v3152
  %v4490 = vunpack.c.l.b16 %v3153
  %v4491 = vunpack.c.l.b16 %v3154
  %v4492 = vunpack.c.h.b16 %v3154
  %v4493 = vunpack.c.l.b16 %v3155
  %v4494 = vunpack.c.h.b16 %v3155
  %v4495 = vunpack.c.l.b16 %v3156
  %v4496 = vunpack.c.h.b16 %v3156
  %v4497 = vunpack.c.l.b16 %v3157
  %v4498 = vunpack.c.l.b16 %v3158
  %v4499 = vunpack.c.h.b16 %v3158
  %v4500 = vunpack.c.l.b16 %v3159
  %v4501 = vunpack.c.h.b16 %v3159
  %v4502 = vunpack.c.l.b16 %v3160
  %v4503 = vunpack.c.h.b16 %v3160
  %v4504 = vunpack.c.l.b16 %v3161
  %v4505 = vunpack.c.l.b16 %v3162
  %v4506 = vunpack.c.h.b16 %v3162
  %v4507 = vunpack.c.l.b16 %v3163
  %v4508 = vunpack.c.h.b16 %v3163
  %v4509 = vunpack.c.l.b16 %v3164
  %v4510 = vunpack.c.h.b16 %v3164
  %v4511 = vunpack.c.l.b16 %v3165
  %v4512 = vunpack.c.l.b16 %v3166
  %v4513 = vunpack.c.h.b16 %v3166
  %v4514 = vunpack.c.l.b16 %v3167
  %v4515 = vunpack.c.h.b16 %v3167
  %v4516 = vunpack.c.l.b16 %v3168
  %v4517 = vunpack.c.h.b16 %v3168
  %v4518 = vunpack.c.l.b16 %v3169
  %v4519 = vunpack.c.l.b16 %v3170
  %v4520 = vunpack.c.h.b16 %v3170
  %v4521 = vunpack.c.l.b16 %v3171
  %v4522 = vunpack.c.h.b16 %v3171
  %v4523 = vunpack.c.l.b16 %v3172
  %v4524 = vunpack.c.h.b16 %v3172
  %v4525 = vunpack.c.l.b16 %v3173
  %v4526 = vunpack.c.l.b16 %v3174
  %v4527 = vunpack.c.h.b16 %v3174
  %v4528 = vunpack.c.l.b16 %v3175
  %v4529 = vunpack.c.h.b16 %v3175
  %v4530 = vunpack.c.l.b16 %v3176
  %v4531 = vunpack.c.h.b16 %v3176
  %v4532 = vunpack.c.l.b16 %v3177
  %v4533 = vunpack.c.l.b16 %v3178
  %v4534 = vunpack.c.h.b16 %v3178
  %v4535 = vunpack.c.l.b16 %v3179
  %v4536 = vunpack.c.h.b16 %v3179
  %v4537 = vunpack.c.l.b16 %v3180
  %v4538 = vunpack.c.h.b16 %v3180
  %v4539 = vunpack.c.l.b16 %v3181
  %v4540 = vunpack.c.l.b16 %v3182
  %v4541 = vunpack.c.h.b16 %v3182
  %v4542 = vunpack.c.l.b16 %v3183
  %v4543 = vunpack.c.h.b16 %v3183
  %v4544 = vunpack.c.l.b16 %v3184
  %v4545 = vunpack.c.h.b16 %v3184
  %v4546 = vunpack.c.l.b16 %v3185
  %v4547 = vunpack.c.l.b16 %v3186
  %v4548 = vunpack.c.h.b16 %v3186
  %v4549 = vunpack.c.l.b16 %v3187
  %v4550 = vunpack.c.h.b16 %v3187
  %v4551 = vunpack.c.l.b16 %v3188
  %v4552 = vunpack.c.h.b16 %v3188
  %v4553 = vunpack.c.l.b16 %v3189
  %v4554 = vunpack.c.l.b16 %v3190
  %v4555 = vunpack.c.h.b16 %v3190
  %v4556 = vunpack.c.l.b16 %v3191
  %v4557 = vunpack.c.h.b16 %v3191
  %v4558 = vunpack.c.l.b16 %v3192
  %v4559 = vunpack.c.h.b16 %v3192
  %v4560 = vunpack.c.l.b16 %v3193
  %v4561 = vunpack.c.l.b16 %v3194
  %v4562 = vunpack.c.h.b16 %v3194
  %v4563 = vunpack.c.l.b16 %v3195
  %v4564 = vunpack.c.h.b16 %v3195
  %v4565 = vunpack.c.l.b16 %v3196
  %v4566 = vunpack.c.h.b16 %v3196
  %v4567 = vunpack.c.l.b16 %v3197
  %v4568 = vunpack.c.l.b16 %v3198
  %v4569 = vunpack.c.h.b16 %v3198
  %v4570 = vunpack.c.l.b16 %v3199
  %v4571 = vunpack.c.h.b16 %v3199
  %v4572 = vunpack.c.l.b16 %v3200
  %v4573 = vunpack.c.h.b16 %v3200
  %v4574 = vunpack.c.l.b16 %v3201
  %v4575 = vunpack.c.l.b16 %v3202
  %v4576 = vunpack.c.h.b16 %v3202
  %v4577 = vunpack.c.l.b16 %v3203
  %v4578 = vunpack.c.h.b16 %v3203
  %v4579 = vunpack.c.l.b16 %v3204
  %v4580 = vunpack.c.h.b16 %v3204
  %v4581 = vunpack.c.l.b16 %v3205
  %v4582 = vunpack.c.l.b16 %v3206
  %v4583 = vunpack.c.h.b16 %v3206
  %v4584 = vunpack.c.l.b16 %v3207
  %v4585 = vunpack.c.h.b16 %v3207
  %v4586 = vunpack.c.l.b16 %v3208
  %v4587 = vunpack.c.h.b16 %v3208
  %v4588 = vunpack.c.l.b16 %v3209
  %v4589 = vunpack.c.l.b16 %v3210
  %v4590 = vunpack.c.h.b16 %v3210
  %v4591 = vunpack.c.l.b16 %v3211
  %v4592 = vunpack.c.h.b16 %v3211
  %v4593 = vunpack.c.l.b16 %v3212
  %v4594 = vunpack.c.h.b16 %v3212
  %v4595 = vunpack.c.l.b16 %v3213
  %v4596 = vunpack.c.l.b16 %v3214
  %v4597 = vunpack.c.h.b16 %v3214
  %v4598 = vunpack.c.l.b16 %v3215
  %v4599 = vunpack.c.h.b16 %v3215
  %v4600 = vunpack.c.l.b16 %v3216
  %v4601 = vunpack.c.h.b16 %v3216
  %v4602 = vunpack.c.l.b16 %v3217
  %v4603 = vunpack.c.l.b16 %v3218
  %v4604 = vunpack.c.h.b16 %v3218
  %v4605 = vunpack.c.l.b16 %v3219
  %v4606 = vunpack.c.h.b16 %v3219
  %v4607 = vunpack.c.l.b16 %v3220
  %v4608 = vunpack.c.h.b16 %v3220
  %v4609 = vunpack.c.l.b16 %v3221
  %v4610 = vunpack.c.l.b16 %v3222
  %v4611 = vunpack.c.h.b16 %v3222
  %v4612 = vunpack.c.l.b16 %v3223
  %v4613 = vunpack.c.h.b16 %v3223
  %v4614 = vunpack.c.l.b16 %v3224
  %v4615 = vunpack.c.h.b16 %v3224
  %v4616 = vunpack.c.l.b16 %v3225
  %v4617 = vunpack.c.l.b16 %v3226
  %v4618 = vunpack.c.h.b16 %v3226
  %v4619 = vunpack.c.l.b16 %v3227
  %v4620 = vunpack.c.h.b16 %v3227
  %v4621 = vunpack.c.l.b16 %v3228
  %v4622 = vunpack.c.h.b16 %v3228
  %v4623 = vunpack.c.l.b16 %v3229
  %v4624 = vunpack.c.l.b16 %v3230
  %v4625 = vunpack.c.h.b16 %v3230
  %v4626 = vunpack.c.l.b16 %v3231
  %v4627 = vunpack.c.h.b16 %v3231
  %v4628 = vunpack.c.l.b16 %v3232
  %v4629 = vunpack.c.h.b16 %v3232
  %v4630 = vunpack.c.l.b16 %v3233
  %v4631 = vunpack.c.l.b16 %v3234
  %v4632 = vunpack.c.h.b16 %v3234
  %v4633 = vunpack.c.l.b16 %v3235
  %v4634 = vunpack.c.h.b16 %v3235
  %v4635 = vunpack.c.l.b16 %v3236
  %v4636 = vunpack.c.h.b16 %v3236
  %v4637 = vunpack.c.l.b16 %v3237
  %v4638 = vunpack.c.l.b16 %v3238
  %v4639 = vunpack.c.h.b16 %v3238
  %v4640 = vunpack.c.l.b16 %v3239
  %v4641 = vunpack.c.h.b16 %v3239
  %v4642 = vunpack.c.l.b16 %v3240
  %v4643 = vunpack.c.h.b16 %v3240
  %v4644 = vunpack.c.l.b16 %v3241
  %v4645 = vunpack.c.l.b16 %v3242
  %v4646 = vunpack.c.h.b16 %v3242
  %v4647 = vunpack.c.l.b16 %v3243
  %v4648 = vunpack.c.h.b16 %v3243
  %v4649 = vunpack.c.l.b16 %v3244
  %v4650 = vunpack.c.h.b16 %v3244
  %v4651 = vunpack.c.l.b16 %v3245
  %v4652 = vunpack.c.l.b16 %v3246
  %v4653 = vunpack.c.h.b16 %v3246
  %v4654 = vunpack.c.l.b16 %v3247
  %v4655 = vunpack.c.h.b16 %v3247
  %v4656 = vunpack.c.l.b16 %v3248
  %v4657 = vunpack.c.h.b16 %v3248
  %v4658 = vunpack.c.l.b16 %v3249
  %v4659 = vunpack.c.l.b16 %v3250
  %v4660 = vunpack.c.h.b16 %v3250
  %v4661 = vunpack.c.l.b16 %v3251
  %v4662 = vunpack.c.h.b16 %v3251
  %v4663 = vunpack.c.l.b16 %v3252
  %v4664 = vunpack.c.h.b16 %v3252
  %v4665 = vunpack.c.l.b16 %v3253
  %v4666 = vunpack.c.l.b16 %v3254
  %v4667 = vunpack.c.h.b16 %v3254
  %v4668 = vunpack.c.l.b16 %v3255
  %v4669 = vunpack.c.h.b16 %v3255
  %v4670 = vunpack.c.l.b16 %v3256
  %v4671 = vunpack.c.h.b16 %v3256
  %v4672 = vunpack.c.l.b16 %v3257
  %v4673 = vunpack.c.l.b16 %v3258
  %v4674 = vunpack.c.h.b16 %v3258
  %v4675 = vunpack.c.l.b16 %v3259
  %v4676 = vunpack.c.h.b16 %v3259
  %v4677 = vunpack.c.l.b16 %v3260
  %v4678 = vunpack.c.h.b16 %v3260
  %v4679 = vunpack.c.l.b16 %v3261
  %v4680 = vunpack.c.l.b16 %v3262
  %v4681 = vunpack.c.h.b16 %v3262
  %v4682 = vunpack.c.l.b16 %v3263
  %v4683 = vunpack.c.h.b16 %v3263
  %v4684 = vunpack.c.l.b16 %v3264
  %v4685 = vunpack.c.h.b16 %v3264
  %v4686 = vunpack.c.l.b16 %v3265
  %v4687 = vunpack.c.l.b16 %v3266
  %v4688 = vunpack.c.h.b16 %v3266
  %v4689 = vunpack.c.l.b16 %v3267
  %v4690 = vunpack.c.h.b16 %v3267
  %v4691 = vunpack.c.l.b16 %v3268
  %v4692 = vunpack.c.h.b16 %v3268
  %v4693 = vunpack.c.l.b16 %v3269
  %v4694 = vunpack.c.l.b16 %v3270
  %v4695 = vunpack.c.h.b16 %v3270
  %v4696 = vunpack.c.l.b16 %v3271
  %v4697 = vunpack.c.h.b16 %v3271
  %v4698 = vunpack.c.l.b16 %v3272
  %v4699 = vunpack.c.h.b16 %v3272
  %v4700 = vunpack.c.l.b16 %v3273
  %v4701 = vunpack.c.l.b16 %v3274
  %v4702 = vunpack.c.h.b16 %v3274
  %v4703 = vunpack.c.l.b16 %v3275
  %v4704 = vunpack.c.h.b16 %v3275
  %v4705 = vunpack.c.l.b16 %v3276
  %v4706 = vunpack.c.h.b16 %v3276
  %v4707 = vunpack.c.l.b16 %v3277
  %v4708 = vunpack.c.l.b16 %v3278
  %v4709 = vunpack.c.h.b16 %v3278
  %v4710 = vunpack.c.l.b16 %v3279
  %v4711 = vunpack.c.h.b16 %v3279
  %v4712 = vunpack.c.l.b16 %v3280
  %v4713 = vunpack.c.h.b16 %v3280
  %v4714 = vunpack.c.l.b16 %v3281
  %v4715 = vunpack.c.l.b16 %v3282
  %v4716 = vunpack.c.h.b16 %v3282
  %v4717 = vunpack.c.l.b16 %v3283
  %v4718 = vunpack.c.h.b16 %v3283
  %v4719 = vunpack.c.l.b16 %v3284
  %v4720 = vunpack.c.h.b16 %v3284
  %v4721 = vunpack.c.l.b16 %v3285
  %v4722 = vunpack.c.l.b16 %v3286
  %v4723 = vunpack.c.h.b16 %v3286
  %v4724 = vunpack.c.l.b16 %v3287
  %v4725 = vunpack.c.h.b16 %v3287
  %v4726 = vunpack.c.l.b16 %v3288
  %v4727 = vunpack.c.h.b16 %v3288
  %v4728 = vunpack.c.l.b16 %v3289
  %v4729 = vunpack.c.l.b16 %v3290
  %v4730 = vunpack.c.h.b16 %v3290
  %v4731 = vunpack.c.l.b16 %v3291
  %v4732 = vunpack.c.h.b16 %v3291
  %v4733 = vunpack.c.l.b16 %v3292
  %v4734 = vunpack.c.h.b16 %v3292
  %v4735 = vunpack.c.l.b16 %v3293
  %v4736 = vunpack.c.l.b16 %v3294
  %v4737 = vunpack.c.h.b16 %v3294
  %v4738 = vunpack.c.l.b16 %v3295
  %v4739 = vunpack.c.h.b16 %v3295
  %v4740 = vunpack.c.l.b16 %v3296
  %v4741 = vunpack.c.h.b16 %v3296
  %v4742 = vunpack.c.l.b16 %v3297
  %v4743 = vpack.c.b16 %v3854, %v3847
  %v4744 = vpack.c.b16 %v3855, %v3848
  %v4745 = vpack.c.b16 %v3856, %v3849
  %v4746 = vpack.c.b16 %v3857, %v3850
  %v4747 = vpack.c.b16 %v3858, %v3851
  %v4748 = vpack.c.b16 %v3859, %v3852
  %v4749 = vpack.c.b16 %v3860, %v3853
  %v4750 = vpack.c.b16 %v3868, %v3861
  %v4751 = vpack.c.b16 %v3869, %v3862
  %v4752 = vpack.c.b16 %v3870, %v3863
  %v4753 = vpack.c.b16 %v3871, %v3864
  %v4754 = vpack.c.b16 %v3872, %v3865
  %v4755 = vpack.c.b16 %v3873, %v3866
  %v4756 = vpack.c.b16 %v3874, %v3867
  %v4757 = vpack.c.b16 %v3882, %v3875
  %v4758 = vpack.c.b16 %v3883, %v3876
  %v4759 = vpack.c.b16 %v3884, %v3877
  %v4760 = vpack.c.b16 %v3885, %v3878
  %v4761 = vpack.c.b16 %v3886, %v3879
  %v4762 = vpack.c.b16 %v3887, %v3880
  %v4763 = vpack.c.b16 %v3888, %v3881
  %v4764 = vpack.c.b16 %v3896, %v3889
  %v4765 = vpack.c.b16 %v3897, %v3890
  %v4766 = vpack.c.b16 %v3898, %v3891
  %v4767 = vpack.c.b16 %v3899, %v3892
  %v4768 = vpack.c.b16 %v3900, %v3893
  %v4769 = vpack.c.b16 %v3901, %v3894
  %v4770 = vpack.c.b16 %v3902, %v3895
  %v4771 = vpack.c.b16 %v3910, %v3903
  %v4772 = vpack.c.b16 %v3911, %v3904
  %v4773 = vpack.c.b16 %v3912, %v3905
  %v4774 = vpack.c.b16 %v3913, %v3906
  %v4775 = vpack.c.b16 %v3914, %v3907
  %v4776 = vpack.c.b16 %v3915, %v3908
  %v4777 = vpack.c.b16 %v3916, %v3909
  %v4778 = vpack.c.b16 %v3924, %v3917
  %v4779 = vpack.c.b16 %v3925, %v3918
  %v4780 = vpack.c.b16 %v3926, %v3919
  %v4781 = vpack.c.b16 %v3927, %v3920
  %v4782 = vpack.c.b16 %v3928, %v3921
  %v4783 = vpack.c.b16 %v3929, %v3922
  %v4784 = vpack.c.b16 %v3930, %v3923
  %v4785 = vpack.c.b16 %v3938, %v3931
  %v4786 = vpack.c.b16 %v3939, %v3932
  %v4787 = vpack.c.b16 %v3940, %v3933
  %v4788 = vpack.c.b16 %v3941, %v3934
  %v4789 = vpack.c.b16 %v3942, %v3935
  %v4790 = vpack.c.b16 %v3943, %v3936
  %v4791 = vpack.c.b16 %v3944, %v3937
  %v4792 = vpack.c.b16 %v3952, %v3945
  %v4793 = vpack.c.b16 %v3953, %v3946
  %v4794 = vpack.c.b16 %v3954, %v3947
  %v4795 = vpack.c.b16 %v3955, %v3948
  %v4796 = vpack.c.b16 %v3956, %v3949
  %v4797 = vpack.c.b16 %v3957, %v3950
  %v4798 = vpack.c.b16 %v3958, %v3951
  %v4799 = vpack.c.b16 %v3966, %v3959
  %v4800 = vpack.c.b16 %v3967, %v3960
  %v4801 = vpack.c.b16 %v3968, %v3961
  %v4802 = vpack.c.b16 %v3969, %v3962
  %v4803 = vpack.c.b16 %v3970, %v3963
  %v4804 = vpack.c.b16 %v3971, %v3964
  %v4805 = vpack.c.b16 %v3972, %v3965
  %v4806 = vpack.c.b16 %v3980, %v3973
  %v4807 = vpack.c.b16 %v3981, %v3974
  %v4808 = vpack.c.b16 %v3982, %v3975
  %v4809 = vpack.c.b16 %v3983, %v3976
  %v4810 = vpack.c.b16 %v3984, %v3977
  %v4811 = vpack.c.b16 %v3985, %v3978
  %v4812 = vpack.c.b16 %v3986, %v3979
  %v4813 = vpack.c.b16 %v3994, %v3987
  %v4814 = vpack.c.b16 %v3995, %v3988
  %v4815 = vpack.c.b16 %v3996, %v3989
  %v4816 = vpack.c.b16 %v3997, %v3990
  %v4817 = vpack.c.b16 %v3998, %v3991
  %v4818 = vpack.c.b16 %v3999, %v3992
  %v4819 = vpack.c.b16 %v4000, %v3993
  %v4820 = vpack.c.b16 %v4008, %v4001
  %v4821 = vpack.c.b16 %v4009, %v4002
  %v4822 = vpack.c.b16 %v4010, %v4003
  %v4823 = vpack.c.b16 %v4011, %v4004
  %v4824 = vpack.c.b16 %v4012, %v4005
  %v4825 = vpack.c.b16 %v4013, %v4006
  %v4826 = vpack.c.b16 %v4014, %v4007
  %v4827 = vpack.c.b16 %v4022, %v4015
  %v4828 = vpack.c.b16 %v4023, %v4016
  %v4829 = vpack.c.b16 %v4024, %v4017
  %v4830 = vpack.c.b16 %v4025, %v4018
  %v4831 = vpack.c.b16 %v4026, %v4019
  %v4832 = vpack.c.b16 %v4027, %v4020
  %v4833 = vpack.c.b16 %v4028, %v4021
  %v4834 = vpack.c.b16 %v4036, %v4029
  %v4835 = vpack.c.b16 %v4037, %v4030
  %v4836 = vpack.c.b16 %v4038, %v4031
  %v4837 = vpack.c.b16 %v4039, %v4032
  %v4838 = vpack.c.b16 %v4040, %v4033
  %v4839 = vpack.c.b16 %v4041, %v4034
  %v4840 = vpack.c.b16 %v4042, %v4035
  %v4841 = vpack.c.b16 %v4050, %v4043
  %v4842 = vpack.c.b16 %v4051, %v4044
  %v4843 = vpack.c.b16 %v4052, %v4045
  %v4844 = vpack.c.b16 %v4053, %v4046
  %v4845 = vpack.c.b16 %v4054, %v4047
  %v4846 = vpack.c.b16 %v4055, %v4048
  %v4847 = vpack.c.b16 %v4056, %v4049
  %v4848 = vpack.c.b16 %v4064, %v4057
  %v4849 = vpack.c.b16 %v4065, %v4058
  %v4850 = vpack.c.b16 %v4066, %v4059
  %v4851 = vpack.c.b16 %v4067, %v4060
  %v4852 = vpack.c.b16 %v4068, %v4061
  %v4853 = vpack.c.b16 %v4069, %v4062
  %v4854 = vpack.c.b16 %v4070, %v4063
  %v4855 = vpack.c.b16 %v4078, %v4071
  %v4856 = vpack.c.b16 %v4079, %v4072
  %v4857 = vpack.c.b16 %v4080, %v4073
  %v4858 = vpack.c.b16 %v4081, %v4074
  %v4859 = vpack.c.b16 %v4082, %v4075
  %v4860 = vpack.c.b16 %v4083, %v4076
  %v4861 = vpack.c.b16 %v4084, %v4077
  %v4862 = vpack.c.b16 %v4092, %v4085
  %v4863 = vpack.c.b16 %v4093, %v4086
  %v4864 = vpack.c.b16 %v4094, %v4087
  %v4865 = vpack.c.b16 %v4095, %v4088
  %v4866 = vpack.c.b16 %v4096, %v4089
  %v4867 = vpack.c.b16 %v4097, %v4090
  %v4868 = vpack.c.b16 %v4098, %v4091
  %v4869 = vpack.c.b16 %v4106, %v4099
  %v4870 = vpack.c.b16 %v4107, %v4100
  %v4871 = vpack.c.b16 %v4108, %v4101
  %v4872 = vpack.c.b16 %v4109, %v4102
  %v4873 = vpack.c.b16 %v4110, %v4103
  %v4874 = vpack.c.b16 %v4111, %v4104
  %v4875 = vpack.c.b16 %v4112, %v4105
  %v4876 = vpack.c.b16 %v4120, %v4113
  %v4877 = vpack.c.b16 %v4121, %v4114
  %v4878 = vpack.c.b16 %v4122, %v4115
  %v4879 = vpack.c.b16 %v4123, %v4116
  %v4880 = vpack.c.b16 %v4124, %v4117
  %v4881 = vpack.c.b16 %v4125, %v4118
  %v4882 = vpack.c.b16 %v4126, %v4119
  %v4883 = vpack.c.b16 %v4134, %v4127
  %v4884 = vpack.c.b16 %v4135, %v4128
  %v4885 = vpack.c.b16 %v4136, %v4129
  %v4886 = vpack.c.b16 %v4137, %v4130
  %v4887 = vpack.c.b16 %v4138, %v4131
  %v4888 = vpack.c.b16 %v4139, %v4132
  %v4889 = vpack.c.b16 %v4140, %v4133
  %v4890 = vpack.c.b16 %v4148, %v4141
  %v4891 = vpack.c.b16 %v4149, %v4142
  %v4892 = vpack.c.b16 %v4150, %v4143
  %v4893 = vpack.c.b16 %v4151, %v4144
  %v4894 = vpack.c.b16 %v4152, %v4145
  %v4895 = vpack.c.b16 %v4153, %v4146
  %v4896 = vpack.c.b16 %v4154, %v4147
  %v4897 = vpack.c.b16 %v4162, %v4155
  %v4898 = vpack.c.b16 %v4163, %v4156
  %v4899 = vpack.c.b16 %v4164, %v4157
  %v4900 = vpack.c.b16 %v4165, %v4158
  %v4901 = vpack.c.b16 %v4166, %v4159
  %v4902 = vpack.c.b16 %v4167, %v4160
  %v4903 = vpack.c.b16 %v4168, %v4161
  %v4904 = vpack.c.b16 %v4176, %v4169
  %v4905 = vpack.c.b16 %v4177, %v4170
  %v4906 = vpack.c.b16 %v4178, %v4171
  %v4907 = vpack.c.b16 %v4179, %v4172
  %v4908 = vpack.c.b16 %v4180, %v4173
  %v4909 = vpack.c.b16 %v4181, %v4174
  %v4910 = vpack.c.b16 %v4182, %v4175
  %v4911 = vpack.c.b16 %v4190, %v4183
  %v4912 = vpack.c.b16 %v4191, %v4184
  %v4913 = vpack.c.b16 %v4192, %v4185
  %v4914 = vpack.c.b16 %v4193, %v4186
  %v4915 = vpack.c.b16 %v4194, %v4187
  %v4916 = vpack.c.b16 %v4195, %v4188
  %v4917 = vpack.c.b16 %v4196, %v4189
  %v4918 = vpack.c.b16 %v4204, %v4197
  %v4919 = vpack.c.b16 %v4205, %v4198
  %v4920 = vpack.c.b16 %v4206, %v4199
  %v4921 = vpack.c.b16 %v4207, %v4200
  %v4922 = vpack.c.b16 %v4208, %v4201
  %v4923 = vpack.c.b16 %v4209, %v4202
  %v4924 = vpack.c.b16 %v4210, %v4203
  %v4925 = vpack.c.b16 %v4218, %v4211
  %v4926 = vpack.c.b16 %v4219, %v4212
  %v4927 = vpack.c.b16 %v4220, %v4213
  %v4928 = vpack.c.b16 %v4221, %v4214
  %v4929 = vpack.c.b16 %v4222, %v4215
  %v4930 = vpack.c.b16 %v4223, %v4216
  %v4931 = vpack.c.b16 %v4224, %v4217
  %v4932 = vpack.c.b16 %v4232, %v4225
  %v4933 = vpack.c.b16 %v4233, %v4226
  %v4934 = vpack.c.b16 %v4234, %v4227
  %v4935 = vpack.c.b16 %v4235, %v4228
  %v4936 = vpack.c.b16 %v4236, %v4229
  %v4937 = vpack.c.b16 %v4237, %v4230
  %v4938 = vpack.c.b16 %v4238, %v4231
  %v4939 = vpack.c.b16 %v4246, %v4239
  %v4940 = vpack.c.b16 %v4247, %v4240
  %v4941 = vpack.c.b16 %v4248, %v4241
  %v4942 = vpack.c.b16 %v4249, %v4242
  %v4943 = vpack.c.b16 %v4250, %v4243
  %v4944 = vpack.c.b16 %v4251, %v4244
  %v4945 = vpack.c.b16 %v4252, %v4245
  %v4946 = vpack.c.b16 %v4260, %v4253
  %v4947 = vpack.c.b16 %v4261, %v4254
  %v4948 = vpack.c.b16 %v4262, %v4255
  %v4949 = vpack.c.b16 %v4263, %v4256
  %v4950 = vpack.c.b16 %v4264, %v4257
  %v4951 = vpack.c.b16 %v4265, %v4258
  %v4952 = vpack.c.b16 %v4266, %v4259
  %v4953 = vpack.c.b16 %v4274, %v4267
  %v4954 = vpack.c.b16 %v4275, %v4268
  %v4955 = vpack.c.b16 %v4276, %v4269
  %v4956 = vpack.c.b16 %v4277, %v4270
  %v4957 = vpack.c.b16 %v4278, %v4271
  %v4958 = vpack.c.b16 %v4279, %v4272
  %v4959 = vpack.c.b16 %v4280, %v4273
  %v4960 = vpack.c.b16 %v4288, %v4281
  %v4961 = vpack.c.b16 %v4289, %v4282
  %v4962 = vpack.c.b16 %v4290, %v4283
  %v4963 = vpack.c.b16 %v4291, %v4284
  %v4964 = vpack.c.b16 %v4292, %v4285
  %v4965 = vpack.c.b16 %v4293, %v4286
  %v4966 = vpack.c.b16 %v4294, %v4287
  %v4967 = vpack.c.b16 %v4302, %v4295
  %v4968 = vpack.c.b16 %v4303, %v4296
  %v4969 = vpack.c.b16 %v4304, %v4297
  %v4970 = vpack.c.b16 %v4305, %v4298
  %v4971 = vpack.c.b16 %v4306, %v4299
  %v4972 = vpack.c.b16 %v4307, %v4300
  %v4973 = vpack.c.b16 %v4308, %v4301
  %v4974 = vpack.c.b16 %v4316, %v4309
  %v4975 = vpack.c.b16 %v4317, %v4310
  %v4976 = vpack.c.b16 %v4318, %v4311
  %v4977 = vpack.c.b16 %v4319, %v4312
  %v4978 = vpack.c.b16 %v4320, %v4313
  %v4979 = vpack.c.b16 %v4321, %v4314
  %v4980 = vpack.c.b16 %v4322, %v4315
  %v4981 = vpack.c.b16 %v4330, %v4323
  %v4982 = vpack.c.b16 %v4331, %v4324
  %v4983 = vpack.c.b16 %v4332, %v4325
  %v4984 = vpack.c.b16 %v4333, %v4326
  %v4985 = vpack.c.b16 %v4334, %v4327
  %v4986 = vpack.c.b16 %v4335, %v4328
  %v4987 = vpack.c.b16 %v4336, %v4329
  %v4988 = vpack.c.b16 %v4344, %v4337
  %v4989 = vpack.c.b16 %v4345, %v4338
  %v4990 = vpack.c.b16 %v4346, %v4339
  %v4991 = vpack.c.b16 %v4347, %v4340
  %v4992 = vpack.c.b16 %v4348, %v4341
  %v4993 = vpack.c.b16 %v4349, %v4342
  %v4994 = vpack.c.b16 %v4350, %v4343
  %v4995 = vpack.c.b16 %v4358, %v4351
  %v4996 = vpack.c.b16 %v4359, %v4352
  %v4997 = vpack.c.b16 %v4360, %v4353
  %v4998 = vpack.c.b16 %v4361, %v4354
  %v4999 = vpack.c.b16 %v4362, %v4355
  %v5000 = vpack.c.b16 %v4363, %v4356
  %v5001 = vpack.c.b16 %v4364, %v4357
  %v5002 = vpack.c.b16 %v4372, %v4365
  %v5003 = vpack.c.b16 %v4373, %v4366
  %v5004 = vpack.c.b16 %v4374, %v4367
  %v5005 = vpack.c.b16 %v4375, %v4368
  %v5006 = vpack.c.b16 %v4376, %v4369
  %v5007 = vpack.c.b16 %v4377, %v4370
  %v5008 = vpack.c.b16 %v4378, %v4371
  %v5009 = vpack.c.b16 %v4386, %v4379
  %v5010 = vpack.c.b16 %v4387, %v4380
  %v5011 = vpack.c.b16 %v4388, %v4381
  %v5012 = vpack.c.b16 %v4389, %v4382
  %v5013 = vpack.c.b16 %v4390, %v4383
  %v5014 = vpack.c.b16 %v4391, %v4384
  %v5015 = vpack.c.b16 %v4392, %v4385
  %v5016 = vpack.c.b16 %v4400, %v4393
  %v5017 = vpack.c.b16 %v4401, %v4394
  %v5018 = vpack.c.b16 %v4402, %v4395
  %v5019 = vpack.c.b16 %v4403, %v4396
  %v5020 = vpack.c.b16 %v4404, %v4397
  %v5021 = vpack.c.b16 %v4405, %v4398
  %v5022 = vpack.c.b16 %v4406, %v4399
  %v5023 = vpack.c.b16 %v4414, %v4407
  %v5024 = vpack.c.b16 %v4415, %v4408
  %v5025 = vpack.c.b16 %v4416, %v4409
  %v5026 = vpack.c.b16 %v4417, %v4410
  %v5027 = vpack.c.b16 %v4418, %v4411
  %v5028 = vpack.c.b16 %v4419, %v4412
  %v5029 = vpack.c.b16 %v4420, %v4413
  %v5030 = vpack.c.b16 %v4428, %v4421
  %v5031 = vpack.c.b16 %v4429, %v4422
  %v5032 = vpack.c.b16 %v4430, %v4423
  %v5033 = vpack.c.b16 %v4431, %v4424
  %v5034 = vpack.c.b16 %v4432, %v4425
  %v5035 = vpack.c.b16 %v4433, %v4426
  %v5036 = vpack.c.b16 %v4434, %v4427
  %v5037 = vpack.c.b16 %v4442, %v4435
  %v5038 = vpack.c.b16 %v4443, %v4436
  %v5039 = vpack.c.b16 %v4444, %v4437
  %v5040 = vpack.c.b16 %v4445, %v4438
  %v5041 = vpack.c.b16 %v4446, %v4439
  %v5042 = vpack.c.b16 %v4447, %v4440
  %v5043 = vpack.c.b16 %v4448, %v4441
  %v5044 = vpack.c.b16 %v4456, %v4449
  %v5045 = vpack.c.b16 %v4457, %v4450
  %v5046 = vpack.c.b16 %v4458, %v4451
  %v5047 = vpack.c.b16 %v4459, %v4452
  %v5048 = vpack.c.b16 %v4460, %v4453
  %v5049 = vpack.c.b16 %v4461, %v4454
  %v5050 = vpack.c.b16 %v4462, %v4455
  %v5051 = vpack.c.b16 %v4470, %v4463
  %v5052 = vpack.c.b16 %v4471, %v4464
  %v5053 = vpack.c.b16 %v4472, %v4465
  %v5054 = vpack.c.b16 %v4473, %v4466
  %v5055 = vpack.c.b16 %v4474, %v4467
  %v5056 = vpack.c.b16 %v4475, %v4468
  %v5057 = vpack.c.b16 %v4476, %v4469
  %v5058 = vpack.c.b16 %v4484, %v4477
  %v5059 = vpack.c.b16 %v4485, %v4478
  %v5060 = vpack.c.b16 %v4486, %v4479
  %v5061 = vpack.c.b16 %v4487, %v4480
  %v5062 = vpack.c.b16 %v4488, %v4481
  %v5063 = vpack.c.b16 %v4489, %v4482
  %v5064 = vpack.c.b16 %v4490, %v4483
  %v5065 = vpack.c.b16 %v4498, %v4491
  %v5066 = vpack.c.b16 %v4499, %v4492
  %v5067 = vpack.c.b16 %v4500, %v4493
  %v5068 = vpack.c.b16 %v4501, %v4494
  %v5069 = vpack.c.b16 %v4502, %v4495
  %v5070 = vpack.c.b16 %v4503, %v4496
  %v5071 = vpack.c.b16 %v4504, %v4497
  %v5072 = vpack.c.b16 %v4512, %v4505
  %v5073 = vpack.c.b16 %v4513, %v4506
  %v5074 = vpack.c.b16 %v4514, %v4507
  %v5075 = vpack.c.b16 %v4515, %v4508
  %v5076 = vpack.c.b16 %v4516, %v4509
  %v5077 = vpack.c.b16 %v4517, %v4510
  %v5078 = vpack.c.b16 %v4518, %v4511
  %v5079 = vpack.c.b16 %v4526, %v4519
  %v5080 = vpack.c.b16 %v4527, %v4520
  %v5081 = vpack.c.b16 %v4528, %v4521
  %v5082 = vpack.c.b16 %v4529, %v4522
  %v5083 = vpack.c.b16 %v4530, %v4523
  %v5084 = vpack.c.b16 %v4531, %v4524
  %v5085 = vpack.c.b16 %v4532, %v4525
  %v5086 = vpack.c.b16 %v4540, %v4533
  %v5087 = vpack.c.b16 %v4541, %v4534
  %v5088 = vpack.c.b16 %v4542, %v4535
  %v5089 = vpack.c.b16 %v4543, %v4536
  %v5090 = vpack.c.b16 %v4544, %v4537
  %v5091 = vpack.c.b16 %v4545, %v4538
  %v5092 = vpack.c.b16 %v4546, %v4539
  %v5093 = vpack.c.b16 %v4554, %v4547
  %v5094 = vpack.c.b16 %v4555, %v4548
  %v5095 = vpack.c.b16 %v4556, %v4549
  %v5096 = vpack.c.b16 %v4557, %v4550
  %v5097 = vpack.c.b16 %v4558, %v4551
  %v5098 = vpack.c.b16 %v4559, %v4552
  %v5099 = vpack.c.b16 %v4560, %v4553
  %v5100 = vpack.c.b16 %v4568, %v4561
  %v5101 = vpack.c.b16 %v4569, %v4562
  %v5102 = vpack.c.b16 %v4570, %v4563
  %v5103 = vpack.c.b16 %v4571, %v4564
  %v5104 = vpack.c.b16 %v4572, %v4565
  %v5105 = vpack.c.b16 %v4573, %v4566
  %v5106 = vpack.c.b16 %v4574, %v4567
  %v5107 = vpack.c.b16 %v4582, %v4575
  %v5108 = vpack.c.b16 %v4583, %v4576
  %v5109 = vpack.c.b16 %v4584, %v4577
  %v5110 = vpack.c.b16 %v4585, %v4578
  %v5111 = vpack.c.b16 %v4586, %v4579
  %v5112 = vpack.c.b16 %v4587, %v4580
  %v5113 = vpack.c.b16 %v4588, %v4581
  %v5114 = vpack.c.b16 %v4596, %v4589
  %v5115 = vpack.c.b16 %v4597, %v4590
  %v5116 = vpack.c.b16 %v4598, %v4591
  %v5117 = vpack.c.b16 %v4599, %v4592
  %v5118 = vpack.c.b16 %v4600, %v4593
  %v5119 = vpack.c.b16 %v4601, %v4594
  %v5120 = vpack.c.b16 %v4602, %v4595
  %v5121 = vpack.c.b16 %v4610, %v4603
  %v5122 = vpack.c.b16 %v4611, %v4604
  %v5123 = vpack.c.b16 %v4612, %v4605
  %v5124 = vpack.c.b16 %v4613, %v4606
  %v5125 = vpack.c.b16 %v4614, %v4607
  %v5126 = vpack.c.b16 %v4615, %v4608
  %v5127 = vpack.c.b16 %v4616, %v4609
  %v5128 = vpack.c.b16 %v4624, %v4617
  %v5129 = vpack.c.b16 %v4625, %v4618
  %v5130 = vpack.c.b16 %v4626, %v4619
  %v5131 = vpack.c.b16 %v4627, %v4620
  %v5132 = vpack.c.b16 %v4628, %v4621
  %v5133 = vpack.c.b16 %v4629, %v4622
  %v5134 = vpack.c.b16 %v4630, %v4623
  %v5135 = vpack.c.b16 %v4638, %v4631
  %v5136 = vpack.c.b16 %v4639, %v4632
  %v5137 = vpack.c.b16 %v4640, %v4633
  %v5138 = vpack.c.b16 %v4641, %v4634
  %v5139 = vpack.c.b16 %v4642, %v4635
  %v5140 = vpack.c.b16 %v4643, %v4636
  %v5141 = vpack.c.b16 %v4644, %v4637
  %v5142 = vpack.c.b16 %v4652, %v4645
  %v5143 = vpack.c.b16 %v4653, %v4646
  %v5144 = vpack.c.b16 %v4654, %v4647
  %v5145 = vpack.c.b16 %v4655, %v4648
  %v5146 = vpack.c.b16 %v4656, %v4649
  %v5147 = vpack.c.b16 %v4657, %v4650
  %v5148 = vpack.c.b16 %v4658, %v4651
  %v5149 = vpack.c.b16 %v4666, %v4659
  %v5150 = vpack.c.b16 %v4667, %v4660
  %v5151 = vpack.c.b16 %v4668, %v4661
  %v5152 = vpack.c.b16 %v4669, %v4662
  %v5153 = vpack.c.b16 %v4670, %v4663
  %v5154 = vpack.c.b16 %v4671, %v4664
  %v5155 = vpack.c.b16 %v4672, %v4665
  %v5156 = vpack.c.b16 %v4680, %v4673
  %v5157 = vpack.c.b16 %v4681, %v4674
  %v5158 = vpack.c.b16 %v4682, %v4675
  %v5159 = vpack.c.b16 %v4683, %v4676
  %v5160 = vpack.c.b16 %v4684, %v4677
  %v5161 = vpack.c.b16 %v4685, %v4678
  %v5162 = vpack.c.b16 %v4686, %v4679
  %v5163 = vpack.c.b16 %v4694, %v4687
  %v5164 = vpack.c.b16 %v4695, %v4688
  %v5165 = vpack.c.b16 %v4696, %v4689
  %v5166 = vpack.c.b16 %v4697, %v4690
  %v5167 = vpack.c.b16 %v4698, %v4691
  %v5168 = vpack.c.b16 %v4699, %v4692
  %v5169 = vpack.c.b16 %v4700, %v4693
  %v5170 = vpack.c.b16 %v4708, %v4701
  %v5171 = vpack.c.b16 %v4709, %v4702
  %v5172 = vpack.c.b16 %v4710, %v4703
  %v5173 = vpack.c.b16 %v4711, %v4704
  %v5174 = vpack.c.b16 %v4712, %v4705
  %v5175 = vpack.c.b16 %v4713, %v4706
  %v5176 = vpack.c.b16 %v4714, %v4707
  %v5177 = vpack.c.b16 %v4722, %v4715
  %v5178 = vpack.c.b16 %v4723, %v4716
  %v5179 = vpack.c.b16 %v4724, %v4717
  %v5180 = vpack.c.b16 %v4725, %v4718
  %v5181 = vpack.c.b16 %v4726, %v4719
  %v5182 = vpack.c.b16 %v4727, %v4720
  %v5183 = vpack.c.b16 %v4728, %v4721
  %v5184 = vpack.c.b16 %v4736, %v4729
  %v5185 = vpack.c.b16 %v4737, %v4730
  %v5186 = vpack.c.b16 %v4738, %v4731
  %v5187 = vpack.c.b16 %v4739, %v4732
  %v5188 = vpack.c.b16 %v4740, %v4733
  %v5189 = vpack.c.b16 %v4741, %v4734
  %v5190 = vpack.c.b16 %v4742, %v4735
  %5639 = vmatprep.subr.bf16.mxu0 %v4793
  %5640 = vmatpush1.bf16.msra.mxu0 %v4792
  %5641 = vmatprep.subr.bf16.mxu0 %v4786
  %5642 = vmatpush1.bf16.msra.mxu0 %v4785
  %5643 = vmatprep.subr.bf16.mxu0 %v4779
  %5644 = vmatpush1.bf16.msra.mxu0 %v4778
  %5645 = vmatprep.subr.bf16.mxu0 %v4772
  %5646 = vmatpush1.bf16.msra.mxu0 %v4771
  %5647 = vmatprep.subr.bf16.mxu0 %v4765
  %5648 = vmatpush1.bf16.msra.mxu0 %v4764
  %5649 = vmatprep.subr.bf16.mxu0 %v4758
  %5650 = vmatpush1.bf16.msra.mxu0 %v4757
  %5651 = vmatprep.subr.bf16.mxu0 %v4751
  %5652 = vmatpush1.bf16.msra.mxu0 %v4750
  %5653 = vmatprep.subr.bf16.mxu0 %v4744
  %5654 = vmatpush1.bf16.msra.mxu0 %v4743
  %5655 = vmatprep.subr.bf16.mxu0 %v4849
  %5656 = vmatpush2.bf16.msra.mxu0 %v4848
  %5657 = vmatprep.subr.bf16.mxu0 %v4842
  %5658 = vmatpush2.bf16.msra.mxu0 %v4841
  %5659 = vmatprep.subr.bf16.mxu0 %v4835
  %5660 = vmatpush2.bf16.msra.mxu0 %v4834
  %5661 = vmatprep.subr.bf16.mxu0 %v4828
  %5662 = vmatpush2.bf16.msra.mxu0 %v4827
  %5663 = vmatprep.subr.bf16.mxu0 %v4821
  %5664 = vmatpush2.bf16.msra.mxu0 %v4820
  %5665 = vmatprep.subr.bf16.mxu0 %v4814
  %5666 = vmatpush2.bf16.msra.mxu0 %v4813
  %5667 = vmatprep.subr.bf16.mxu0 %v4807
  %5668 = vmatpush2.bf16.msra.mxu0 %v4806
  %5669 = vmatprep.subr.bf16.mxu0 %v4800
  %5670 = vmatpush2.bf16.msra.mxu0 %v4799
  %5671 = vmatprep.mubr.bf16.mxu0 %v2779
  %5672 = vmatmul.mubr.bf16.gmra.mxu0 %v2778
  %v5673 = vpop.f32.mrf.mxu0
  %v5674 = vadd.f32 %v3303, %v5673
  %v5675 = vpop.f32.mrf.mxu0
  %v5676 = vadd.f32 %v3307, %v5675
  %v5677 = vpop.f32.mrf.mxu0
  %v5678 = vadd.f32 %v3303, %v5677
  %v5679 = vpop.f32.mrf.mxu0
  %v5680 = vadd.f32 %v3307, %v5679
  %5681 = vdwg.mxu0
  %5682 = vmatprep.subr.bf16.mxu0 %v4905
  %5683 = vmatpush1.bf16.msra.mxu0 %v4904
  %5684 = vmatprep.subr.bf16.mxu0 %v4898
  %5685 = vmatpush1.bf16.msra.mxu0 %v4897
  %5686 = vmatprep.subr.bf16.mxu0 %v4891
  %5687 = vmatpush1.bf16.msra.mxu0 %v4890
  %5688 = vmatprep.subr.bf16.mxu0 %v4884
  %5689 = vmatpush1.bf16.msra.mxu0 %v4883
  %5690 = vmatprep.subr.bf16.mxu0 %v4877
  %5691 = vmatpush1.bf16.msra.mxu0 %v4876
  %5692 = vmatprep.subr.bf16.mxu0 %v4870
  %5693 = vmatpush1.bf16.msra.mxu0 %v4869
  %5694 = vmatprep.subr.bf16.mxu0 %v4863
  %5695 = vmatpush1.bf16.msra.mxu0 %v4862
  %5696 = vmatprep.subr.bf16.mxu0 %v4856
  %5697 = vmatpush1.bf16.msra.mxu0 %v4855
  %5698 = vmatprep.subr.bf16.mxu0 %v4961
  %5699 = vmatpush2.bf16.msra.mxu0 %v4960
  %5700 = vmatprep.subr.bf16.mxu0 %v4954
  %5701 = vmatpush2.bf16.msra.mxu0 %v4953
  %5702 = vmatprep.subr.bf16.mxu0 %v4947
  %5703 = vmatpush2.bf16.msra.mxu0 %v4946
  %5704 = vmatprep.subr.bf16.mxu0 %v4940
  %5705 = vmatpush2.bf16.msra.mxu0 %v4939
  %5706 = vmatprep.subr.bf16.mxu0 %v4933
  %5707 = vmatpush2.bf16.msra.mxu0 %v4932
  %5708 = vmatprep.subr.bf16.mxu0 %v4926
  %5709 = vmatpush2.bf16.msra.mxu0 %v4925
  %5710 = vmatprep.subr.bf16.mxu0 %v4919
  %5711 = vmatpush2.bf16.msra.mxu0 %v4918
  %5712 = vmatprep.subr.bf16.mxu0 %v4912
  %5713 = vmatpush2.bf16.msra.mxu0 %v4911
  %5714 = vmatprep.mubr.bf16.mxu0 %v2781
  %5715 = vmatmul.mubr.bf16.gmra.mxu0 %v2780
  %v5716 = vpop.f32.mrf.mxu0
  %v5717 = vadd.f32 %v5674, %v5716
  %v5718 = vpop.f32.mrf.mxu0
  %v5719 = vadd.f32 %v5676, %v5718
  %v5720 = vpop.f32.mrf.mxu0
  %v5721 = vadd.f32 %v5678, %v5720
  %v5722 = vpop.f32.mrf.mxu0
  %v5723 = vadd.f32 %v5680, %v5722
  %5724 = vdwg.mxu0
  %5725 = vmatprep.subr.bf16.mxu0 %v5017
  %5726 = vmatpush1.bf16.msra.mxu0 %v5016
  %5727 = vmatprep.subr.bf16.mxu0 %v5010
  %5728 = vmatpush1.bf16.msra.mxu0 %v5009
  %5729 = vmatprep.subr.bf16.mxu0 %v5003
  %5730 = vmatpush1.bf16.msra.mxu0 %v5002
  %5731 = vmatprep.subr.bf16.mxu0 %v4996
  %5732 = vmatpush1.bf16.msra.mxu0 %v4995
  %5733 = vmatprep.subr.bf16.mxu0 %v4989
  %5734 = vmatpush1.bf16.msra.mxu0 %v4988
  %5735 = vmatprep.subr.bf16.mxu0 %v4982
  %5736 = vmatpush1.bf16.msra.mxu0 %v4981
  %5737 = vmatprep.subr.bf16.mxu0 %v4975
  %5738 = vmatpush1.bf16.msra.mxu0 %v4974
  %5739 = vmatprep.subr.bf16.mxu0 %v4968
  %5740 = vmatpush1.bf16.msra.mxu0 %v4967
  %5741 = vmatprep.subr.bf16.mxu0 %v5073
  %5742 = vmatpush2.bf16.msra.mxu0 %v5072
  %5743 = vmatprep.subr.bf16.mxu0 %v5066
  %5744 = vmatpush2.bf16.msra.mxu0 %v5065
  %5745 = vmatprep.subr.bf16.mxu0 %v5059
  %5746 = vmatpush2.bf16.msra.mxu0 %v5058
  %5747 = vmatprep.subr.bf16.mxu0 %v5052
  %5748 = vmatpush2.bf16.msra.mxu0 %v5051
  %5749 = vmatprep.subr.bf16.mxu0 %v5045
  %5750 = vmatpush2.bf16.msra.mxu0 %v5044
  %5751 = vmatprep.subr.bf16.mxu0 %v5038
  %5752 = vmatpush2.bf16.msra.mxu0 %v5037
  %5753 = vmatprep.subr.bf16.mxu0 %v5031
  %5754 = vmatpush2.bf16.msra.mxu0 %v5030
  %5755 = vmatprep.subr.bf16.mxu0 %v5024
  %5756 = vmatpush2.bf16.msra.mxu0 %v5023
  %5757 = vmatprep.mubr.bf16.mxu0 %v2783
  %5758 = vmatmul.mubr.bf16.gmra.mxu0 %v2782
  %v5759 = vpop.f32.mrf.mxu0
  %v5760 = vadd.f32 %v5717, %v5759
  %v5761 = vpop.f32.mrf.mxu0
  %v5762 = vadd.f32 %v5719, %v5761
  %v5763 = vpop.f32.mrf.mxu0
  %v5764 = vadd.f32 %v5721, %v5763
  %v5765 = vpop.f32.mrf.mxu0
  %v5766 = vadd.f32 %v5723, %v5765
  %5767 = vdwg.mxu0
  %5768 = vmatprep.subr.bf16.mxu0 %v5129
  %5769 = vmatpush1.bf16.msra.mxu0 %v5128
  %5770 = vmatprep.subr.bf16.mxu0 %v5122
  %5771 = vmatpush1.bf16.msra.mxu0 %v5121
  %5772 = vmatprep.subr.bf16.mxu0 %v5115
  %5773 = vmatpush1.bf16.msra.mxu0 %v5114
  %5774 = vmatprep.subr.bf16.mxu0 %v5108
  %5775 = vmatpush1.bf16.msra.mxu0 %v5107
  %5776 = vmatprep.subr.bf16.mxu0 %v5101
  %5777 = vmatpush1.bf16.msra.mxu0 %v5100
  %5778 = vmatprep.subr.bf16.mxu0 %v5094
  %5779 = vmatpush1.bf16.msra.mxu0 %v5093
  %5780 = vmatprep.subr.bf16.mxu0 %v5087
  %5781 = vmatpush1.bf16.msra.mxu0 %v5086
  %5782 = vmatprep.subr.bf16.mxu0 %v5080
  %5783 = vmatpush1.bf16.msra.mxu0 %v5079
  %5784 = vmatprep.subr.bf16.mxu0 %v5185
  %5785 = vmatpush2.bf16.msra.mxu0 %v5184
  %5786 = vmatprep.subr.bf16.mxu0 %v5178
  %5787 = vmatpush2.bf16.msra.mxu0 %v5177
  %5788 = vmatprep.subr.bf16.mxu0 %v5171
  %5789 = vmatpush2.bf16.msra.mxu0 %v5170
  %5790 = vmatprep.subr.bf16.mxu0 %v5164
  %5791 = vmatpush2.bf16.msra.mxu0 %v5163
  %5792 = vmatprep.subr.bf16.mxu0 %v5157
  %5793 = vmatpush2.bf16.msra.mxu0 %v5156
  %5794 = vmatprep.subr.bf16.mxu0 %v5150
  %5795 = vmatpush2.bf16.msra.mxu0 %v5149
  %5796 = vmatprep.subr.bf16.mxu0 %v5143
  %5797 = vmatpush2.bf16.msra.mxu0 %v5142
  %5798 = vmatprep.subr.bf16.mxu0 %v5136
  %5799 = vmatpush2.bf16.msra.mxu0 %v5135
  %5800 = vmatprep.mubr.bf16.mxu0 %v2785
  %5801 = vmatmul.mubr.bf16.gmra.mxu0 %v2784
  %v5802 = vpop.f32.mrf.mxu0
  %v5803 = vadd.f32 %v5760, %v5802
  %v5804 = vpop.f32.mrf.mxu0
  %v5805 = vadd.f32 %v5762, %v5804
  %v5806 = vpop.f32.mrf.mxu0
  %v5807 = vadd.f32 %v5764, %v5806
  %v5808 = vpop.f32.mrf.mxu0
  %v5809 = vadd.f32 %v5766, %v5808
  %5810 = vdwg.mxu0
  %5811 = vmatprep.subr.bf16.mxu0 %v4795
  %5812 = vmatpush1.bf16.msra.mxu0 %v4794
  %5813 = vmatprep.subr.bf16.mxu0 %v4788
  %5814 = vmatpush1.bf16.msra.mxu0 %v4787
  %5815 = vmatprep.subr.bf16.mxu0 %v4781
  %5816 = vmatpush1.bf16.msra.mxu0 %v4780
  %5817 = vmatprep.subr.bf16.mxu0 %v4774
  %5818 = vmatpush1.bf16.msra.mxu0 %v4773
  %5819 = vmatprep.subr.bf16.mxu0 %v4767
  %5820 = vmatpush1.bf16.msra.mxu0 %v4766
  %5821 = vmatprep.subr.bf16.mxu0 %v4760
  %5822 = vmatpush1.bf16.msra.mxu0 %v4759
  %5823 = vmatprep.subr.bf16.mxu0 %v4753
  %5824 = vmatpush1.bf16.msra.mxu0 %v4752
  %5825 = vmatprep.subr.bf16.mxu0 %v4746
  %5826 = vmatpush1.bf16.msra.mxu0 %v4745
  %5827 = vmatprep.subr.bf16.mxu0 %v4851
  %5828 = vmatpush2.bf16.msra.mxu0 %v4850
  %5829 = vmatprep.subr.bf16.mxu0 %v4844
  %5830 = vmatpush2.bf16.msra.mxu0 %v4843
  %5831 = vmatprep.subr.bf16.mxu0 %v4837
  %5832 = vmatpush2.bf16.msra.mxu0 %v4836
  %5833 = vmatprep.subr.bf16.mxu0 %v4830
  %5834 = vmatpush2.bf16.msra.mxu0 %v4829
  %5835 = vmatprep.subr.bf16.mxu0 %v4823
  %5836 = vmatpush2.bf16.msra.mxu0 %v4822
  %5837 = vmatprep.subr.bf16.mxu0 %v4816
  %5838 = vmatpush2.bf16.msra.mxu0 %v4815
  %5839 = vmatprep.subr.bf16.mxu0 %v4809
  %5840 = vmatpush2.bf16.msra.mxu0 %v4808
  %5841 = vmatprep.subr.bf16.mxu0 %v4802
  %5842 = vmatpush2.bf16.msra.mxu0 %v4801
  %5843 = vmatprep.mubr.bf16.mxu0 %v2779
  %5844 = vmatmul.mubr.bf16.gmra.mxu0 %v2778
  %v5845 = vpop.f32.mrf.mxu0
  %v5846 = vadd.f32 %v3311, %v5845
  %v5847 = vpop.f32.mrf.mxu0
  %v5848 = vadd.f32 %v3315, %v5847
  %v5849 = vpop.f32.mrf.mxu0
  %v5850 = vadd.f32 %v3311, %v5849
  %v5851 = vpop.f32.mrf.mxu0
  %v5852 = vadd.f32 %v3315, %v5851
  %5853 = vdwg.mxu0
  %5854 = vmatprep.subr.bf16.mxu0 %v4907
  %5855 = vmatpush1.bf16.msra.mxu0 %v4906
  %5856 = vmatprep.subr.bf16.mxu0 %v4900
  %5857 = vmatpush1.bf16.msra.mxu0 %v4899
  %5858 = vmatprep.subr.bf16.mxu0 %v4893
  %5859 = vmatpush1.bf16.msra.mxu0 %v4892
  %5860 = vmatprep.subr.bf16.mxu0 %v4886
  %5861 = vmatpush1.bf16.msra.mxu0 %v4885
  %5862 = vmatprep.subr.bf16.mxu0 %v4879
  %5863 = vmatpush1.bf16.msra.mxu0 %v4878
  %5864 = vmatprep.subr.bf16.mxu0 %v4872
  %5865 = vmatpush1.bf16.msra.mxu0 %v4871
  %5866 = vmatprep.subr.bf16.mxu0 %v4865
  %5867 = vmatpush1.bf16.msra.mxu0 %v4864
  %5868 = vmatprep.subr.bf16.mxu0 %v4858
  %5869 = vmatpush1.bf16.msra.mxu0 %v4857
  %5870 = vmatprep.subr.bf16.mxu0 %v4963
  %5871 = vmatpush2.bf16.msra.mxu0 %v4962
  %5872 = vmatprep.subr.bf16.mxu0 %v4956
  %5873 = vmatpush2.bf16.msra.mxu0 %v4955
  %5874 = vmatprep.subr.bf16.mxu0 %v4949
  %5875 = vmatpush2.bf16.msra.mxu0 %v4948
  %5876 = vmatprep.subr.bf16.mxu0 %v4942
  %5877 = vmatpush2.bf16.msra.mxu0 %v4941
  %5878 = vmatprep.subr.bf16.mxu0 %v4935
  %5879 = vmatpush2.bf16.msra.mxu0 %v4934
  %5880 = vmatprep.subr.bf16.mxu0 %v4928
  %5881 = vmatpush2.bf16.msra.mxu0 %v4927
  %5882 = vmatprep.subr.bf16.mxu0 %v4921
  %5883 = vmatpush2.bf16.msra.mxu0 %v4920
  %5884 = vmatprep.subr.bf16.mxu0 %v4914
  %5885 = vmatpush2.bf16.msra.mxu0 %v4913
  %5886 = vmatprep.mubr.bf16.mxu0 %v2781
  %5887 = vmatmul.mubr.bf16.gmra.mxu0 %v2780
  %v5888 = vpop.f32.mrf.mxu0
  %v5889 = vadd.f32 %v5846, %v5888
  %v5890 = vpop.f32.mrf.mxu0
  %v5891 = vadd.f32 %v5848, %v5890
  %v5892 = vpop.f32.mrf.mxu0
  %v5893 = vadd.f32 %v5850, %v5892
  %v5894 = vpop.f32.mrf.mxu0
  %v5895 = vadd.f32 %v5852, %v5894
  %5896 = vdwg.mxu0
  %5897 = vmatprep.subr.bf16.mxu0 %v5019
  %5898 = vmatpush1.bf16.msra.mxu0 %v5018
  %5899 = vmatprep.subr.bf16.mxu0 %v5012
  %5900 = vmatpush1.bf16.msra.mxu0 %v5011
  %5901 = vmatprep.subr.bf16.mxu0 %v5005
  %5902 = vmatpush1.bf16.msra.mxu0 %v5004
  %5903 = vmatprep.subr.bf16.mxu0 %v4998
  %5904 = vmatpush1.bf16.msra.mxu0 %v4997
  %5905 = vmatprep.subr.bf16.mxu0 %v4991
  %5906 = vmatpush1.bf16.msra.mxu0 %v4990
  %5907 = vmatprep.subr.bf16.mxu0 %v4984
  %5908 = vmatpush1.bf16.msra.mxu0 %v4983
  %5909 = vmatprep.subr.bf16.mxu0 %v4977
  %5910 = vmatpush1.bf16.msra.mxu0 %v4976
  %5911 = vmatprep.subr.bf16.mxu0 %v4970
  %5912 = vmatpush1.bf16.msra.mxu0 %v4969
  %5913 = vmatprep.subr.bf16.mxu0 %v5075
  %5914 = vmatpush2.bf16.msra.mxu0 %v5074
  %5915 = vmatprep.subr.bf16.mxu0 %v5068
  %5916 = vmatpush2.bf16.msra.mxu0 %v5067
  %5917 = vmatprep.subr.bf16.mxu0 %v5061
  %5918 = vmatpush2.bf16.msra.mxu0 %v5060
  %5919 = vmatprep.subr.bf16.mxu0 %v5054
  %5920 = vmatpush2.bf16.msra.mxu0 %v5053
  %5921 = vmatprep.subr.bf16.mxu0 %v5047
  %5922 = vmatpush2.bf16.msra.mxu0 %v5046
  %5923 = vmatprep.subr.bf16.mxu0 %v5040
  %5924 = vmatpush2.bf16.msra.mxu0 %v5039
  %5925 = vmatprep.subr.bf16.mxu0 %v5033
  %5926 = vmatpush2.bf16.msra.mxu0 %v5032
  %5927 = vmatprep.subr.bf16.mxu0 %v5026
  %5928 = vmatpush2.bf16.msra.mxu0 %v5025
  %5929 = vmatprep.mubr.bf16.mxu0 %v2783
  %5930 = vmatmul.mubr.bf16.gmra.mxu0 %v2782
  %v5931 = vpop.f32.mrf.mxu0
  %v5932 = vadd.f32 %v5889, %v5931
  %v5933 = vpop.f32.mrf.mxu0
  %v5934 = vadd.f32 %v5891, %v5933
  %v5935 = vpop.f32.mrf.mxu0
  %v5936 = vadd.f32 %v5893, %v5935
  %v5937 = vpop.f32.mrf.mxu0
  %v5938 = vadd.f32 %v5895, %v5937
  %5939 = vdwg.mxu0
  %5940 = vmatprep.subr.bf16.mxu0 %v5131
  %5941 = vmatpush1.bf16.msra.mxu0 %v5130
  %5942 = vmatprep.subr.bf16.mxu0 %v5124
  %5943 = vmatpush1.bf16.msra.mxu0 %v5123
  %5944 = vmatprep.subr.bf16.mxu0 %v5117
  %5945 = vmatpush1.bf16.msra.mxu0 %v5116
  %5946 = vmatprep.subr.bf16.mxu0 %v5110
  %5947 = vmatpush1.bf16.msra.mxu0 %v5109
  %5948 = vmatprep.subr.bf16.mxu0 %v5103
  %5949 = vmatpush1.bf16.msra.mxu0 %v5102
  %5950 = vmatprep.subr.bf16.mxu0 %v5096
  %5951 = vmatpush1.bf16.msra.mxu0 %v5095
  %5952 = vmatprep.subr.bf16.mxu0 %v5089
  %5953 = vmatpush1.bf16.msra.mxu0 %v5088
  %5954 = vmatprep.subr.bf16.mxu0 %v5082
  %5955 = vmatpush1.bf16.msra.mxu0 %v5081
  %5956 = vmatprep.subr.bf16.mxu0 %v5187
  %5957 = vmatpush2.bf16.msra.mxu0 %v5186
  %5958 = vmatprep.subr.bf16.mxu0 %v5180
  %5959 = vmatpush2.bf16.msra.mxu0 %v5179
  %5960 = vmatprep.subr.bf16.mxu0 %v5173
  %5961 = vmatpush2.bf16.msra.mxu0 %v5172
  %5962 = vmatprep.subr.bf16.mxu0 %v5166
  %5963 = vmatpush2.bf16.msra.mxu0 %v5165
  %5964 = vmatprep.subr.bf16.mxu0 %v5159
  %5965 = vmatpush2.bf16.msra.mxu0 %v5158
  %5966 = vmatprep.subr.bf16.mxu0 %v5152
  %5967 = vmatpush2.bf16.msra.mxu0 %v5151
  %5968 = vmatprep.subr.bf16.mxu0 %v5145
  %5969 = vmatpush2.bf16.msra.mxu0 %v5144
  %5970 = vmatprep.subr.bf16.mxu0 %v5138
  %5971 = vmatpush2.bf16.msra.mxu0 %v5137
  %5972 = vmatprep.mubr.bf16.mxu0 %v2785
  %5973 = vmatmul.mubr.bf16.gmra.mxu0 %v2784
  %v5974 = vpop.f32.mrf.mxu0
  %v5975 = vadd.f32 %v5932, %v5974
  %v5976 = vpop.f32.mrf.mxu0
  %v5977 = vadd.f32 %v5934, %v5976
  %v5978 = vpop.f32.mrf.mxu0
  %v5979 = vadd.f32 %v5936, %v5978
  %v5980 = vpop.f32.mrf.mxu0
  %v5981 = vadd.f32 %v5938, %v5980
  %5982 = vdwg.mxu0
  %5983 = vmatprep.subr.bf16.mxu0 %v4797
  %5984 = vmatpush1.bf16.msra.mxu0 %v4796
  %5985 = vmatprep.subr.bf16.mxu0 %v4790
  %5986 = vmatpush1.bf16.msra.mxu0 %v4789
  %5987 = vmatprep.subr.bf16.mxu0 %v4783
  %5988 = vmatpush1.bf16.msra.mxu0 %v4782
  %5989 = vmatprep.subr.bf16.mxu0 %v4776
  %5990 = vmatpush1.bf16.msra.mxu0 %v4775
  %5991 = vmatprep.subr.bf16.mxu0 %v4769
  %5992 = vmatpush1.bf16.msra.mxu0 %v4768
  %5993 = vmatprep.subr.bf16.mxu0 %v4762
  %5994 = vmatpush1.bf16.msra.mxu0 %v4761
  %5995 = vmatprep.subr.bf16.mxu0 %v4755
  %5996 = vmatpush1.bf16.msra.mxu0 %v4754
  %5997 = vmatprep.subr.bf16.mxu0 %v4748
  %5998 = vmatpush1.bf16.msra.mxu0 %v4747
  %5999 = vmatprep.subr.bf16.mxu0 %v4853
  %6000 = vmatpush2.bf16.msra.mxu0 %v4852
  %6001 = vmatprep.subr.bf16.mxu0 %v4846
  %6002 = vmatpush2.bf16.msra.mxu0 %v4845
  %6003 = vmatprep.subr.bf16.mxu0 %v4839
  %6004 = vmatpush2.bf16.msra.mxu0 %v4838
  %6005 = vmatprep.subr.bf16.mxu0 %v4832
  %6006 = vmatpush2.bf16.msra.mxu0 %v4831
  %6007 = vmatprep.subr.bf16.mxu0 %v4825
  %6008 = vmatpush2.bf16.msra.mxu0 %v4824
  %6009 = vmatprep.subr.bf16.mxu0 %v4818
  %6010 = vmatpush2.bf16.msra.mxu0 %v4817
  %6011 = vmatprep.subr.bf16.mxu0 %v4811
  %6012 = vmatpush2.bf16.msra.mxu0 %v4810
  %6013 = vmatprep.subr.bf16.mxu0 %v4804
  %6014 = vmatpush2.bf16.msra.mxu0 %v4803
  %6015 = vmatprep.mubr.bf16.mxu0 %v2779
  %6016 = vmatmul.mubr.bf16.gmra.mxu0 %v2778
  %v6017 = vpop.f32.mrf.mxu0
  %v6018 = vadd.f32 %v3319, %v6017
  %v6019 = vpop.f32.mrf.mxu0
  %v6020 = vadd.f32 %v3323, %v6019
  %v6021 = vpop.f32.mrf.mxu0
  %v6022 = vadd.f32 %v3319, %v6021
  %v6023 = vpop.f32.mrf.mxu0
  %v6024 = vadd.f32 %v3323, %v6023
  %6025 = vdwg.mxu0
  %6026 = vmatprep.subr.bf16.mxu0 %v4909
  %6027 = vmatpush1.bf16.msra.mxu0 %v4908
  %6028 = vmatprep.subr.bf16.mxu0 %v4902
  %6029 = vmatpush1.bf16.msra.mxu0 %v4901
  %6030 = vmatprep.subr.bf16.mxu0 %v4895
  %6031 = vmatpush1.bf16.msra.mxu0 %v4894
  %6032 = vmatprep.subr.bf16.mxu0 %v4888
  %6033 = vmatpush1.bf16.msra.mxu0 %v4887
  %6034 = vmatprep.subr.bf16.mxu0 %v4881
  %6035 = vmatpush1.bf16.msra.mxu0 %v4880
  %6036 = vmatprep.subr.bf16.mxu0 %v4874
  %6037 = vmatpush1.bf16.msra.mxu0 %v4873
  %6038 = vmatprep.subr.bf16.mxu0 %v4867
  %6039 = vmatpush1.bf16.msra.mxu0 %v4866
  %6040 = vmatprep.subr.bf16.mxu0 %v4860
  %6041 = vmatpush1.bf16.msra.mxu0 %v4859
  %6042 = vmatprep.subr.bf16.mxu0 %v4965
  %6043 = vmatpush2.bf16.msra.mxu0 %v4964
  %6044 = vmatprep.subr.bf16.mxu0 %v4958
  %6045 = vmatpush2.bf16.msra.mxu0 %v4957
  %6046 = vmatprep.subr.bf16.mxu0 %v4951
  %6047 = vmatpush2.bf16.msra.mxu0 %v4950
  %6048 = vmatprep.subr.bf16.mxu0 %v4944
  %6049 = vmatpush2.bf16.msra.mxu0 %v4943
  %6050 = vmatprep.subr.bf16.mxu0 %v4937
  %6051 = vmatpush2.bf16.msra.mxu0 %v4936
  %6052 = vmatprep.subr.bf16.mxu0 %v4930
  %6053 = vmatpush2.bf16.msra.mxu0 %v4929
  %6054 = vmatprep.subr.bf16.mxu0 %v4923
  %6055 = vmatpush2.bf16.msra.mxu0 %v4922
  %6056 = vmatprep.subr.bf16.mxu0 %v4916
  %6057 = vmatpush2.bf16.msra.mxu0 %v4915
  %6058 = vmatprep.mubr.bf16.mxu0 %v2781
  %6059 = vmatmul.mubr.bf16.gmra.mxu0 %v2780
  %v6060 = vpop.f32.mrf.mxu0
  %v6061 = vadd.f32 %v6018, %v6060
  %v6062 = vpop.f32.mrf.mxu0
  %v6063 = vadd.f32 %v6020, %v6062
  %v6064 = vpop.f32.mrf.mxu0
  %v6065 = vadd.f32 %v6022, %v6064
  %v6066 = vpop.f32.mrf.mxu0
  %v6067 = vadd.f32 %v6024, %v6066
  %6068 = vdwg.mxu0
  %6069 = vmatprep.subr.bf16.mxu0 %v5021
  %6070 = vmatpush1.bf16.msra.mxu0 %v5020
  %6071 = vmatprep.subr.bf16.mxu0 %v5014
  %6072 = vmatpush1.bf16.msra.mxu0 %v5013
  %6073 = vmatprep.subr.bf16.mxu0 %v5007
  %6074 = vmatpush1.bf16.msra.mxu0 %v5006
  %6075 = vmatprep.subr.bf16.mxu0 %v5000
  %6076 = vmatpush1.bf16.msra.mxu0 %v4999
  %6077 = vmatprep.subr.bf16.mxu0 %v4993
  %6078 = vmatpush1.bf16.msra.mxu0 %v4992
  %6079 = vmatprep.subr.bf16.mxu0 %v4986
  %6080 = vmatpush1.bf16.msra.mxu0 %v4985
  %6081 = vmatprep.subr.bf16.mxu0 %v4979
  %6082 = vmatpush1.bf16.msra.mxu0 %v4978
  %6083 = vmatprep.subr.bf16.mxu0 %v4972
  %6084 = vmatpush1.bf16.msra.mxu0 %v4971
  %6085 = vmatprep.subr.bf16.mxu0 %v5077
  %6086 = vmatpush2.bf16.msra.mxu0 %v5076
  %6087 = vmatprep.subr.bf16.mxu0 %v5070
  %6088 = vmatpush2.bf16.msra.mxu0 %v5069
  %6089 = vmatprep.subr.bf16.mxu0 %v5063
  %6090 = vmatpush2.bf16.msra.mxu0 %v5062
  %6091 = vmatprep.subr.bf16.mxu0 %v5056
  %6092 = vmatpush2.bf16.msra.mxu0 %v5055
  %6093 = vmatprep.subr.bf16.mxu0 %v5049
  %6094 = vmatpush2.bf16.msra.mxu0 %v5048
  %6095 = vmatprep.subr.bf16.mxu0 %v5042
  %6096 = vmatpush2.bf16.msra.mxu0 %v5041
  %6097 = vmatprep.subr.bf16.mxu0 %v5035
  %6098 = vmatpush2.bf16.msra.mxu0 %v5034
  %6099 = vmatprep.subr.bf16.mxu0 %v5028
  %6100 = vmatpush2.bf16.msra.mxu0 %v5027
  %6101 = vmatprep.mubr.bf16.mxu0 %v2783
  %6102 = vmatmul.mubr.bf16.gmra.mxu0 %v2782
  %v6103 = vpop.f32.mrf.mxu0
  %v6104 = vadd.f32 %v6061, %v6103
  %v6105 = vpop.f32.mrf.mxu0
  %v6106 = vadd.f32 %v6063, %v6105
  %v6107 = vpop.f32.mrf.mxu0
  %v6108 = vadd.f32 %v6065, %v6107
  %v6109 = vpop.f32.mrf.mxu0
  %v6110 = vadd.f32 %v6067, %v6109
  %6111 = vdwg.mxu0
  %6112 = vmatprep.subr.bf16.mxu0 %v5133
  %6113 = vmatpush1.bf16.msra.mxu0 %v5132
  %6114 = vmatprep.subr.bf16.mxu0 %v5126
  %6115 = vmatpush1.bf16.msra.mxu0 %v5125
  %6116 = vmatprep.subr.bf16.mxu0 %v5119
  %6117 = vmatpush1.bf16.msra.mxu0 %v5118
  %6118 = vmatprep.subr.bf16.mxu0 %v5112
  %6119 = vmatpush1.bf16.msra.mxu0 %v5111
  %6120 = vmatprep.subr.bf16.mxu0 %v5105
  %6121 = vmatpush1.bf16.msra.mxu0 %v5104
  %6122 = vmatprep.subr.bf16.mxu0 %v5098
  %6123 = vmatpush1.bf16.msra.mxu0 %v5097
  %6124 = vmatprep.subr.bf16.mxu0 %v5091
  %6125 = vmatpush1.bf16.msra.mxu0 %v5090
  %6126 = vmatprep.subr.bf16.mxu0 %v5084
  %6127 = vmatpush1.bf16.msra.mxu0 %v5083
  %6128 = vmatprep.subr.bf16.mxu0 %v5189
  %6129 = vmatpush2.bf16.msra.mxu0 %v5188
  %6130 = vmatprep.subr.bf16.mxu0 %v5182
  %6131 = vmatpush2.bf16.msra.mxu0 %v5181
  %6132 = vmatprep.subr.bf16.mxu0 %v5175
  %6133 = vmatpush2.bf16.msra.mxu0 %v5174
  %6134 = vmatprep.subr.bf16.mxu0 %v5168
  %6135 = vmatpush2.bf16.msra.mxu0 %v5167
  %6136 = vmatprep.subr.bf16.mxu0 %v5161
  %6137 = vmatpush2.bf16.msra.mxu0 %v5160
  %6138 = vmatprep.subr.bf16.mxu0 %v5154
  %6139 = vmatpush2.bf16.msra.mxu0 %v5153
  %6140 = vmatprep.subr.bf16.mxu0 %v5147
  %6141 = vmatpush2.bf16.msra.mxu0 %v5146
  %6142 = vmatprep.subr.bf16.mxu0 %v5140
  %6143 = vmatpush2.bf16.msra.mxu0 %v5139
  %6144 = vmatprep.mubr.bf16.mxu0 %v2785
  %6145 = vmatmul.mubr.bf16.gmra.mxu0 %v2784
  %v6146 = vpop.f32.mrf.mxu0
  %v6147 = vadd.f32 %v6104, %v6146
  %v6148 = vpop.f32.mrf.mxu0
  %v6149 = vadd.f32 %v6106, %v6148
  %v6150 = vpop.f32.mrf.mxu0
  %v6151 = vadd.f32 %v6108, %v6150
  %v6152 = vpop.f32.mrf.mxu0
  %v6153 = vadd.f32 %v6110, %v6152
  %6154 = vdwg.mxu0
  %6155 = vmatprep.subr.bf16.mxu0 0
  %6156 = vmatpush1.bf16.msra.mxu0 %v4798
  %6157 = vmatprep.subr.bf16.mxu0 0
  %6158 = vmatpush1.bf16.msra.mxu0 %v4791
  %6159 = vmatprep.subr.bf16.mxu0 0
  %6160 = vmatpush1.bf16.msra.mxu0 %v4784
  %6161 = vmatprep.subr.bf16.mxu0 0
  %6162 = vmatpush1.bf16.msra.mxu0 %v4777
  %6163 = vmatprep.subr.bf16.mxu0 0
  %6164 = vmatpush1.bf16.msra.mxu0 %v4770
  %6165 = vmatprep.subr.bf16.mxu0 0
  %6166 = vmatpush1.bf16.msra.mxu0 %v4763
  %6167 = vmatprep.subr.bf16.mxu0 0
  %6168 = vmatpush1.bf16.msra.mxu0 %v4756
  %6169 = vmatprep.subr.bf16.mxu0 0
  %6170 = vmatpush1.bf16.msra.mxu0 %v4749
  %6171 = vmatprep.subr.bf16.mxu0 0
  %6172 = vmatpush2.bf16.msra.mxu0 %v4854
  %6173 = vmatprep.subr.bf16.mxu0 0
  %6174 = vmatpush2.bf16.msra.mxu0 %v4847
  %6175 = vmatprep.subr.bf16.mxu0 0
  %6176 = vmatpush2.bf16.msra.mxu0 %v4840
  %6177 = vmatprep.subr.bf16.mxu0 0
  %6178 = vmatpush2.bf16.msra.mxu0 %v4833
  %6179 = vmatprep.subr.bf16.mxu0 0
  %6180 = vmatpush2.bf16.msra.mxu0 %v4826
  %6181 = vmatprep.subr.bf16.mxu0 0
  %6182 = vmatpush2.bf16.msra.mxu0 %v4819
  %6183 = vmatprep.subr.bf16.mxu0 0
  %6184 = vmatpush2.bf16.msra.mxu0 %v4812
  %6185 = vmatprep.subr.bf16.mxu0 0
  %6186 = vmatpush2.bf16.msra.mxu0 %v4805
  %6187 = vmatprep.mubr.bf16.mxu0 %v2779
  %6188 = vmatmul.mubr.bf16.gmra.mxu0 %v2778
  %v6189 = vpop.f32.mrf.mxu0
  %v6190 = vadd.f32 %v3327, %v6189
  %v6191 = vpop.f32.mrf.mxu0
  %v6192 = vpop.f32.mrf.mxu0
  %v6193 = vadd.f32 %v3327, %v6192
  %v6194 = vpop.f32.mrf.mxu0
  %6195 = vdwg.mxu0
  %6196 = vmatprep.subr.bf16.mxu0 0
  %6197 = vmatpush1.bf16.msra.mxu0 %v4910
  %6198 = vmatprep.subr.bf16.mxu0 0
  %6199 = vmatpush1.bf16.msra.mxu0 %v4903
  %6200 = vmatprep.subr.bf16.mxu0 0
  %6201 = vmatpush1.bf16.msra.mxu0 %v4896
  %6202 = vmatprep.subr.bf16.mxu0 0
  %6203 = vmatpush1.bf16.msra.mxu0 %v4889
  %6204 = vmatprep.subr.bf16.mxu0 0
  %6205 = vmatpush1.bf16.msra.mxu0 %v4882
  %6206 = vmatprep.subr.bf16.mxu0 0
  %6207 = vmatpush1.bf16.msra.mxu0 %v4875
  %6208 = vmatprep.subr.bf16.mxu0 0
  %6209 = vmatpush1.bf16.msra.mxu0 %v4868
  %6210 = vmatprep.subr.bf16.mxu0 0
  %6211 = vmatpush1.bf16.msra.mxu0 %v4861
  %6212 = vmatprep.subr.bf16.mxu0 0
  %6213 = vmatpush2.bf16.msra.mxu0 %v4966
  %6214 = vmatprep.subr.bf16.mxu0 0
  %6215 = vmatpush2.bf16.msra.mxu0 %v4959
  %6216 = vmatprep.subr.bf16.mxu0 0
  %6217 = vmatpush2.bf16.msra.mxu0 %v4952
  %6218 = vmatprep.subr.bf16.mxu0 0
  %6219 = vmatpush2.bf16.msra.mxu0 %v4945
  %6220 = vmatprep.subr.bf16.mxu0 0
  %6221 = vmatpush2.bf16.msra.mxu0 %v4938
  %6222 = vmatprep.subr.bf16.mxu0 0
  %6223 = vmatpush2.bf16.msra.mxu0 %v4931
  %6224 = vmatprep.subr.bf16.mxu0 0
  %6225 = vmatpush2.bf16.msra.mxu0 %v4924
  %6226 = vmatprep.subr.bf16.mxu0 0
  %6227 = vmatpush2.bf16.msra.mxu0 %v4917
  %6228 = vmatprep.mubr.bf16.mxu0 %v2781
  %6229 = vmatmul.mubr.bf16.gmra.mxu0 %v2780
  %v6230 = vpop.f32.mrf.mxu0
  %v6231 = vadd.f32 %v6190, %v6230
  %v6232 = vpop.f32.mrf.mxu0
  %v6233 = vpop.f32.mrf.mxu0
  %v6234 = vadd.f32 %v6193, %v6233
  %v6235 = vpop.f32.mrf.mxu0
  %6236 = vdwg.mxu0
  %6237 = vmatprep.subr.bf16.mxu0 0
  %6238 = vmatpush1.bf16.msra.mxu0 %v5022
  %6239 = vmatprep.subr.bf16.mxu0 0
  %6240 = vmatpush1.bf16.msra.mxu0 %v5015
  %6241 = vmatprep.subr.bf16.mxu0 0
  %6242 = vmatpush1.bf16.msra.mxu0 %v5008
  %6243 = vmatprep.subr.bf16.mxu0 0
  %6244 = vmatpush1.bf16.msra.mxu0 %v5001
  %6245 = vmatprep.subr.bf16.mxu0 0
  %6246 = vmatpush1.bf16.msra.mxu0 %v4994
  %6247 = vmatprep.subr.bf16.mxu0 0
  %6248 = vmatpush1.bf16.msra.mxu0 %v4987
  %6249 = vmatprep.subr.bf16.mxu0 0
  %6250 = vmatpush1.bf16.msra.mxu0 %v4980
  %6251 = vmatprep.subr.bf16.mxu0 0
  %6252 = vmatpush1.bf16.msra.mxu0 %v4973
  %6253 = vmatprep.subr.bf16.mxu0 0
  %6254 = vmatpush2.bf16.msra.mxu0 %v5078
  %6255 = vmatprep.subr.bf16.mxu0 0
  %6256 = vmatpush2.bf16.msra.mxu0 %v5071
  %6257 = vmatprep.subr.bf16.mxu0 0
  %6258 = vmatpush2.bf16.msra.mxu0 %v5064
  %6259 = vmatprep.subr.bf16.mxu0 0
  %6260 = vmatpush2.bf16.msra.mxu0 %v5057
  %6261 = vmatprep.subr.bf16.mxu0 0
  %6262 = vmatpush2.bf16.msra.mxu0 %v5050
  %6263 = vmatprep.subr.bf16.mxu0 0
  %6264 = vmatpush2.bf16.msra.mxu0 %v5043
  %6265 = vmatprep.subr.bf16.mxu0 0
  %6266 = vmatpush2.bf16.msra.mxu0 %v5036
  %6267 = vmatprep.subr.bf16.mxu0 0
  %6268 = vmatpush2.bf16.msra.mxu0 %v5029
  %6269 = vmatprep.mubr.bf16.mxu0 %v2783
  %6270 = vmatmul.mubr.bf16.gmra.mxu0 %v2782
  %v6271 = vpop.f32.mrf.mxu0
  %v6272 = vadd.f32 %v6231, %v6271
  %v6273 = vpop.f32.mrf.mxu0
  %v6274 = vpop.f32.mrf.mxu0
  %v6275 = vadd.f32 %v6234, %v6274
  %v6276 = vpop.f32.mrf.mxu0
  %6277 = vdwg.mxu0
  %6278 = vmatprep.subr.bf16.mxu0 0
  %6279 = vmatpush1.bf16.msra.mxu0 %v5134
  %6280 = vmatprep.subr.bf16.mxu0 0
  %6281 = vmatpush1.bf16.msra.mxu0 %v5127
  %6282 = vmatprep.subr.bf16.mxu0 0
  %6283 = vmatpush1.bf16.msra.mxu0 %v5120
  %6284 = vmatprep.subr.bf16.mxu0 0
  %6285 = vmatpush1.bf16.msra.mxu0 %v5113
  %6286 = vmatprep.subr.bf16.mxu0 0
  %6287 = vmatpush1.bf16.msra.mxu0 %v5106
  %6288 = vmatprep.subr.bf16.mxu0 0
  %6289 = vmatpush1.bf16.msra.mxu0 %v5099
  %6290 = vmatprep.subr.bf16.mxu0 0
  %6291 = vmatpush1.bf16.msra.mxu0 %v5092
  %6292 = vmatprep.subr.bf16.mxu0 0
  %6293 = vmatpush1.bf16.msra.mxu0 %v5085
  %6294 = vmatprep.subr.bf16.mxu0 0
  %6295 = vmatpush2.bf16.msra.mxu0 %v5190
  %6296 = vmatprep.subr.bf16.mxu0 0
  %6297 = vmatpush2.bf16.msra.mxu0 %v5183
  %6298 = vmatprep.subr.bf16.mxu0 0
  %6299 = vmatpush2.bf16.msra.mxu0 %v5176
  %6300 = vmatprep.subr.bf16.mxu0 0
  %6301 = vmatpush2.bf16.msra.mxu0 %v5169
  %6302 = vmatprep.subr.bf16.mxu0 0
  %6303 = vmatpush2.bf16.msra.mxu0 %v5162
  %6304 = vmatprep.subr.bf16.mxu0 0
  %6305 = vmatpush2.bf16.msra.mxu0 %v5155
  %6306 = vmatprep.subr.bf16.mxu0 0
  %6307 = vmatpush2.bf16.msra.mxu0 %v5148
  %6308 = vmatprep.subr.bf16.mxu0 0
  %6309 = vmatpush2.bf16.msra.mxu0 %v5141
  %6310 = vmatprep.mubr.bf16.mxu0 %v2785
  %6311 = vmatmul.mubr.bf16.gmra.mxu0 %v2784
  %v6312 = vpop.f32.mrf.mxu0
  %v6313 = vadd.f32 %v6272, %v6312
  %v6314 = vpop.f32.mrf.mxu0
  %v6315 = vpop.f32.mrf.mxu0
  %v6316 = vadd.f32 %v6275, %v6315
  %v6317 = vpop.f32.mrf.mxu0
  %6318 = vdwg.mxu0
  %v6319 = vtanh.pop %v5803
  %v6320 = vtanh.pop %v5805
  %v6321 = vtanh.pop %v5975
  %v6322 = vtanh.pop %v5977
  %v6323 = vtanh.pop %v6147
  %v6324 = vtanh.pop %v6149
  %v6325 = vtanh.pop %v6313
  %v6326 = vtanh.pop %v5807
  %v6327 = vtanh.pop %v5809
  %v6328 = vtanh.pop %v5979
  %v6329 = vtanh.pop %v5981
  %v6330 = vtanh.pop %v6151
  %v6331 = vtanh.pop %v6153
  %v6332 = vtanh.pop %v6316
  %v6333 = vpack.c.bf16 %v6326, %v6319
  %v6334 = vpack.c.bf16 %v6327, %v6320
  %v6335 = vpack.c.bf16 %v6328, %v6321
  %v6336 = vpack.c.bf16 %v6329, %v6322
  %v6337 = vpack.c.bf16 %v6330, %v6323
  %v6338 = vpack.c.bf16 %v6331, %v6324
  %v6339 = vpack.c.bf16 %v6332, %v6325
  %v6347 = vunpack.c.l.b16 %v6333
  %v6348 = vunpack.c.l.b16 %v6334
  %v6349 = vunpack.c.l.b16 %v6335
  %v6350 = vunpack.c.l.b16 %v6336
  %v6351 = vunpack.c.l.b16 %v6337
  %v6352 = vunpack.c.l.b16 %v6338
  %v6353 = vunpack.c.l.b16 %v6339
  %v6354 = vunpack.c.h.b16 %v6333
  %v6355 = vunpack.c.h.b16 %v6334
  %v6356 = vunpack.c.h.b16 %v6335
  %v6357 = vunpack.c.h.b16 %v6336
  %v6358 = vunpack.c.h.b16 %v6337
  %v6359 = vunpack.c.h.b16 %v6338
  %v6360 = vunpack.c.h.b16 %v6339
  %v6361 = vpack.c.b16 %v6348, %v6347
  %v6362 = vpack.c.b16 %v6350, %v6349
  %v6363 = vpack.c.b16 %v6352, %v6351
  %v6364 = vpack.c.b16 %v6353, %v6353
  %v6365 = vpack.c.b16 %v6355, %v6354
  %v6366 = vpack.c.b16 %v6357, %v6356
  %v6367 = vpack.c.b16 %v6359, %v6358
  %v6368 = vpack.c.b16 %v6360, %v6360
  %6377 = vst [vmem:[%s9] sm:$0xff] %v6361
  %6378 = vst [vmem:[%s9 + $0x8] sm:$0xff] %v6362
  %6379 = vst [vmem:[%s9 + $0x10] sm:$0xff] %v6363
  %6380 = vst [vmem:[%s9 + $0x18] sm:$0xf] %v6364
  %6381 = vst [vmem:[%s9 + $0x1c] sm:$0xff] %v6365
  %6382 = vst [vmem:[%s9 + $0x24] sm:$0xff] %v6366
  %6383 = vst [vmem:[%s9 + $0x2c] sm:$0xff] %v6367
  %6384 = vst [vmem:[%s9 + $0x34] sm:$0xf] %v6368
  // Predicated region
  $region38: #{generator_forward.1} parent=0 // pred_check
    _
  $region39: #{generator_forward.1} parent=0 // pred_check_branch
    %6386 = sbr.rel (0) target = $region41
  $region40: #{generator_forward.1} parent=0 // pred_region
    _
  $region41: #{generator_forward.1} parent=0 // pred_fallthru
    _
  // Predicated region
  $region42: #{generator_forward.1} parent=0 // pred_check
    _
  $region43: #{generator_forward.1} parent=0 // pred_check_branch
    %6388 = sbr.rel (0) target = $region45
  $region44: #{generator_forward.1} parent=0 // pred_region
    _
  $region45: #{generator_forward.1} parent=0 // pred_fallthru
    _

</llo_original>
